<compile_context>
chip_gen: v7x
topology: tpu7x:2x2x1
jax: 0.10.0
libtpu: 0.0.40
codegen_flags: <defaults>
</compile_context>

<pallas_src>
import functools

import numpy as np

import jax
import jax.numpy as jnp
from jax.experimental import pallas as pl
from jax.experimental.pallas import tpu as pltpu


# ----------------------------------------------------------------------------
# Static layer plan (mirrors CausalEncoder.__init__)
# ----------------------------------------------------------------------------
def build_layer_plan(cfg):
    """Flat list of causal-conv layer descriptors in execution order."""
    width = cfg["width"]
    filter_t = cfg["stride_t"] * 2
    layers = []

    def add(K, cin, cout, stride=1, dilation=1, pre_relu=False, post_relu=False,
            save_res=False, add_res=False):
        # Guard the reviewer-flagged ambiguity: post_relu is never combined with
        # a residual add, so "relu then add" vs "add then relu" cannot diverge.
        assert not (post_relu and add_res)
        layers.append(dict(
            K=K, cin=cin, cout=cout, stride=stride, dilation=dilation,
            pre_relu=pre_relu, post_relu=post_relu,
            save_res=save_res, add_res=add_res,
            pad=(K - 1) * dilation + (1 - stride)))

    # blocks[0]: CausalConv1d(input_emb_width, width, 3, 1, 1) + ReLU
    add(3, cfg["input_emb_width"], width, post_relu=True)
    # TODO(synk): CausalResnet1D source was not provided; implemented as the
    # standard T2M-GPT Resnet1D with causal dilated convs (pre-act ReLU ->
    # k3 dilated causal conv -> ReLU -> 1x1 causal conv -> residual add),
    # with reversed dilation order.
    dilations = [cfg["dilation_growth_rate"] ** d for d in range(cfg["depth"])][::-1]
    for _ in range(cfg["down_t"]):
        add(filter_t, width, width, stride=cfg["stride_t"])
        for dil in dilations:
            add(3, width, width, dilation=dil, pre_relu=True, save_res=True)
            add(1, width, width, pre_relu=True, add_res=True)
    # last block: CausalConv1d(width, hidden_size, 3, 1, 1)
    add(3, width, cfg["hidden_size"])
    return layers


def annotate_lengths(layers, T):
    """Add per-layer T_in / T_out given input sequence length T; return T_final."""
    t = T
    for L in layers:
        L["T_in"] = t
        t = (t + L["pad"] - L["dilation"] * (L["K"] - 1) - 1) // L["stride"] + 1
        L["T_out"] = t
    return t


# ----------------------------------------------------------------------------
# Fused Pallas kernel (whole network, one batch element per program)
# ----------------------------------------------------------------------------
def _make_fused_kernel(layers, clip_lo, clip_hi, n_scratch):
    n_lw = 2 * len(layers)

    def _causal_conv(h, w_ref, s_ref, L):
        """out[t] = sum_k x_pad[t*stride + k*dilation] @ W[k], x_pad = [0]*pad ++ h."""
        K, st, d, P = L["K"], L["stride"], L["dilation"], L["pad"]
        T_in, T_out = L["T_in"], L["T_out"]
        if K == 1 and st == 1:                      # 1x1 conv -> plain matmul
            return jnp.dot(h.astype(jnp.bfloat16), w_ref[0],
                           preferred_element_type=jnp.float32)
        # Causal left-pad inside a VMEM scratch (no HBM pad materialisation).
        if P > 0:
            s_ref[pl.ds(0, P), :] = jnp.zeros((P, L["cin"]), jnp.float32)
        s_ref[pl.ds(P, T_in), :] = h
        # K <= 4: statically unrolled per-tap MXU matmuls with bf16 operands and
        # f32 accumulation.  A full im2col repack into (T_out, K*Cin) was
        # considered but the extra lane-offset packing stores outweigh saving
        # 2-3 tiny MXU pushes at these widths (Cin <= 32).
        acc = jnp.zeros((T_out, L["cout"]), jnp.float32)
        for k in range(K):
            start = k * d
            if st == 1:
                xs = s_ref[pl.ds(start, T_out), :]
            else:
                xs = s_ref[pl.ds(start, T_out, stride=st), :]
            acc = acc + jnp.dot(xs.astype(jnp.bfloat16), w_ref[k],
                                preferred_element_type=jnp.float32)
        return acc

    def kernel(*refs):
        x_ref, eps_ref = refs[0], refs[1]
        lw = refs[2:2 + n_lw]
        wmu_ref, bmu_ref, wlv_ref, blv_ref = refs[2 + n_lw:6 + n_lw]
        z_ref, mu_ref, lv_ref = refs[6 + n_lw:9 + n_lw]
        scratches = refs[9 + n_lw:9 + n_lw + n_scratch]

        x = x_ref[...].astype(jnp.float32)          # (T, Cin), VMEM resident
        res = None
        for i, L in enumerate(layers):
            w_ref, b_ref = lw[2 * i], lw[2 * i + 1]
            if L["save_res"]:
                res = x                              # residual source (pre-activation)
            h = jnp.maximum(x, 0.0) if L["pre_relu"] else x
            s_ref = scratches[L["scratch_idx"]] if L["scratch_idx"] >= 0 else None
            acc = _causal_conv(h, w_ref, s_ref, L) + b_ref[...]
            if L["post_relu"]:
                acc = jnp.maximum(acc, 0.0)
            if L["add_res"]:
                acc = acc + res
            x = acc

        # Head: column-split proj (no in-kernel lane slicing), clamp, reparameterize.
        xb = x.astype(jnp.bfloat16)
        mu = jnp.dot(xb, wmu_ref[...], preferred_element_type=jnp.float32) + bmu_ref[...]
        lv = jnp.dot(xb, wlv_ref[...], preferred_element_type=jnp.float32) + blv_ref[...]
        lv = jnp.clip(lv, clip_lo, clip_hi)
        # TODO(synk): eps could be drawn in-kernel via pltpu.prng_seed /
        # pltpu.stateful_normal to drop one (tiny) HBM input; kept host-side for
        # deterministic parity with torch.randn_like drawn outside the kernel.
        z = mu + eps_ref[...].astype(jnp.float32) * jnp.exp(0.5 * lv)
        z_ref[...] = z.astype(z_ref.dtype)
        mu_ref[...] = mu.astype(mu_ref.dtype)
        lv_ref[...] = lv.astype(lv_ref.dtype)

    return kernel


# ----------------------------------------------------------------------------
# Wrapper: one pallas_call for the whole forward pass
# ----------------------------------------------------------------------------
def causal_encoder_forward(params, x_ncl, eps, cfg):
    """x_ncl: (B, input_emb_width, T) -- PyTorch NCL layout.
    Returns (z, mu, logvar), each (B, T // stride_t**down_t, latent_dim)."""
    assert cfg["hidden_size"] == cfg["width"], "proj expects hidden_size == width"
    latent = cfg["latent_dim"]

    x = jnp.transpose(x_ncl, (0, 2, 1)).astype(jnp.float32)   # -> (B, T, C)
    B, T, Cin = x.shape

    layers = build_layer_plan(cfg)
    T_f = annotate_lengths(layers, T)
    assert eps.shape == (B, T_f, latent)

    # ---- flatten weights: per conv layer (bf16 weight, f32 (1,Cout) bias);
    #      the proj is split column-wise into mu / logvar blocks.
    flat = []
    for L, (w, b) in zip(layers, params["layers"]):
        assert w.shape == (L["K"], L["cin"], L["cout"])
        flat.append(w.astype(jnp.bfloat16))
        flat.append(b.reshape(1, L["cout"]).astype(jnp.float32))
    pw, pb = params["proj_w"], params["proj_b"]
    flat += [pw[:, :latent].astype(jnp.bfloat16),
             pb[:latent].reshape(1, latent).astype(jnp.float32),
             pw[:, latent:].astype(jnp.bfloat16),
             pb[latent:].reshape(1, latent).astype(jnp.float32)]

    # ---- one padded-activation VMEM scratch per distinct conv input width
    scratch_cins, scratch_rows = [], {}
    for L in layers:
        if L["K"] > 1:
            c = L["cin"]
            if c not in scratch_rows:
                scratch_cins.append(c)
                scratch_rows[c] = 0
            scratch_rows[c] = max(scratch_rows[c], L["T_in"] + L["pad"])
            L["scratch_idx"] = scratch_cins.index(c)
        else:
            L["scratch_idx"] = -1
    scratch_shapes = [pltpu.VMEM((scratch_rows[c], c), jnp.float32)
                      for c in scratch_cins]

    def _full_spec(a):
        return pl.BlockSpec(a.shape, lambda b, _n=a.ndim: (0,) * _n)

    in_specs = (
        [pl.BlockSpec((pl.Squeezed(), T, Cin), lambda b: (b, 0, 0)),
         pl.BlockSpec((pl.Squeezed(), T_f, latent), lambda b: (b, 0, 0))]
        + [_full_spec(a) for a in flat])
    o_spec = pl.BlockSpec((pl.Squeezed(), T_f, latent), lambda b: (b, 0, 0))
    o_sds = jax.ShapeDtypeStruct((B, T_f, latent), jnp.float32)

    kernel = _make_fused_kernel(layers, float(cfg["clip_range"][0]),
                                float(cfg["clip_range"][1]), len(scratch_shapes))

    return pl.pallas_call(
        kernel,
        out_shape=(o_sds, o_sds, o_sds),
        grid=(B,),
        in_specs=in_specs,
        out_specs=(o_spec, o_spec, o_spec),
        scratch_shapes=scratch_shapes,
        compiler_params=pltpu.CompilerParams(
            # batch elements are independent -> v7x's two TensorCores each take
            # one; neutral on single-core v5e/v6e.
            dimension_semantics=("parallel",)),
    )(x, eps, *flat)


# ----------------------------------------------------------------------------
# Parameter init (mirrors CausalEncoder.__init__ structure)
# ----------------------------------------------------------------------------
def _init_conv(key, K, cin, cout):
    kw, kb = jax.random.split(key)
    scale = 1.0 / jnp.sqrt(float(cin * K))
    w = jax.random.normal(kw, (K, cin, cout), jnp.float32) * scale
    b = jax.random.normal(kb, (cout,), jnp.float32) * scale
    return w, b


def init_params(key, cfg):
    layers = build_layer_plan(cfg)
    keys = jax.random.split(key, len(layers) + 1)
    layer_params = [_init_conv(k, L["K"], L["cin"], L["cout"])
                    for L, k in zip(layers, keys[:-1])]
    # proj: nn.Linear(width, latent_dim * 2)
    # TODO(synk): uses the same fan-in normal init as the convs, not nn.Linear's
    # default uniform init; irrelevant once trained weights are loaded.
    kw, kb = jax.random.split(keys[-1])
    width, latent = cfg["width"], cfg["latent_dim"]
    scale = 1.0 / jnp.sqrt(float(width))
    proj_w = jax.random.normal(kw, (width, 2 * latent), jnp.float32) * scale
    proj_b = jax.random.normal(kb, (2 * latent,), jnp.float32) * scale
    return {"layers": layer_params, "proj_w": proj_w, "proj_b": proj_b}


# ----------------------------------------------------------------------------
# Pure-JAX reference (same math, same bf16-operand matmuls) for validation
# ----------------------------------------------------------------------------
def causal_encoder_reference(params, x_ncl, eps, cfg):
    latent = cfg["latent_dim"]
    x = jnp.transpose(x_ncl, (0, 2, 1)).astype(jnp.float32)
    B, T, _ = x.shape
    layers = build_layer_plan(cfg)
    annotate_lengths(layers, T)
    res = None
    for L, (w, b) in zip(layers, params["layers"]):
        wb = w.astype(jnp.bfloat16)
        if L["save_res"]:
            res = x
        h = jnp.maximum(x, 0.0) if L["pre_relu"] else x
        hp = jnp.pad(h, ((0, 0), (L["pad"], 0), (0, 0)))
        T_out, st, d = L["T_out"], L["stride"], L["dilation"]
        acc = jnp.zeros((B, T_out, L["cout"]), jnp.float32)
        for k in range(L["K"]):
            sl = hp[:, k * d: k * d + st * (T_out - 1) + 1: st, :]
            acc = acc + jnp.einsum("btc,cd->btd", sl.astype(jnp.bfloat16), wb[k],
                                   preferred_element_type=jnp.float32)
        acc = acc + b.reshape(1, 1, -1)
        if L["post_relu"]:
            acc = jnp.maximum(acc, 0.0)
        if L["add_res"]:
            acc = acc + res
        x = acc
    xb = x.astype(jnp.bfloat16)
    pw, pb = params["proj_w"], params["proj_b"]
    mu = jnp.einsum("btc,cd->btd", xb, pw[:, :latent].astype(jnp.bfloat16),
                    preferred_element_type=jnp.float32) + pb[:latent]
    lv = jnp.einsum("btc,cd->btd", xb, pw[:, latent:].astype(jnp.bfloat16),
                    preferred_element_type=jnp.float32) + pb[latent:]
    lv = jnp.clip(lv, cfg["clip_range"][0], cfg["clip_range"][1])
    z = mu + eps.astype(jnp.float32) * jnp.exp(0.5 * lv)
    return z, mu, lv


# ----------------------------------------------------------------------------
if __name__ == "__main__":
    cfg = dict(
        input_emb_width=16,
        width=32,
        hidden_size=32,          # must equal width for proj to be well-defined
        down_t=2,
        stride_t=2,
        depth=2,
        dilation_growth_rate=3,
        latent_dim=8,
        clip_range=(-6.0, 6.0),
    )
    B, T = 2, 16

    key = jax.random.PRNGKey(0)
    kx, keps, kp = jax.random.split(key, 3)

    x = jax.random.normal(kx, (B, cfg["input_emb_width"], T), jnp.float32)
    T_final = T // (cfg["stride_t"] ** cfg["down_t"])
    # torch.randn_like(std) -> deterministic JAX normals drawn outside the kernel
    eps = jax.random.normal(keps, (B, T_final, cfg["latent_dim"]), jnp.float32)

    params = init_params(kp, cfg)

    fwd = jax.jit(functools.partial(causal_encoder_forward, cfg=cfg))
    z, mu, logvar = fwd(params, x, eps)
    jax.block_until_ready((z, mu, logvar))

    assert z.shape == (B, T_final, cfg["latent_dim"])
    assert mu.shape == (B, T_final, cfg["latent_dim"])
    assert logvar.shape == (B, T_final, cfg["latent_dim"])

    # Validate against a pure-JAX reference of the same math.
    z_r, mu_r, lv_r = causal_encoder_reference(params, x, eps, cfg)
    np.testing.assert_allclose(np.asarray(z), np.asarray(z_r), rtol=1e-2, atol=1e-2)
    np.testing.assert_allclose(np.asarray(mu), np.asarray(mu_r), rtol=1e-2, atol=1e-2)
    np.testing.assert_allclose(np.asarray(logvar), np.asarray(lv_r), rtol=1e-2, atol=1e-2)

    print("KERNEL_OK")
</pallas_src>

<mosaic_0001>
module attributes {stable_mosaic.version = 11 : i64} {
  func.func @kernel(%arg0: i32, %arg1: memref<1x16x16xf32, #tpu.memory_space<vmem>>, %arg2: memref<1x4x8xf32, #tpu.memory_space<vmem>>, %arg3: memref<3x16x32xbf16, #tpu.memory_space<vmem>>, %arg4: memref<1x32xf32, #tpu.memory_space<vmem>>, %arg5: memref<4x32x32xbf16, #tpu.memory_space<vmem>>, %arg6: memref<1x32xf32, #tpu.memory_space<vmem>>, %arg7: memref<3x32x32xbf16, #tpu.memory_space<vmem>>, %arg8: memref<1x32xf32, #tpu.memory_space<vmem>>, %arg9: memref<1x32x32xbf16, #tpu.memory_space<vmem>>, %arg10: memref<1x32xf32, #tpu.memory_space<vmem>>, %arg11: memref<3x32x32xbf16, #tpu.memory_space<vmem>>, %arg12: memref<1x32xf32, #tpu.memory_space<vmem>>, %arg13: memref<1x32x32xbf16, #tpu.memory_space<vmem>>, %arg14: memref<1x32xf32, #tpu.memory_space<vmem>>, %arg15: memref<4x32x32xbf16, #tpu.memory_space<vmem>>, %arg16: memref<1x32xf32, #tpu.memory_space<vmem>>, %arg17: memref<3x32x32xbf16, #tpu.memory_space<vmem>>, %arg18: memref<1x32xf32, #tpu.memory_space<vmem>>, %arg19: memref<1x32x32xbf16, #tpu.memory_space<vmem>>, %arg20: memref<1x32xf32, #tpu.memory_space<vmem>>, %arg21: memref<3x32x32xbf16, #tpu.memory_space<vmem>>, %arg22: memref<1x32xf32, #tpu.memory_space<vmem>>, %arg23: memref<1x32x32xbf16, #tpu.memory_space<vmem>>, %arg24: memref<1x32xf32, #tpu.memory_space<vmem>>, %arg25: memref<3x32x32xbf16, #tpu.memory_space<vmem>>, %arg26: memref<1x32xf32, #tpu.memory_space<vmem>>, %arg27: memref<32x8xbf16, #tpu.memory_space<vmem>>, %arg28: memref<1x8xf32, #tpu.memory_space<vmem>>, %arg29: memref<32x8xbf16, #tpu.memory_space<vmem>>, %arg30: memref<1x8xf32, #tpu.memory_space<vmem>>, %arg31: memref<1x4x8xf32, #tpu.memory_space<vmem>>, %arg32: memref<1x4x8xf32, #tpu.memory_space<vmem>>, %arg33: memref<1x4x8xf32, #tpu.memory_space<vmem>>, %arg34: memref<18x16xf32, #tpu.memory_space<vmem>>, %arg35: memref<18x32xf32, #tpu.memory_space<vmem>>) attributes {dimension_semantics = [#tpu.dimension_semantics<parallel>], iteration_bounds = array<i64: 2>, scalar_prefetch = 0 : i64, scratch_operands = 2 : i64, tpu.core_type = #tpu.core_type<tc>, window_params = [{transform_indices = @transform_0, window_bounds = array<i64: 1, 16, 16>}, {transform_indices = @transform_1, window_bounds = array<i64: 1, 4, 8>}, {pipeline_mode = #tpu.pipeline_mode<synchronous>, transform_indices = @transform_2, window_bounds = array<i64: 3, 16, 32>}, {pipeline_mode = #tpu.pipeline_mode<synchronous>, transform_indices = @transform_3, window_bounds = array<i64: 1, 32>}, {pipeline_mode = #tpu.pipeline_mode<synchronous>, transform_indices = @transform_4, window_bounds = array<i64: 4, 32, 32>}, {pipeline_mode = #tpu.pipeline_mode<synchronous>, transform_indices = @transform_5, window_bounds = array<i64: 1, 32>}, {pipeline_mode = #tpu.pipeline_mode<synchronous>, transform_indices = @transform_6, window_bounds = array<i64: 3, 32, 32>}, {pipeline_mode = #tpu.pipeline_mode<synchronous>, transform_indices = @transform_7, window_bounds = array<i64: 1, 32>}, {pipeline_mode = #tpu.pipeline_mode<synchronous>, transform_indices = @transform_8, window_bounds = array<i64: 1, 32, 32>}, {pipeline_mode = #tpu.pipeline_mode<synchronous>, transform_indices = @transform_9, window_bounds = array<i64: 1, 32>}, {pipeline_mode = #tpu.pipeline_mode<synchronous>, transform_indices = @transform_10, window_bounds = array<i64: 3, 32, 32>}, {pipeline_mode = #tpu.pipeline_mode<synchronous>, transform_indices = @transform_11, window_bounds = array<i64: 1, 32>}, {pipeline_mode = #tpu.pipeline_mode<synchronous>, transform_indices = @transform_12, window_bounds = array<i64: 1, 32, 32>}, {pipeline_mode = #tpu.pipeline_mode<synchronous>, transform_indices = @transform_13, window_bounds = array<i64: 1, 32>}, {pipeline_mode = #tpu.pipeline_mode<synchronous>, transform_indices = @transform_14, window_bounds = array<i64: 4, 32, 32>}, {pipeline_mode = #tpu.pipeline_mode<synchronous>, transform_indices = @transform_15, window_bounds = array<i64: 1, 32>}, {pipeline_mode = #tpu.pipeline_mode<synchronous>, transform_indices = @transform_16, window_bounds = array<i64: 3, 32, 32>}, {pipeline_mode = #tpu.pipeline_mode<synchronous>, transform_indices = @transform_17, window_bounds = array<i64: 1, 32>}, {pipeline_mode = #tpu.pipeline_mode<synchronous>, transform_indices = @transform_18, window_bounds = array<i64: 1, 32, 32>}, {pipeline_mode = #tpu.pipeline_mode<synchronous>, transform_indices = @transform_19, window_bounds = array<i64: 1, 32>}, {pipeline_mode = #tpu.pipeline_mode<synchronous>, transform_indices = @transform_20, window_bounds = array<i64: 3, 32, 32>}, {pipeline_mode = #tpu.pipeline_mode<synchronous>, transform_indices = @transform_21, window_bounds = array<i64: 1, 32>}, {pipeline_mode = #tpu.pipeline_mode<synchronous>, transform_indices = @transform_22, window_bounds = array<i64: 1, 32, 32>}, {pipeline_mode = #tpu.pipeline_mode<synchronous>, transform_indices = @transform_23, window_bounds = array<i64: 1, 32>}, {pipeline_mode = #tpu.pipeline_mode<synchronous>, transform_indices = @transform_24, window_bounds = array<i64: 3, 32, 32>}, {pipeline_mode = #tpu.pipeline_mode<synchronous>, transform_indices = @transform_25, window_bounds = array<i64: 1, 32>}, {pipeline_mode = #tpu.pipeline_mode<synchronous>, transform_indices = @transform_26, window_bounds = array<i64: 32, 8>}, {pipeline_mode = #tpu.pipeline_mode<synchronous>, transform_indices = @transform_27, window_bounds = array<i64: 1, 8>}, {pipeline_mode = #tpu.pipeline_mode<synchronous>, transform_indices = @transform_28, window_bounds = array<i64: 32, 8>}, {pipeline_mode = #tpu.pipeline_mode<synchronous>, transform_indices = @transform_29, window_bounds = array<i64: 1, 8>}, {transform_indices = @transform_30, window_bounds = array<i64: 1, 4, 8>}, {transform_indices = @transform_31, window_bounds = array<i64: 1, 4, 8>}, {transform_indices = @transform_32, window_bounds = array<i64: 1, 4, 8>}]} {
    %c0 = arith.constant 0 : index
    %c0_0 = arith.constant 0 : index
    %c0_1 = arith.constant 0 : index
    %0 = vector.load %arg1[%c0, %c0_0, %c0_1] : memref<1x16x16xf32, #tpu.memory_space<vmem>>, vector<1x16x16xf32>
    %1 = vector.shape_cast %0 : vector<1x16x16xf32> to vector<16x16xf32>
    %cst = arith.constant 0.000000e+00 : f32
    %2 = vector.broadcast %cst : f32 to vector<2x16xf32>
    %c0_2 = arith.constant 0 : index
    %c0_3 = arith.constant 0 : index
    %3 = vector.load %arg34[%c0_2, %c0_3] : memref<18x16xf32, #tpu.memory_space<vmem>>, vector<2x16xf32>
    tpu.vector_store %arg34[%c0_2, %c0_3], %2 {strides = array<i32>} : memref<18x16xf32, #tpu.memory_space<vmem>>, vector<2x16xf32>,
    %c2 = arith.constant 2 : index
    %c0_4 = arith.constant 0 : index
    %4 = vector.load %arg34[%c2, %c0_4] : memref<18x16xf32, #tpu.memory_space<vmem>>, vector<16x16xf32>
    tpu.vector_store %arg34[%c2, %c0_4], %1 {strides = array<i32>} : memref<18x16xf32, #tpu.memory_space<vmem>>, vector<16x16xf32>,
    %cst_5 = arith.constant 0.000000e+00 : f32
    %5 = vector.broadcast %cst_5 : f32 to vector<16x32xf32>
    %c0_6 = arith.constant 0 : index
    %c0_7 = arith.constant 0 : index
    %6 = vector.load %arg34[%c0_6, %c0_7] : memref<18x16xf32, #tpu.memory_space<vmem>>, vector<16x16xf32>
    %7 = arith.truncf %6 : vector<16x16xf32> to vector<16x16xbf16>
    %c0_8 = arith.constant 0 : index
    %c0_9 = arith.constant 0 : index
    %c0_10 = arith.constant 0 : index
    %8 = vector.load %arg3[%c0_8, %c0_9, %c0_10] : memref<3x16x32xbf16, #tpu.memory_space<vmem>>, vector<1x16x32xbf16>
    %9 = vector.shape_cast %8 : vector<1x16x32xbf16> to vector<16x32xbf16>
    %cst_11 = arith.constant dense<0.000000e+00> : vector<16x32xf32>
    %10 = tpu.matmul %7, %9, %cst_11 {dimension_numbers = #tpu.dot_dimension_numbers<[1], [0], [0], [1], [0, 0, 1, 1], [], []>} : vector<16x16xbf16>, vector<16x32xbf16>, vector<16x32xf32> -> vector<16x32xf32>
    %11 = arith.addf %5, %10 : vector<16x32xf32>
    %c1 = arith.constant 1 : index
    %c0_12 = arith.constant 0 : index
    %12 = vector.load %arg34[%c1, %c0_12] : memref<18x16xf32, #tpu.memory_space<vmem>>, vector<16x16xf32>
    %13 = arith.truncf %12 : vector<16x16xf32> to vector<16x16xbf16>
    %c1_13 = arith.constant 1 : index
    %c0_14 = arith.constant 0 : index
    %c0_15 = arith.constant 0 : index
    %14 = vector.load %arg3[%c1_13, %c0_14, %c0_15] : memref<3x16x32xbf16, #tpu.memory_space<vmem>>, vector<1x16x32xbf16>
    %15 = vector.shape_cast %14 : vector<1x16x32xbf16> to vector<16x32xbf16>
    %cst_16 = arith.constant dense<0.000000e+00> : vector<16x32xf32>
    %16 = tpu.matmul %13, %15, %cst_16 {dimension_numbers = #tpu.dot_dimension_numbers<[1], [0], [0], [1], [0, 0, 1, 1], [], []>} : vector<16x16xbf16>, vector<16x32xbf16>, vector<16x32xf32> -> vector<16x32xf32>
    %17 = arith.addf %11, %16 : vector<16x32xf32>
    %c2_17 = arith.constant 2 : index
    %c0_18 = arith.constant 0 : index
    %18 = vector.load %arg34[%c2_17, %c0_18] : memref<18x16xf32, #tpu.memory_space<vmem>>, vector<16x16xf32>
    %19 = arith.truncf %18 : vector<16x16xf32> to vector<16x16xbf16>
    %c2_19 = arith.constant 2 : index
    %c0_20 = arith.constant 0 : index
    %c0_21 = arith.constant 0 : index
    %20 = vector.load %arg3[%c2_19, %c0_20, %c0_21] : memref<3x16x32xbf16, #tpu.memory_space<vmem>>, vector<1x16x32xbf16>
    %21 = vector.shape_cast %20 : vector<1x16x32xbf16> to vector<16x32xbf16>
    %cst_22 = arith.constant dense<0.000000e+00> : vector<16x32xf32>
    %22 = tpu.matmul %19, %21, %cst_22 {dimension_numbers = #tpu.dot_dimension_numbers<[1], [0], [0], [1], [0, 0, 1, 1], [], []>} : vector<16x16xbf16>, vector<16x32xbf16>, vector<16x32xf32> -> vector<16x32xf32>
    %23 = arith.addf %17, %22 : vector<16x32xf32>
    %c0_23 = arith.constant 0 : index
    %c0_24 = arith.constant 0 : index
    %24 = vector.load %arg4[%c0_23, %c0_24] : memref<1x32xf32, #tpu.memory_space<vmem>>, vector<1x32xf32>
    %25 = vector.broadcast %24 : vector<1x32xf32> to vector<16x32xf32>
    %26 = arith.addf %23, %25 : vector<16x32xf32>
    %cst_25 = arith.constant 0.000000e+00 : f32
    %27 = vector.broadcast %cst_25 : f32 to vector<16x32xf32>
    %28 = arith.maximumf %26, %27 : vector<16x32xf32>
    %cst_26 = arith.constant 0.000000e+00 : f32
    %29 = vector.broadcast %cst_26 : f32 to vector<2x32xf32>
    %c0_27 = arith.constant 0 : index
    %c0_28 = arith.constant 0 : index
    %30 = vector.load %arg35[%c0_27, %c0_28] : memref<18x32xf32, #tpu.memory_space<vmem>>, vector<2x32xf32>
    tpu.vector_store %arg35[%c0_27, %c0_28], %29 {strides = array<i32>} : memref<18x32xf32, #tpu.memory_space<vmem>>, vector<2x32xf32>,
    %c2_29 = arith.constant 2 : index
    %c0_30 = arith.constant 0 : index
    %31 = vector.load %arg35[%c2_29, %c0_30] : memref<18x32xf32, #tpu.memory_space<vmem>>, vector<16x32xf32>
    tpu.vector_store %arg35[%c2_29, %c0_30], %28 {strides = array<i32>} : memref<18x32xf32, #tpu.memory_space<vmem>>, vector<16x32xf32>,
    %cst_31 = arith.constant 0.000000e+00 : f32
    %32 = vector.broadcast %cst_31 : f32 to vector<8x32xf32>
    %c0_32 = arith.constant 0 : index
    %c0_33 = arith.constant 0 : index
    %33 = tpu.strided_load %arg35[%c0_32, %c0_33] {strides = array<i32: 2, 1>} : memref<18x32xf32, #tpu.memory_space<vmem>>, vector<8x32xf32>
    %34 = arith.truncf %33 : vector<8x32xf32> to vector<8x32xbf16>
    %c0_34 = arith.constant 0 : index
    %c0_35 = arith.constant 0 : index
    %c0_36 = arith.constant 0 : index
    %35 = vector.load %arg5[%c0_34, %c0_35, %c0_36] : memref<4x32x32xbf16, #tpu.memory_space<vmem>>, vector<1x32x32xbf16>
    %36 = vector.shape_cast %35 : vector<1x32x32xbf16> to vector<32x32xbf16>
    %cst_37 = arith.constant dense<0.000000e+00> : vector<8x32xf32>
    %37 = tpu.matmul %34, %36, %cst_37 {dimension_numbers = #tpu.dot_dimension_numbers<[1], [0], [0], [1], [0, 0, 1, 1], [], []>} : vector<8x32xbf16>, vector<32x32xbf16>, vector<8x32xf32> -> vector<8x32xf32>
    %38 = arith.addf %32, %37 : vector<8x32xf32>
    %c1_38 = arith.constant 1 : index
    %c0_39 = arith.constant 0 : index
    %39 = tpu.strided_load %arg35[%c1_38, %c0_39] {strides = array<i32: 2, 1>} : memref<18x32xf32, #tpu.memory_space<vmem>>, vector<8x32xf32>
    %40 = arith.truncf %39 : vector<8x32xf32> to vector<8x32xbf16>
    %c1_40 = arith.constant 1 : index
    %c0_41 = arith.constant 0 : index
    %c0_42 = arith.constant 0 : index
    %41 = vector.load %arg5[%c1_40, %c0_41, %c0_42] : memref<4x32x32xbf16, #tpu.memory_space<vmem>>, vector<1x32x32xbf16>
    %42 = vector.shape_cast %41 : vector<1x32x32xbf16> to vector<32x32xbf16>
    %cst_43 = arith.constant dense<0.000000e+00> : vector<8x32xf32>
    %43 = tpu.matmul %40, %42, %cst_43 {dimension_numbers = #tpu.dot_dimension_numbers<[1], [0], [0], [1], [0, 0, 1, 1], [], []>} : vector<8x32xbf16>, vector<32x32xbf16>, vector<8x32xf32> -> vector<8x32xf32>
    %44 = arith.addf %38, %43 : vector<8x32xf32>
    %c2_44 = arith.constant 2 : index
    %c0_45 = arith.constant 0 : index
    %45 = tpu.strided_load %arg35[%c2_44, %c0_45] {strides = array<i32: 2, 1>} : memref<18x32xf32, #tpu.memory_space<vmem>>, vector<8x32xf32>
    %46 = arith.truncf %45 : vector<8x32xf32> to vector<8x32xbf16>
    %c2_46 = arith.constant 2 : index
    %c0_47 = arith.constant 0 : index
    %c0_48 = arith.constant 0 : index
    %47 = vector.load %arg5[%c2_46, %c0_47, %c0_48] : memref<4x32x32xbf16, #tpu.memory_space<vmem>>, vector<1x32x32xbf16>
    %48 = vector.shape_cast %47 : vector<1x32x32xbf16> to vector<32x32xbf16>
    %cst_49 = arith.constant dense<0.000000e+00> : vector<8x32xf32>
    %49 = tpu.matmul %46, %48, %cst_49 {dimension_numbers = #tpu.dot_dimension_numbers<[1], [0], [0], [1], [0, 0, 1, 1], [], []>} : vector<8x32xbf16>, vector<32x32xbf16>, vector<8x32xf32> -> vector<8x32xf32>
    %50 = arith.addf %44, %49 : vector<8x32xf32>
    %c3 = arith.constant 3 : index
    %c0_50 = arith.constant 0 : index
    %51 = tpu.strided_load %arg35[%c3, %c0_50] {strides = array<i32: 2, 1>} : memref<18x32xf32, #tpu.memory_space<vmem>>, vector<8x32xf32>
    %52 = arith.truncf %51 : vector<8x32xf32> to vector<8x32xbf16>
    %c3_51 = arith.constant 3 : index
    %c0_52 = arith.constant 0 : index
    %c0_53 = arith.constant 0 : index
    %53 = vector.load %arg5[%c3_51, %c0_52, %c0_53] : memref<4x32x32xbf16, #tpu.memory_space<vmem>>, vector<1x32x32xbf16>
    %54 = vector.shape_cast %53 : vector<1x32x32xbf16> to vector<32x32xbf16>
    %cst_54 = arith.constant dense<0.000000e+00> : vector<8x32xf32>
    %55 = tpu.matmul %52, %54, %cst_54 {dimension_numbers = #tpu.dot_dimension_numbers<[1], [0], [0], [1], [0, 0, 1, 1], [], []>} : vector<8x32xbf16>, vector<32x32xbf16>, vector<8x32xf32> -> vector<8x32xf32>
    %56 = arith.addf %50, %55 : vector<8x32xf32>
    %c0_55 = arith.constant 0 : index
    %c0_56 = arith.constant 0 : index
    %57 = vector.load %arg6[%c0_55, %c0_56] : memref<1x32xf32, #tpu.memory_space<vmem>>, vector<1x32xf32>
    %58 = vector.broadcast %57 : vector<1x32xf32> to vector<8x32xf32>
    %59 = arith.addf %56, %58 : vector<8x32xf32>
    %cst_57 = arith.constant 0.000000e+00 : f32
    %60 = vector.broadcast %cst_57 : f32 to vector<8x32xf32>
    %61 = arith.maximumf %59, %60 : vector<8x32xf32>
    %cst_58 = arith.constant 0.000000e+00 : f32
    %62 = vector.broadcast %cst_58 : f32 to vector<6x32xf32>
    %c0_59 = arith.constant 0 : index
    %c0_60 = arith.constant 0 : index
    %63 = vector.load %arg35[%c0_59, %c0_60] : memref<18x32xf32, #tpu.memory_space<vmem>>, vector<6x32xf32>
    tpu.vector_store %arg35[%c0_59, %c0_60], %62 {strides = array<i32>} : memref<18x32xf32, #tpu.memory_space<vmem>>, vector<6x32xf32>,
    %c6 = arith.constant 6 : index
    %c0_61 = arith.constant 0 : index
    %64 = vector.load %arg35[%c6, %c0_61] : memref<18x32xf32, #tpu.memory_space<vmem>>, vector<8x32xf32>
    tpu.vector_store %arg35[%c6, %c0_61], %61 {strides = array<i32>} : memref<18x32xf32, #tpu.memory_space<vmem>>, vector<8x32xf32>,
    %cst_62 = arith.constant 0.000000e+00 : f32
    %65 = vector.broadcast %cst_62 : f32 to vector<8x32xf32>
    %c0_63 = arith.constant 0 : index
    %c0_64 = arith.constant 0 : index
    %66 = vector.load %arg35[%c0_63, %c0_64] : memref<18x32xf32, #tpu.memory_space<vmem>>, vector<8x32xf32>
    %67 = arith.truncf %66 : vector<8x32xf32> to vector<8x32xbf16>
    %c0_65 = arith.constant 0 : index
    %c0_66 = arith.constant 0 : index
    %c0_67 = arith.constant 0 : index
    %68 = vector.load %arg7[%c0_65, %c0_66, %c0_67] : memref<3x32x32xbf16, #tpu.memory_space<vmem>>, vector<1x32x32xbf16>
    %69 = vector.shape_cast %68 : vector<1x32x32xbf16> to vector<32x32xbf16>
    %cst_68 = arith.constant dense<0.000000e+00> : vector<8x32xf32>
    %70 = tpu.matmul %67, %69, %cst_68 {dimension_numbers = #tpu.dot_dimension_numbers<[1], [0], [0], [1], [0, 0, 1, 1], [], []>} : vector<8x32xbf16>, vector<32x32xbf16>, vector<8x32xf32> -> vector<8x32xf32>
    %71 = arith.addf %65, %70 : vector<8x32xf32>
    %c3_69 = arith.constant 3 : index
    %c0_70 = arith.constant 0 : index
    %72 = vector.load %arg35[%c3_69, %c0_70] : memref<18x32xf32, #tpu.memory_space<vmem>>, vector<8x32xf32>
    %73 = arith.truncf %72 : vector<8x32xf32> to vector<8x32xbf16>
    %c1_71 = arith.constant 1 : index
    %c0_72 = arith.constant 0 : index
    %c0_73 = arith.constant 0 : index
    %74 = vector.load %arg7[%c1_71, %c0_72, %c0_73] : memref<3x32x32xbf16, #tpu.memory_space<vmem>>, vector<1x32x32xbf16>
    %75 = vector.shape_cast %74 : vector<1x32x32xbf16> to vector<32x32xbf16>
    %cst_74 = arith.constant dense<0.000000e+00> : vector<8x32xf32>
    %76 = tpu.matmul %73, %75, %cst_74 {dimension_numbers = #tpu.dot_dimension_numbers<[1], [0], [0], [1], [0, 0, 1, 1], [], []>} : vector<8x32xbf16>, vector<32x32xbf16>, vector<8x32xf32> -> vector<8x32xf32>
    %77 = arith.addf %71, %76 : vector<8x32xf32>
    %c6_75 = arith.constant 6 : index
    %c0_76 = arith.constant 0 : index
    %78 = vector.load %arg35[%c6_75, %c0_76] : memref<18x32xf32, #tpu.memory_space<vmem>>, vector<8x32xf32>
    %79 = arith.truncf %78 : vector<8x32xf32> to vector<8x32xbf16>
    %c2_77 = arith.constant 2 : index
    %c0_78 = arith.constant 0 : index
    %c0_79 = arith.constant 0 : index
    %80 = vector.load %arg7[%c2_77, %c0_78, %c0_79] : memref<3x32x32xbf16, #tpu.memory_space<vmem>>, vector<1x32x32xbf16>
    %81 = vector.shape_cast %80 : vector<1x32x32xbf16> to vector<32x32xbf16>
    %cst_80 = arith.constant dense<0.000000e+00> : vector<8x32xf32>
    %82 = tpu.matmul %79, %81, %cst_80 {dimension_numbers = #tpu.dot_dimension_numbers<[1], [0], [0], [1], [0, 0, 1, 1], [], []>} : vector<8x32xbf16>, vector<32x32xbf16>, vector<8x32xf32> -> vector<8x32xf32>
    %83 = arith.addf %77, %82 : vector<8x32xf32>
    %c0_81 = arith.constant 0 : index
    %c0_82 = arith.constant 0 : index
    %84 = vector.load %arg8[%c0_81, %c0_82] : memref<1x32xf32, #tpu.memory_space<vmem>>, vector<1x32xf32>
    %85 = vector.broadcast %84 : vector<1x32xf32> to vector<8x32xf32>
    %86 = arith.addf %83, %85 : vector<8x32xf32>
    %cst_83 = arith.constant 0.000000e+00 : f32
    %87 = vector.broadcast %cst_83 : f32 to vector<8x32xf32>
    %88 = arith.maximumf %86, %87 : vector<8x32xf32>
    %89 = arith.truncf %88 : vector<8x32xf32> to vector<8x32xbf16>
    %c0_84 = arith.constant 0 : index
    %c0_85 = arith.constant 0 : index
    %c0_86 = arith.constant 0 : index
    %90 = vector.load %arg9[%c0_84, %c0_85, %c0_86] : memref<1x32x32xbf16, #tpu.memory_space<vmem>>, vector<1x32x32xbf16>
    %91 = vector.shape_cast %90 : vector<1x32x32xbf16> to vector<32x32xbf16>
    %cst_87 = arith.constant dense<0.000000e+00> : vector<8x32xf32>
    %92 = tpu.matmul %89, %91, %cst_87 {dimension_numbers = #tpu.dot_dimension_numbers<[1], [0], [0], [1], [0, 0, 1, 1], [], []>} : vector<8x32xbf16>, vector<32x32xbf16>, vector<8x32xf32> -> vector<8x32xf32>
    %c0_88 = arith.constant 0 : index
    %c0_89 = arith.constant 0 : index
    %93 = vector.load %arg10[%c0_88, %c0_89] : memref<1x32xf32, #tpu.memory_space<vmem>>, vector<1x32xf32>
    %94 = vector.broadcast %93 : vector<1x32xf32> to vector<8x32xf32>
    %95 = arith.addf %92, %94 : vector<8x32xf32>
    %96 = arith.addf %95, %59 : vector<8x32xf32>
    %cst_90 = arith.constant 0.000000e+00 : f32
    %97 = vector.broadcast %cst_90 : f32 to vector<8x32xf32>
    %98 = arith.maximumf %96, %97 : vector<8x32xf32>
    %cst_91 = arith.constant 0.000000e+00 : f32
    %99 = vector.broadcast %cst_91 : f32 to vector<2x32xf32>
    %c0_92 = arith.constant 0 : index
    %c0_93 = arith.constant 0 : index
    %100 = vector.load %arg35[%c0_92, %c0_93] : memref<18x32xf32, #tpu.memory_space<vmem>>, vector<2x32xf32>
    tpu.vector_store %arg35[%c0_92, %c0_93], %99 {strides = array<i32>} : memref<18x32xf32, #tpu.memory_space<vmem>>, vector<2x32xf32>,
    %c2_94 = arith.constant 2 : index
    %c0_95 = arith.constant 0 : index
    %101 = vector.load %arg35[%c2_94, %c0_95] : memref<18x32xf32, #tpu.memory_space<vmem>>, vector<8x32xf32>
    tpu.vector_store %arg35[%c2_94, %c0_95], %98 {strides = array<i32>} : memref<18x32xf32, #tpu.memory_space<vmem>>, vector<8x32xf32>,
    %cst_96 = arith.constant 0.000000e+00 : f32
    %102 = vector.broadcast %cst_96 : f32 to vector<8x32xf32>
    %c0_97 = arith.constant 0 : index
    %c0_98 = arith.constant 0 : index
    %103 = vector.load %arg35[%c0_97, %c0_98] : memref<18x32xf32, #tpu.memory_space<vmem>>, vector<8x32xf32>
    %104 = arith.truncf %103 : vector<8x32xf32> to vector<8x32xbf16>
    %c0_99 = arith.constant 0 : index
    %c0_100 = arith.constant 0 : index
    %c0_101 = arith.constant 0 : index
    %105 = vector.load %arg11[%c0_99, %c0_100, %c0_101] : memref<3x32x32xbf16, #tpu.memory_space<vmem>>, vector<1x32x32xbf16>
    %106 = vector.shape_cast %105 : vector<1x32x32xbf16> to vector<32x32xbf16>
    %cst_102 = arith.constant dense<0.000000e+00> : vector<8x32xf32>
    %107 = tpu.matmul %104, %106, %cst_102 {dimension_numbers = #tpu.dot_dimension_numbers<[1], [0], [0], [1], [0, 0, 1, 1], [], []>} : vector<8x32xbf16>, vector<32x32xbf16>, vector<8x32xf32> -> vector<8x32xf32>
    %108 = arith.addf %102, %107 : vector<8x32xf32>
    %c1_103 = arith.constant 1 : index
    %c0_104 = arith.constant 0 : index
    %109 = vector.load %arg35[%c1_103, %c0_104] : memref<18x32xf32, #tpu.memory_space<vmem>>, vector<8x32xf32>
    %110 = arith.truncf %109 : vector<8x32xf32> to vector<8x32xbf16>
    %c1_105 = arith.constant 1 : index
    %c0_106 = arith.constant 0 : index
    %c0_107 = arith.constant 0 : index
    %111 = vector.load %arg11[%c1_105, %c0_106, %c0_107] : memref<3x32x32xbf16, #tpu.memory_space<vmem>>, vector<1x32x32xbf16>
    %112 = vector.shape_cast %111 : vector<1x32x32xbf16> to vector<32x32xbf16>
    %cst_108 = arith.constant dense<0.000000e+00> : vector<8x32xf32>
    %113 = tpu.matmul %110, %112, %cst_108 {dimension_numbers = #tpu.dot_dimension_numbers<[1], [0], [0], [1], [0, 0, 1, 1], [], []>} : vector<8x32xbf16>, vector<32x32xbf16>, vector<8x32xf32> -> vector<8x32xf32>
    %114 = arith.addf %108, %113 : vector<8x32xf32>
    %c2_109 = arith.constant 2 : index
    %c0_110 = arith.constant 0 : index
    %115 = vector.load %arg35[%c2_109, %c0_110] : memref<18x32xf32, #tpu.memory_space<vmem>>, vector<8x32xf32>
    %116 = arith.truncf %115 : vector<8x32xf32> to vector<8x32xbf16>
    %c2_111 = arith.constant 2 : index
    %c0_112 = arith.constant 0 : index
    %c0_113 = arith.constant 0 : index
    %117 = vector.load %arg11[%c2_111, %c0_112, %c0_113] : memref<3x32x32xbf16, #tpu.memory_space<vmem>>, vector<1x32x32xbf16>
    %118 = vector.shape_cast %117 : vector<1x32x32xbf16> to vector<32x32xbf16>
    %cst_114 = arith.constant dense<0.000000e+00> : vector<8x32xf32>
    %119 = tpu.matmul %116, %118, %cst_114 {dimension_numbers = #tpu.dot_dimension_numbers<[1], [0], [0], [1], [0, 0, 1, 1], [], []>} : vector<8x32xbf16>, vector<32x32xbf16>, vector<8x32xf32> -> vector<8x32xf32>
    %120 = arith.addf %114, %119 : vector<8x32xf32>
    %c0_115 = arith.constant 0 : index
    %c0_116 = arith.constant 0 : index
    %121 = vector.load %arg12[%c0_115, %c0_116] : memref<1x32xf32, #tpu.memory_space<vmem>>, vector<1x32xf32>
    %122 = vector.broadcast %121 : vector<1x32xf32> to vector<8x32xf32>
    %123 = arith.addf %120, %122 : vector<8x32xf32>
    %cst_117 = arith.constant 0.000000e+00 : f32
    %124 = vector.broadcast %cst_117 : f32 to vector<8x32xf32>
    %125 = arith.maximumf %123, %124 : vector<8x32xf32>
    %126 = arith.truncf %125 : vector<8x32xf32> to vector<8x32xbf16>
    %c0_118 = arith.constant 0 : index
    %c0_119 = arith.constant 0 : index
    %c0_120 = arith.constant 0 : index
    %127 = vector.load %arg13[%c0_118, %c0_119, %c0_120] : memref<1x32x32xbf16, #tpu.memory_space<vmem>>, vector<1x32x32xbf16>
    %128 = vector.shape_cast %127 : vector<1x32x32xbf16> to vector<32x32xbf16>
    %cst_121 = arith.constant dense<0.000000e+00> : vector<8x32xf32>
    %129 = tpu.matmul %126, %128, %cst_121 {dimension_numbers = #tpu.dot_dimension_numbers<[1], [0], [0], [1], [0, 0, 1, 1], [], []>} : vector<8x32xbf16>, vector<32x32xbf16>, vector<8x32xf32> -> vector<8x32xf32>
    %c0_122 = arith.constant 0 : index
    %c0_123 = arith.constant 0 : index
    %130 = vector.load %arg14[%c0_122, %c0_123] : memref<1x32xf32, #tpu.memory_space<vmem>>, vector<1x32xf32>
    %131 = vector.broadcast %130 : vector<1x32xf32> to vector<8x32xf32>
    %132 = arith.addf %129, %131 : vector<8x32xf32>
    %133 = arith.addf %132, %96 : vector<8x32xf32>
    %cst_124 = arith.constant 0.000000e+00 : f32
    %134 = vector.broadcast %cst_124 : f32 to vector<2x32xf32>
    %c0_125 = arith.constant 0 : index
    %c0_126 = arith.constant 0 : index
    %135 = vector.load %arg35[%c0_125, %c0_126] : memref<18x32xf32, #tpu.memory_space<vmem>>, vector<2x32xf32>
    tpu.vector_store %arg35[%c0_125, %c0_126], %134 {strides = array<i32>} : memref<18x32xf32, #tpu.memory_space<vmem>>, vector<2x32xf32>,
    %c2_127 = arith.constant 2 : index
    %c0_128 = arith.constant 0 : index
    %136 = vector.load %arg35[%c2_127, %c0_128] : memref<18x32xf32, #tpu.memory_space<vmem>>, vector<8x32xf32>
    tpu.vector_store %arg35[%c2_127, %c0_128], %133 {strides = array<i32>} : memref<18x32xf32, #tpu.memory_space<vmem>>, vector<8x32xf32>,
    %cst_129 = arith.constant 0.000000e+00 : f32
    %137 = vector.broadcast %cst_129 : f32 to vector<4x32xf32>
    %c0_130 = arith.constant 0 : index
    %c0_131 = arith.constant 0 : index
    %138 = tpu.strided_load %arg35[%c0_130, %c0_131] {strides = array<i32: 2, 1>} : memref<18x32xf32, #tpu.memory_space<vmem>>, vector<4x32xf32>
    %139 = arith.truncf %138 : vector<4x32xf32> to vector<4x32xbf16>
    %c0_132 = arith.constant 0 : index
    %c0_133 = arith.constant 0 : index
    %c0_134 = arith.constant 0 : index
    %140 = vector.load %arg15[%c0_132, %c0_133, %c0_134] : memref<4x32x32xbf16, #tpu.memory_space<vmem>>, vector<1x32x32xbf16>
    %141 = vector.shape_cast %140 : vector<1x32x32xbf16> to vector<32x32xbf16>
    %cst_135 = arith.constant dense<0.000000e+00> : vector<4x32xf32>
    %142 = tpu.matmul %139, %141, %cst_135 {dimension_numbers = #tpu.dot_dimension_numbers<[1], [0], [0], [1], [0, 0, 1, 1], [], []>} : vector<4x32xbf16>, vector<32x32xbf16>, vector<4x32xf32> -> vector<4x32xf32>
    %143 = arith.addf %137, %142 : vector<4x32xf32>
    %c1_136 = arith.constant 1 : index
    %c0_137 = arith.constant 0 : index
    %144 = tpu.strided_load %arg35[%c1_136, %c0_137] {strides = array<i32: 2, 1>} : memref<18x32xf32, #tpu.memory_space<vmem>>, vector<4x32xf32>
    %145 = arith.truncf %144 : vector<4x32xf32> to vector<4x32xbf16>
    %c1_138 = arith.constant 1 : index
    %c0_139 = arith.constant 0 : index
    %c0_140 = arith.constant 0 : index
    %146 = vector.load %arg15[%c1_138, %c0_139, %c0_140] : memref<4x32x32xbf16, #tpu.memory_space<vmem>>, vector<1x32x32xbf16>
    %147 = vector.shape_cast %146 : vector<1x32x32xbf16> to vector<32x32xbf16>
    %cst_141 = arith.constant dense<0.000000e+00> : vector<4x32xf32>
    %148 = tpu.matmul %145, %147, %cst_141 {dimension_numbers = #tpu.dot_dimension_numbers<[1], [0], [0], [1], [0, 0, 1, 1], [], []>} : vector<4x32xbf16>, vector<32x32xbf16>, vector<4x32xf32> -> vector<4x32xf32>
    %149 = arith.addf %143, %148 : vector<4x32xf32>
    %c2_142 = arith.constant 2 : index
    %c0_143 = arith.constant 0 : index
    %150 = tpu.strided_load %arg35[%c2_142, %c0_143] {strides = array<i32: 2, 1>} : memref<18x32xf32, #tpu.memory_space<vmem>>, vector<4x32xf32>
    %151 = arith.truncf %150 : vector<4x32xf32> to vector<4x32xbf16>
    %c2_144 = arith.constant 2 : index
    %c0_145 = arith.constant 0 : index
    %c0_146 = arith.constant 0 : index
    %152 = vector.load %arg15[%c2_144, %c0_145, %c0_146] : memref<4x32x32xbf16, #tpu.memory_space<vmem>>, vector<1x32x32xbf16>
    %153 = vector.shape_cast %152 : vector<1x32x32xbf16> to vector<32x32xbf16>
    %cst_147 = arith.constant dense<0.000000e+00> : vector<4x32xf32>
    %154 = tpu.matmul %151, %153, %cst_147 {dimension_numbers = #tpu.dot_dimension_numbers<[1], [0], [0], [1], [0, 0, 1, 1], [], []>} : vector<4x32xbf16>, vector<32x32xbf16>, vector<4x32xf32> -> vector<4x32xf32>
    %155 = arith.addf %149, %154 : vector<4x32xf32>
    %c3_148 = arith.constant 3 : index
    %c0_149 = arith.constant 0 : index
    %156 = tpu.strided_load %arg35[%c3_148, %c0_149] {strides = array<i32: 2, 1>} : memref<18x32xf32, #tpu.memory_space<vmem>>, vector<4x32xf32>
    %157 = arith.truncf %156 : vector<4x32xf32> to vector<4x32xbf16>
    %c3_150 = arith.constant 3 : index
    %c0_151 = arith.constant 0 : index
    %c0_152 = arith.constant 0 : index
    %158 = vector.load %arg15[%c3_150, %c0_151, %c0_152] : memref<4x32x32xbf16, #tpu.memory_space<vmem>>, vector<1x32x32xbf16>
    %159 = vector.shape_cast %158 : vector<1x32x32xbf16> to vector<32x32xbf16>
    %cst_153 = arith.constant dense<0.000000e+00> : vector<4x32xf32>
    %160 = tpu.matmul %157, %159, %cst_153 {dimension_numbers = #tpu.dot_dimension_numbers<[1], [0], [0], [1], [0, 0, 1, 1], [], []>} : vector<4x32xbf16>, vector<32x32xbf16>, vector<4x32xf32> -> vector<4x32xf32>
    %161 = arith.addf %155, %160 : vector<4x32xf32>
    %c0_154 = arith.constant 0 : index
    %c0_155 = arith.constant 0 : index
    %162 = vector.load %arg16[%c0_154, %c0_155] : memref<1x32xf32, #tpu.memory_space<vmem>>, vector<1x32xf32>
    %163 = vector.broadcast %162 : vector<1x32xf32> to vector<4x32xf32>
    %164 = arith.addf %161, %163 : vector<4x32xf32>
    %cst_156 = arith.constant 0.000000e+00 : f32
    %165 = vector.broadcast %cst_156 : f32 to vector<4x32xf32>
    %166 = arith.maximumf %164, %165 : vector<4x32xf32>
    %cst_157 = arith.constant 0.000000e+00 : f32
    %167 = vector.broadcast %cst_157 : f32 to vector<6x32xf32>
    %c0_158 = arith.constant 0 : index
    %c0_159 = arith.constant 0 : index
    %168 = vector.load %arg35[%c0_158, %c0_159] : memref<18x32xf32, #tpu.memory_space<vmem>>, vector<6x32xf32>
    tpu.vector_store %arg35[%c0_158, %c0_159], %167 {strides = array<i32>} : memref<18x32xf32, #tpu.memory_space<vmem>>, vector<6x32xf32>,
    %c6_160 = arith.constant 6 : index
    %c0_161 = arith.constant 0 : index
    %169 = vector.load %arg35[%c6_160, %c0_161] : memref<18x32xf32, #tpu.memory_space<vmem>>, vector<4x32xf32>
    tpu.vector_store %arg35[%c6_160, %c0_161], %166 {strides = array<i32>} : memref<18x32xf32, #tpu.memory_space<vmem>>, vector<4x32xf32>,
    %cst_162 = arith.constant 0.000000e+00 : f32
    %170 = vector.broadcast %cst_162 : f32 to vector<4x32xf32>
    %c0_163 = arith.constant 0 : index
    %c0_164 = arith.constant 0 : index
    %171 = vector.load %arg35[%c0_163, %c0_164] : memref<18x32xf32, #tpu.memory_space<vmem>>, vector<4x32xf32>
    %172 = arith.truncf %171 : vector<4x32xf32> to vector<4x32xbf16>
    %c0_165 = arith.constant 0 : index
    %c0_166 = arith.constant 0 : index
    %c0_167 = arith.constant 0 : index
    %173 = vector.load %arg17[%c0_165, %c0_166, %c0_167] : memref<3x32x32xbf16, #tpu.memory_space<vmem>>, vector<1x32x32xbf16>
    %174 = vector.shape_cast %173 : vector<1x32x32xbf16> to vector<32x32xbf16>
    %cst_168 = arith.constant dense<0.000000e+00> : vector<4x32xf32>
    %175 = tpu.matmul %172, %174, %cst_168 {dimension_numbers = #tpu.dot_dimension_numbers<[1], [0], [0], [1], [0, 0, 1, 1], [], []>} : vector<4x32xbf16>, vector<32x32xbf16>, vector<4x32xf32> -> vector<4x32xf32>
    %176 = arith.addf %170, %175 : vector<4x32xf32>
    %c3_169 = arith.constant 3 : index
    %c0_170 = arith.constant 0 : index
    %177 = vector.load %arg35[%c3_169, %c0_170] : memref<18x32xf32, #tpu.memory_space<vmem>>, vector<4x32xf32>
    %178 = arith.truncf %177 : vector<4x32xf32> to vector<4x32xbf16>
    %c1_171 = arith.constant 1 : index
    %c0_172 = arith.constant 0 : index
    %c0_173 = arith.constant 0 : index
    %179 = vector.load %arg17[%c1_171, %c0_172, %c0_173] : memref<3x32x32xbf16, #tpu.memory_space<vmem>>, vector<1x32x32xbf16>
    %180 = vector.shape_cast %179 : vector<1x32x32xbf16> to vector<32x32xbf16>
    %cst_174 = arith.constant dense<0.000000e+00> : vector<4x32xf32>
    %181 = tpu.matmul %178, %180, %cst_174 {dimension_numbers = #tpu.dot_dimension_numbers<[1], [0], [0], [1], [0, 0, 1, 1], [], []>} : vector<4x32xbf16>, vector<32x32xbf16>, vector<4x32xf32> -> vector<4x32xf32>
    %182 = arith.addf %176, %181 : vector<4x32xf32>
    %c6_175 = arith.constant 6 : index
    %c0_176 = arith.constant 0 : index
    %183 = vector.load %arg35[%c6_175, %c0_176] : memref<18x32xf32, #tpu.memory_space<vmem>>, vector<4x32xf32>
    %184 = arith.truncf %183 : vector<4x32xf32> to vector<4x32xbf16>
    %c2_177 = arith.constant 2 : index
    %c0_178 = arith.constant 0 : index
    %c0_179 = arith.constant 0 : index
    %185 = vector.load %arg17[%c2_177, %c0_178, %c0_179] : memref<3x32x32xbf16, #tpu.memory_space<vmem>>, vector<1x32x32xbf16>
    %186 = vector.shape_cast %185 : vector<1x32x32xbf16> to vector<32x32xbf16>
    %cst_180 = arith.constant dense<0.000000e+00> : vector<4x32xf32>
    %187 = tpu.matmul %184, %186, %cst_180 {dimension_numbers = #tpu.dot_dimension_numbers<[1], [0], [0], [1], [0, 0, 1, 1], [], []>} : vector<4x32xbf16>, vector<32x32xbf16>, vector<4x32xf32> -> vector<4x32xf32>
    %188 = arith.addf %182, %187 : vector<4x32xf32>
    %c0_181 = arith.constant 0 : index
    %c0_182 = arith.constant 0 : index
    %189 = vector.load %arg18[%c0_181, %c0_182] : memref<1x32xf32, #tpu.memory_space<vmem>>, vector<1x32xf32>
    %190 = vector.broadcast %189 : vector<1x32xf32> to vector<4x32xf32>
    %191 = arith.addf %188, %190 : vector<4x32xf32>
    %cst_183 = arith.constant 0.000000e+00 : f32
    %192 = vector.broadcast %cst_183 : f32 to vector<4x32xf32>
    %193 = arith.maximumf %191, %192 : vector<4x32xf32>
    %194 = arith.truncf %193 : vector<4x32xf32> to vector<4x32xbf16>
    %c0_184 = arith.constant 0 : index
    %c0_185 = arith.constant 0 : index
    %c0_186 = arith.constant 0 : index
    %195 = vector.load %arg19[%c0_184, %c0_185, %c0_186] : memref<1x32x32xbf16, #tpu.memory_space<vmem>>, vector<1x32x32xbf16>
    %196 = vector.shape_cast %195 : vector<1x32x32xbf16> to vector<32x32xbf16>
    %cst_187 = arith.constant dense<0.000000e+00> : vector<4x32xf32>
    %197 = tpu.matmul %194, %196, %cst_187 {dimension_numbers = #tpu.dot_dimension_numbers<[1], [0], [0], [1], [0, 0, 1, 1], [], []>} : vector<4x32xbf16>, vector<32x32xbf16>, vector<4x32xf32> -> vector<4x32xf32>
    %c0_188 = arith.constant 0 : index
    %c0_189 = arith.constant 0 : index
    %198 = vector.load %arg20[%c0_188, %c0_189] : memref<1x32xf32, #tpu.memory_space<vmem>>, vector<1x32xf32>
    %199 = vector.broadcast %198 : vector<1x32xf32> to vector<4x32xf32>
    %200 = arith.addf %197, %199 : vector<4x32xf32>
    %201 = arith.addf %200, %164 : vector<4x32xf32>
    %cst_190 = arith.constant 0.000000e+00 : f32
    %202 = vector.broadcast %cst_190 : f32 to vector<4x32xf32>
    %203 = arith.maximumf %201, %202 : vector<4x32xf32>
    %cst_191 = arith.constant 0.000000e+00 : f32
    %204 = vector.broadcast %cst_191 : f32 to vector<2x32xf32>
    %c0_192 = arith.constant 0 : index
    %c0_193 = arith.constant 0 : index
    %205 = vector.load %arg35[%c0_192, %c0_193] : memref<18x32xf32, #tpu.memory_space<vmem>>, vector<2x32xf32>
    tpu.vector_store %arg35[%c0_192, %c0_193], %204 {strides = array<i32>} : memref<18x32xf32, #tpu.memory_space<vmem>>, vector<2x32xf32>,
    %c2_194 = arith.constant 2 : index
    %c0_195 = arith.constant 0 : index
    %206 = vector.load %arg35[%c2_194, %c0_195] : memref<18x32xf32, #tpu.memory_space<vmem>>, vector<4x32xf32>
    tpu.vector_store %arg35[%c2_194, %c0_195], %203 {strides = array<i32>} : memref<18x32xf32, #tpu.memory_space<vmem>>, vector<4x32xf32>,
    %cst_196 = arith.constant 0.000000e+00 : f32
    %207 = vector.broadcast %cst_196 : f32 to vector<4x32xf32>
    %c0_197 = arith.constant 0 : index
    %c0_198 = arith.constant 0 : index
    %208 = vector.load %arg35[%c0_197, %c0_198] : memref<18x32xf32, #tpu.memory_space<vmem>>, vector<4x32xf32>
    %209 = arith.truncf %208 : vector<4x32xf32> to vector<4x32xbf16>
    %c0_199 = arith.constant 0 : index
    %c0_200 = arith.constant 0 : index
    %c0_201 = arith.constant 0 : index
    %210 = vector.load %arg21[%c0_199, %c0_200, %c0_201] : memref<3x32x32xbf16, #tpu.memory_space<vmem>>, vector<1x32x32xbf16>
    %211 = vector.shape_cast %210 : vector<1x32x32xbf16> to vector<32x32xbf16>
    %cst_202 = arith.constant dense<0.000000e+00> : vector<4x32xf32>
    %212 = tpu.matmul %209, %211, %cst_202 {dimension_numbers = #tpu.dot_dimension_numbers<[1], [0], [0], [1], [0, 0, 1, 1], [], []>} : vector<4x32xbf16>, vector<32x32xbf16>, vector<4x32xf32> -> vector<4x32xf32>
    %213 = arith.addf %207, %212 : vector<4x32xf32>
    %c1_203 = arith.constant 1 : index
    %c0_204 = arith.constant 0 : index
    %214 = vector.load %arg35[%c1_203, %c0_204] : memref<18x32xf32, #tpu.memory_space<vmem>>, vector<4x32xf32>
    %215 = arith.truncf %214 : vector<4x32xf32> to vector<4x32xbf16>
    %c1_205 = arith.constant 1 : index
    %c0_206 = arith.constant 0 : index
    %c0_207 = arith.constant 0 : index
    %216 = vector.load %arg21[%c1_205, %c0_206, %c0_207] : memref<3x32x32xbf16, #tpu.memory_space<vmem>>, vector<1x32x32xbf16>
    %217 = vector.shape_cast %216 : vector<1x32x32xbf16> to vector<32x32xbf16>
    %cst_208 = arith.constant dense<0.000000e+00> : vector<4x32xf32>
    %218 = tpu.matmul %215, %217, %cst_208 {dimension_numbers = #tpu.dot_dimension_numbers<[1], [0], [0], [1], [0, 0, 1, 1], [], []>} : vector<4x32xbf16>, vector<32x32xbf16>, vector<4x32xf32> -> vector<4x32xf32>
    %219 = arith.addf %213, %218 : vector<4x32xf32>
    %c2_209 = arith.constant 2 : index
    %c0_210 = arith.constant 0 : index
    %220 = vector.load %arg35[%c2_209, %c0_210] : memref<18x32xf32, #tpu.memory_space<vmem>>, vector<4x32xf32>
    %221 = arith.truncf %220 : vector<4x32xf32> to vector<4x32xbf16>
    %c2_211 = arith.constant 2 : index
    %c0_212 = arith.constant 0 : index
    %c0_213 = arith.constant 0 : index
    %222 = vector.load %arg21[%c2_211, %c0_212, %c0_213] : memref<3x32x32xbf16, #tpu.memory_space<vmem>>, vector<1x32x32xbf16>
    %223 = vector.shape_cast %222 : vector<1x32x32xbf16> to vector<32x32xbf16>
    %cst_214 = arith.constant dense<0.000000e+00> : vector<4x32xf32>
    %224 = tpu.matmul %221, %223, %cst_214 {dimension_numbers = #tpu.dot_dimension_numbers<[1], [0], [0], [1], [0, 0, 1, 1], [], []>} : vector<4x32xbf16>, vector<32x32xbf16>, vector<4x32xf32> -> vector<4x32xf32>
    %225 = arith.addf %219, %224 : vector<4x32xf32>
    %c0_215 = arith.constant 0 : index
    %c0_216 = arith.constant 0 : index
    %226 = vector.load %arg22[%c0_215, %c0_216] : memref<1x32xf32, #tpu.memory_space<vmem>>, vector<1x32xf32>
    %227 = vector.broadcast %226 : vector<1x32xf32> to vector<4x32xf32>
    %228 = arith.addf %225, %227 : vector<4x32xf32>
    %cst_217 = arith.constant 0.000000e+00 : f32
    %229 = vector.broadcast %cst_217 : f32 to vector<4x32xf32>
    %230 = arith.maximumf %228, %229 : vector<4x32xf32>
    %231 = arith.truncf %230 : vector<4x32xf32> to vector<4x32xbf16>
    %c0_218 = arith.constant 0 : index
    %c0_219 = arith.constant 0 : index
    %c0_220 = arith.constant 0 : index
    %232 = vector.load %arg23[%c0_218, %c0_219, %c0_220] : memref<1x32x32xbf16, #tpu.memory_space<vmem>>, vector<1x32x32xbf16>
    %233 = vector.shape_cast %232 : vector<1x32x32xbf16> to vector<32x32xbf16>
    %cst_221 = arith.constant dense<0.000000e+00> : vector<4x32xf32>
    %234 = tpu.matmul %231, %233, %cst_221 {dimension_numbers = #tpu.dot_dimension_numbers<[1], [0], [0], [1], [0, 0, 1, 1], [], []>} : vector<4x32xbf16>, vector<32x32xbf16>, vector<4x32xf32> -> vector<4x32xf32>
    %c0_222 = arith.constant 0 : index
    %c0_223 = arith.constant 0 : index
    %235 = vector.load %arg24[%c0_222, %c0_223] : memref<1x32xf32, #tpu.memory_space<vmem>>, vector<1x32xf32>
    %236 = vector.broadcast %235 : vector<1x32xf32> to vector<4x32xf32>
    %237 = arith.addf %234, %236 : vector<4x32xf32>
    %238 = arith.addf %237, %201 : vector<4x32xf32>
    %cst_224 = arith.constant 0.000000e+00 : f32
    %239 = vector.broadcast %cst_224 : f32 to vector<2x32xf32>
    %c0_225 = arith.constant 0 : index
    %c0_226 = arith.constant 0 : index
    %240 = vector.load %arg35[%c0_225, %c0_226] : memref<18x32xf32, #tpu.memory_space<vmem>>, vector<2x32xf32>
    tpu.vector_store %arg35[%c0_225, %c0_226], %239 {strides = array<i32>} : memref<18x32xf32, #tpu.memory_space<vmem>>, vector<2x32xf32>,
    %c2_227 = arith.constant 2 : index
    %c0_228 = arith.constant 0 : index
    %241 = vector.load %arg35[%c2_227, %c0_228] : memref<18x32xf32, #tpu.memory_space<vmem>>, vector<4x32xf32>
    tpu.vector_store %arg35[%c2_227, %c0_228], %238 {strides = array<i32>} : memref<18x32xf32, #tpu.memory_space<vmem>>, vector<4x32xf32>,
    %cst_229 = arith.constant 0.000000e+00 : f32
    %242 = vector.broadcast %cst_229 : f32 to vector<4x32xf32>
    %c0_230 = arith.constant 0 : index
    %c0_231 = arith.constant 0 : index
    %243 = vector.load %arg35[%c0_230, %c0_231] : memref<18x32xf32, #tpu.memory_space<vmem>>, vector<4x32xf32>
    %244 = arith.truncf %243 : vector<4x32xf32> to vector<4x32xbf16>
    %c0_232 = arith.constant 0 : index
    %c0_233 = arith.constant 0 : index
    %c0_234 = arith.constant 0 : index
    %245 = vector.load %arg25[%c0_232, %c0_233, %c0_234] : memref<3x32x32xbf16, #tpu.memory_space<vmem>>, vector<1x32x32xbf16>
    %246 = vector.shape_cast %245 : vector<1x32x32xbf16> to vector<32x32xbf16>
    %cst_235 = arith.constant dense<0.000000e+00> : vector<4x32xf32>
    %247 = tpu.matmul %244, %246, %cst_235 {dimension_numbers = #tpu.dot_dimension_numbers<[1], [0], [0], [1], [0, 0, 1, 1], [], []>} : vector<4x32xbf16>, vector<32x32xbf16>, vector<4x32xf32> -> vector<4x32xf32>
    %248 = arith.addf %242, %247 : vector<4x32xf32>
    %c1_236 = arith.constant 1 : index
    %c0_237 = arith.constant 0 : index
    %249 = vector.load %arg35[%c1_236, %c0_237] : memref<18x32xf32, #tpu.memory_space<vmem>>, vector<4x32xf32>
    %250 = arith.truncf %249 : vector<4x32xf32> to vector<4x32xbf16>
    %c1_238 = arith.constant 1 : index
    %c0_239 = arith.constant 0 : index
    %c0_240 = arith.constant 0 : index
    %251 = vector.load %arg25[%c1_238, %c0_239, %c0_240] : memref<3x32x32xbf16, #tpu.memory_space<vmem>>, vector<1x32x32xbf16>
    %252 = vector.shape_cast %251 : vector<1x32x32xbf16> to vector<32x32xbf16>
    %cst_241 = arith.constant dense<0.000000e+00> : vector<4x32xf32>
    %253 = tpu.matmul %250, %252, %cst_241 {dimension_numbers = #tpu.dot_dimension_numbers<[1], [0], [0], [1], [0, 0, 1, 1], [], []>} : vector<4x32xbf16>, vector<32x32xbf16>, vector<4x32xf32> -> vector<4x32xf32>
    %254 = arith.addf %248, %253 : vector<4x32xf32>
    %c2_242 = arith.constant 2 : index
    %c0_243 = arith.constant 0 : index
    %255 = vector.load %arg35[%c2_242, %c0_243] : memref<18x32xf32, #tpu.memory_space<vmem>>, vector<4x32xf32>
    %256 = arith.truncf %255 : vector<4x32xf32> to vector<4x32xbf16>
    %c2_244 = arith.constant 2 : index
    %c0_245 = arith.constant 0 : index
    %c0_246 = arith.constant 0 : index
    %257 = vector.load %arg25[%c2_244, %c0_245, %c0_246] : memref<3x32x32xbf16, #tpu.memory_space<vmem>>, vector<1x32x32xbf16>
    %258 = vector.shape_cast %257 : vector<1x32x32xbf16> to vector<32x32xbf16>
    %cst_247 = arith.constant dense<0.000000e+00> : vector<4x32xf32>
    %259 = tpu.matmul %256, %258, %cst_247 {dimension_numbers = #tpu.dot_dimension_numbers<[1], [0], [0], [1], [0, 0, 1, 1], [], []>} : vector<4x32xbf16>, vector<32x32xbf16>, vector<4x32xf32> -> vector<4x32xf32>
    %260 = arith.addf %254, %259 : vector<4x32xf32>
    %c0_248 = arith.constant 0 : index
    %c0_249 = arith.constant 0 : index
    %261 = vector.load %arg26[%c0_248, %c0_249] : memref<1x32xf32, #tpu.memory_space<vmem>>, vector<1x32xf32>
    %262 = vector.broadcast %261 : vector<1x32xf32> to vector<4x32xf32>
    %263 = arith.addf %260, %262 : vector<4x32xf32>
    %264 = arith.truncf %263 : vector<4x32xf32> to vector<4x32xbf16>
    %c0_250 = arith.constant 0 : index
    %c0_251 = arith.constant 0 : index
    %265 = vector.load %arg27[%c0_250, %c0_251] : memref<32x8xbf16, #tpu.memory_space<vmem>>, vector<32x8xbf16>
    %cst_252 = arith.constant dense<0.000000e+00> : vector<4x8xf32>
    %266 = tpu.matmul %264, %265, %cst_252 {dimension_numbers = #tpu.dot_dimension_numbers<[1], [0], [0], [1], [0, 0, 1, 1], [], []>} : vector<4x32xbf16>, vector<32x8xbf16>, vector<4x8xf32> -> vector<4x8xf32>
    %c0_253 = arith.constant 0 : index
    %c0_254 = arith.constant 0 : index
    %267 = vector.load %arg28[%c0_253, %c0_254] : memref<1x8xf32, #tpu.memory_space<vmem>>, vector<1x8xf32>
    %268 = vector.broadcast %267 : vector<1x8xf32> to vector<4x8xf32>
    %269 = arith.addf %266, %268 : vector<4x8xf32>
    %c0_255 = arith.constant 0 : index
    %c0_256 = arith.constant 0 : index
    %270 = vector.load %arg29[%c0_255, %c0_256] : memref<32x8xbf16, #tpu.memory_space<vmem>>, vector<32x8xbf16>
    %cst_257 = arith.constant dense<0.000000e+00> : vector<4x8xf32>
    %271 = tpu.matmul %264, %270, %cst_257 {dimension_numbers = #tpu.dot_dimension_numbers<[1], [0], [0], [1], [0, 0, 1, 1], [], []>} : vector<4x32xbf16>, vector<32x8xbf16>, vector<4x8xf32> -> vector<4x8xf32>
    %c0_258 = arith.constant 0 : index
    %c0_259 = arith.constant 0 : index
    %272 = vector.load %arg30[%c0_258, %c0_259] : memref<1x8xf32, #tpu.memory_space<vmem>>, vector<1x8xf32>
    %273 = vector.broadcast %272 : vector<1x8xf32> to vector<4x8xf32>
    %274 = arith.addf %271, %273 : vector<4x8xf32>
    %cst_260 = arith.constant -6.000000e+00 : f32
    %cst_261 = arith.constant 6.000000e+00 : f32
    %275 = vector.broadcast %cst_260 : f32 to vector<4x8xf32>
    %276 = arith.maximumf %275, %274 : vector<4x8xf32>
    %277 = vector.broadcast %cst_261 : f32 to vector<4x8xf32>
    %278 = arith.minimumf %277, %276 : vector<4x8xf32>
    %c0_262 = arith.constant 0 : index
    %c0_263 = arith.constant 0 : index
    %c0_264 = arith.constant 0 : index
    %279 = vector.load %arg2[%c0_262, %c0_263, %c0_264] : memref<1x4x8xf32, #tpu.memory_space<vmem>>, vector<1x4x8xf32>
    %280 = vector.shape_cast %279 : vector<1x4x8xf32> to vector<4x8xf32>
    %cst_265 = arith.constant 5.000000e-01 : f32
    %281 = vector.broadcast %cst_265 : f32 to vector<4x8xf32>
    %282 = arith.mulf %281, %278 : vector<4x8xf32>
    %283 = math.exp %282 : vector<4x8xf32>
    %284 = arith.mulf %280, %283 : vector<4x8xf32>
    %285 = arith.addf %269, %284 : vector<4x8xf32>
    %c0_266 = arith.constant 0 : index
    %c0_267 = arith.constant 0 : index
    %c0_268 = arith.constant 0 : index
    %286 = vector.load %arg31[%c0_266, %c0_267, %c0_268] : memref<1x4x8xf32, #tpu.memory_space<vmem>>, vector<1x4x8xf32>
    %287 = vector.shape_cast %286 : vector<1x4x8xf32> to vector<4x8xf32>
    %288 = vector.shape_cast %285 : vector<4x8xf32> to vector<1x4x8xf32>
    tpu.vector_store %arg31[%c0_266, %c0_267, %c0_268], %288 {strides = array<i32>} : memref<1x4x8xf32, #tpu.memory_space<vmem>>, vector<1x4x8xf32>,
    %c0_269 = arith.constant 0 : index
    %c0_270 = arith.constant 0 : index
    %c0_271 = arith.constant 0 : index
    %289 = vector.load %arg32[%c0_269, %c0_270, %c0_271] : memref<1x4x8xf32, #tpu.memory_space<vmem>>, vector<1x4x8xf32>
    %290 = vector.shape_cast %289 : vector<1x4x8xf32> to vector<4x8xf32>
    %291 = vector.shape_cast %269 : vector<4x8xf32> to vector<1x4x8xf32>
    tpu.vector_store %arg32[%c0_269, %c0_270, %c0_271], %291 {strides = array<i32>} : memref<1x4x8xf32, #tpu.memory_space<vmem>>, vector<1x4x8xf32>,
    %c0_272 = arith.constant 0 : index
    %c0_273 = arith.constant 0 : index
    %c0_274 = arith.constant 0 : index
    %292 = vector.load %arg33[%c0_272, %c0_273, %c0_274] : memref<1x4x8xf32, #tpu.memory_space<vmem>>, vector<1x4x8xf32>
    %293 = vector.shape_cast %292 : vector<1x4x8xf32> to vector<4x8xf32>
    %294 = vector.shape_cast %278 : vector<4x8xf32> to vector<1x4x8xf32>
    tpu.vector_store %arg33[%c0_272, %c0_273, %c0_274], %294 {strides = array<i32>} : memref<1x4x8xf32, #tpu.memory_space<vmem>>, vector<1x4x8xf32>,
    return
  }
  func.func @transform_0(%arg0: i32) -> (i32, i32, i32) {
    %c0_i32 = arith.constant 0 : i32
    %c0_i32_0 = arith.constant 0 : i32
    %c0_i32_1 = arith.constant 0 : i32
    return %arg0, %c0_i32, %c0_i32_0 : i32, i32, i32
  }
  func.func @transform_1(%arg0: i32) -> (i32, i32, i32) {
    %c0_i32 = arith.constant 0 : i32
    %c0_i32_0 = arith.constant 0 : i32
    %c0_i32_1 = arith.constant 0 : i32
    return %arg0, %c0_i32, %c0_i32_0 : i32, i32, i32
  }
  func.func @transform_2(%arg0: i32) -> (i32, i32, i32) {
    %c0_i32 = arith.constant 0 : i32
    %c0_i32_0 = arith.constant 0 : i32
    %c0_i32_1 = arith.constant 0 : i32
    %c0_i32_2 = arith.constant 0 : i32
    return %c0_i32, %c0_i32_0, %c0_i32_1 : i32, i32, i32
  }
  func.func @transform_3(%arg0: i32) -> (i32, i32) {
    %c0_i32 = arith.constant 0 : i32
    %c0_i32_0 = arith.constant 0 : i32
    %c0_i32_1 = arith.constant 0 : i32
    return %c0_i32, %c0_i32_0 : i32, i32
  }
  func.func @transform_4(%arg0: i32) -> (i32, i32, i32) {
    %c0_i32 = arith.constant 0 : i32
    %c0_i32_0 = arith.constant 0 : i32
    %c0_i32_1 = arith.constant 0 : i32
    %c0_i32_2 = arith.constant 0 : i32
    return %c0_i32, %c0_i32_0, %c0_i32_1 : i32, i32, i32
  }
  func.func @transform_5(%arg0: i32) -> (i32, i32) {
    %c0_i32 = arith.constant 0 : i32
    %c0_i32_0 = arith.constant 0 : i32
    %c0_i32_1 = arith.constant 0 : i32
    return %c0_i32, %c0_i32_0 : i32, i32
  }
  func.func @transform_6(%arg0: i32) -> (i32, i32, i32) {
    %c0_i32 = arith.constant 0 : i32
    %c0_i32_0 = arith.constant 0 : i32
    %c0_i32_1 = arith.constant 0 : i32
    %c0_i32_2 = arith.constant 0 : i32
    return %c0_i32, %c0_i32_0, %c0_i32_1 : i32, i32, i32
  }
  func.func @transform_7(%arg0: i32) -> (i32, i32) {
    %c0_i32 = arith.constant 0 : i32
    %c0_i32_0 = arith.constant 0 : i32
    %c0_i32_1 = arith.constant 0 : i32
    return %c0_i32, %c0_i32_0 : i32, i32
  }
  func.func @transform_8(%arg0: i32) -> (i32, i32, i32) {
    %c0_i32 = arith.constant 0 : i32
    %c0_i32_0 = arith.constant 0 : i32
    %c0_i32_1 = arith.constant 0 : i32
    %c0_i32_2 = arith.constant 0 : i32
    return %c0_i32, %c0_i32_0, %c0_i32_1 : i32, i32, i32
  }
  func.func @transform_9(%arg0: i32) -> (i32, i32) {
    %c0_i32 = arith.constant 0 : i32
    %c0_i32_0 = arith.constant 0 : i32
    %c0_i32_1 = arith.constant 0 : i32
    return %c0_i32, %c0_i32_0 : i32, i32
  }
  func.func @transform_10(%arg0: i32) -> (i32, i32, i32) {
    %c0_i32 = arith.constant 0 : i32
    %c0_i32_0 = arith.constant 0 : i32
    %c0_i32_1 = arith.constant 0 : i32
    %c0_i32_2 = arith.constant 0 : i32
    return %c0_i32, %c0_i32_0, %c0_i32_1 : i32, i32, i32
  }
  func.func @transform_11(%arg0: i32) -> (i32, i32) {
    %c0_i32 = arith.constant 0 : i32
    %c0_i32_0 = arith.constant 0 : i32
    %c0_i32_1 = arith.constant 0 : i32
    return %c0_i32, %c0_i32_0 : i32, i32
  }
  func.func @transform_12(%arg0: i32) -> (i32, i32, i32) {
    %c0_i32 = arith.constant 0 : i32
    %c0_i32_0 = arith.constant 0 : i32
    %c0_i32_1 = arith.constant 0 : i32
    %c0_i32_2 = arith.constant 0 : i32
    return %c0_i32, %c0_i32_0, %c0_i32_1 : i32, i32, i32
  }
  func.func @transform_13(%arg0: i32) -> (i32, i32) {
    %c0_i32 = arith.constant 0 : i32
    %c0_i32_0 = arith.constant 0 : i32
    %c0_i32_1 = arith.constant 0 : i32
    return %c0_i32, %c0_i32_0 : i32, i32
  }
  func.func @transform_14(%arg0: i32) -> (i32, i32, i32) {
    %c0_i32 = arith.constant 0 : i32
    %c0_i32_0 = arith.constant 0 : i32
    %c0_i32_1 = arith.constant 0 : i32
    %c0_i32_2 = arith.constant 0 : i32
    return %c0_i32, %c0_i32_0, %c0_i32_1 : i32, i32, i32
  }
  func.func @transform_15(%arg0: i32) -> (i32, i32) {
    %c0_i32 = arith.constant 0 : i32
    %c0_i32_0 = arith.constant 0 : i32
    %c0_i32_1 = arith.constant 0 : i32
    return %c0_i32, %c0_i32_0 : i32, i32
  }
  func.func @transform_16(%arg0: i32) -> (i32, i32, i32) {
    %c0_i32 = arith.constant 0 : i32
    %c0_i32_0 = arith.constant 0 : i32
    %c0_i32_1 = arith.constant 0 : i32
    %c0_i32_2 = arith.constant 0 : i32
    return %c0_i32, %c0_i32_0, %c0_i32_1 : i32, i32, i32
  }
  func.func @transform_17(%arg0: i32) -> (i32, i32) {
    %c0_i32 = arith.constant 0 : i32
    %c0_i32_0 = arith.constant 0 : i32
    %c0_i32_1 = arith.constant 0 : i32
    return %c0_i32, %c0_i32_0 : i32, i32
  }
  func.func @transform_18(%arg0: i32) -> (i32, i32, i32) {
    %c0_i32 = arith.constant 0 : i32
    %c0_i32_0 = arith.constant 0 : i32
    %c0_i32_1 = arith.constant 0 : i32
    %c0_i32_2 = arith.constant 0 : i32
    return %c0_i32, %c0_i32_0, %c0_i32_1 : i32, i32, i32
  }
  func.func @transform_19(%arg0: i32) -> (i32, i32) {
    %c0_i32 = arith.constant 0 : i32
    %c0_i32_0 = arith.constant 0 : i32
    %c0_i32_1 = arith.constant 0 : i32
    return %c0_i32, %c0_i32_0 : i32, i32
  }
  func.func @transform_20(%arg0: i32) -> (i32, i32, i32) {
    %c0_i32 = arith.constant 0 : i32
    %c0_i32_0 = arith.constant 0 : i32
    %c0_i32_1 = arith.constant 0 : i32
    %c0_i32_2 = arith.constant 0 : i32
    return %c0_i32, %c0_i32_0, %c0_i32_1 : i32, i32, i32
  }
  func.func @transform_21(%arg0: i32) -> (i32, i32) {
    %c0_i32 = arith.constant 0 : i32
    %c0_i32_0 = arith.constant 0 : i32
    %c0_i32_1 = arith.constant 0 : i32
    return %c0_i32, %c0_i32_0 : i32, i32
  }
  func.func @transform_22(%arg0: i32) -> (i32, i32, i32) {
    %c0_i32 = arith.constant 0 : i32
    %c0_i32_0 = arith.constant 0 : i32
    %c0_i32_1 = arith.constant 0 : i32
    %c0_i32_2 = arith.constant 0 : i32
    return %c0_i32, %c0_i32_0, %c0_i32_1 : i32, i32, i32
  }
  func.func @transform_23(%arg0: i32) -> (i32, i32) {
    %c0_i32 = arith.constant 0 : i32
    %c0_i32_0 = arith.constant 0 : i32
    %c0_i32_1 = arith.constant 0 : i32
    return %c0_i32, %c0_i32_0 : i32, i32
  }
  func.func @transform_24(%arg0: i32) -> (i32, i32, i32) {
    %c0_i32 = arith.constant 0 : i32
    %c0_i32_0 = arith.constant 0 : i32
    %c0_i32_1 = arith.constant 0 : i32
    %c0_i32_2 = arith.constant 0 : i32
    return %c0_i32, %c0_i32_0, %c0_i32_1 : i32, i32, i32
  }
  func.func @transform_25(%arg0: i32) -> (i32, i32) {
    %c0_i32 = arith.constant 0 : i32
    %c0_i32_0 = arith.constant 0 : i32
    %c0_i32_1 = arith.constant 0 : i32
    return %c0_i32, %c0_i32_0 : i32, i32
  }
  func.func @transform_26(%arg0: i32) -> (i32, i32) {
    %c0_i32 = arith.constant 0 : i32
    %c0_i32_0 = arith.constant 0 : i32
    %c0_i32_1 = arith.constant 0 : i32
    return %c0_i32, %c0_i32_0 : i32, i32
  }
  func.func @transform_27(%arg0: i32) -> (i32, i32) {
    %c0_i32 = arith.constant 0 : i32
    %c0_i32_0 = arith.constant 0 : i32
    %c0_i32_1 = arith.constant 0 : i32
    return %c0_i32, %c0_i32_0 : i32, i32
  }
  func.func @transform_28(%arg0: i32) -> (i32, i32) {
    %c0_i32 = arith.constant 0 : i32
    %c0_i32_0 = arith.constant 0 : i32
    %c0_i32_1 = arith.constant 0 : i32
    return %c0_i32, %c0_i32_0 : i32, i32
  }
  func.func @transform_29(%arg0: i32) -> (i32, i32) {
    %c0_i32 = arith.constant 0 : i32
    %c0_i32_0 = arith.constant 0 : i32
    %c0_i32_1 = arith.constant 0 : i32
    return %c0_i32, %c0_i32_0 : i32, i32
  }
  func.func @transform_30(%arg0: i32) -> (i32, i32, i32) {
    %c0_i32 = arith.constant 0 : i32
    %c0_i32_0 = arith.constant 0 : i32
    %c0_i32_1 = arith.constant 0 : i32
    return %arg0, %c0_i32, %c0_i32_0 : i32, i32, i32
  }
  func.func @transform_31(%arg0: i32) -> (i32, i32, i32) {
    %c0_i32 = arith.constant 0 : i32
    %c0_i32_0 = arith.constant 0 : i32
    %c0_i32_1 = arith.constant 0 : i32
    return %arg0, %c0_i32, %c0_i32_0 : i32, i32, i32
  }
  func.func @transform_32(%arg0: i32) -> (i32, i32, i32) {
    %c0_i32 = arith.constant 0 : i32
    %c0_i32_0 = arith.constant 0 : i32
    %c0_i32_1 = arith.constant 0 : i32
    return %arg0, %c0_i32, %c0_i32_0 : i32, i32, i32
  }
}

</mosaic_0001>

<llo_original>
// kernel: causal_encoder_forward.1
$region0: #{causal_encoder_forward.1}
  #allocation0 [shape = 'u32[]', space=smem, size = 0x4, offset = 0x4, fixed_abs, tag = 'smem constant byte address 0x4 - core index']
  #allocation1 [shape = 'u32[144,128]{1,0:T(1,128)}', space=vmem, size = 0x12000, scoped, tag = 'internal scratch']
  #allocation2 [shape = 'f32[18,16]{1,0:T(8,128)}', space=vmem, size = 0x3000, scoped, tag = 'scratch operand']
  #allocation3 [shape = 'f32[18,32]{1,0:T(8,128)}', space=vmem, size = 0x3000, scoped, tag = 'scratch operand']
  %s0 = inlined_call_operand.smem [shape: u32[33], index: -1, kind: input, shape index: {}]
  %s1 = sld [smem:[%s0]]
  %s2 = scalar_lea.smem %s0, 1
  %s3 = sld [smem:[%s2]]
  %s4 = scalar_lea.smem %s0, 2
  %s5 = sld [smem:[%s4]]
  %s6 = scalar_lea.smem %s0, 3
  %s7 = sld [smem:[%s6]]
  %s8 = scalar_lea.smem %s0, 4
  %s9 = sld [smem:[%s8]]
  %s10 = scalar_lea.smem %s0, 5
  %s11 = sld [smem:[%s10]]
  %s12 = scalar_lea.smem %s0, 6
  %s13 = sld [smem:[%s12]]
  %s14 = scalar_lea.smem %s0, 7
  %s15 = sld [smem:[%s14]]
  %s16 = scalar_lea.smem %s0, 8
  %s17 = sld [smem:[%s16]]
  %s18 = scalar_lea.smem %s0, 9
  %s19 = sld [smem:[%s18]]
  %s20 = scalar_lea.smem %s0, 10
  %s21 = sld [smem:[%s20]]
  %s22 = scalar_lea.smem %s0, 11
  %s23 = sld [smem:[%s22]]
  %s24 = scalar_lea.smem %s0, 12
  %s25 = sld [smem:[%s24]]
  %s26 = scalar_lea.smem %s0, 13
  %s27 = sld [smem:[%s26]]
  %s28 = scalar_lea.smem %s0, 14
  %s29 = sld [smem:[%s28]]
  %s30 = scalar_lea.smem %s0, 15
  %s31 = sld [smem:[%s30]]
  %s32 = scalar_lea.smem %s0, 16
  %s33 = sld [smem:[%s32]]
  %s34 = scalar_lea.smem %s0, 17
  %s35 = sld [smem:[%s34]]
  %s36 = scalar_lea.smem %s0, 18
  %s37 = sld [smem:[%s36]]
  %s38 = scalar_lea.smem %s0, 19
  %s39 = sld [smem:[%s38]]
  %s40 = scalar_lea.smem %s0, 20
  %s41 = sld [smem:[%s40]]
  %s42 = scalar_lea.smem %s0, 21
  %s43 = sld [smem:[%s42]]
  %s44 = scalar_lea.smem %s0, 22
  %s45 = sld [smem:[%s44]]
  %s46 = scalar_lea.smem %s0, 23
  %s47 = sld [smem:[%s46]]
  %s48 = scalar_lea.smem %s0, 24
  %s49 = sld [smem:[%s48]]
  %s50 = scalar_lea.smem %s0, 25
  %s51 = sld [smem:[%s50]]
  %s52 = scalar_lea.smem %s0, 26
  %s53 = sld [smem:[%s52]]
  %s54 = scalar_lea.smem %s0, 27
  %s55 = sld [smem:[%s54]]
  %s56 = scalar_lea.smem %s0, 28
  %s57 = sld [smem:[%s56]]
  %s58 = scalar_lea.smem %s0, 29
  %s59 = sld [smem:[%s58]]
  %s60 = scalar_lea.smem %s0, 30
  %s61 = sld [smem:[%s60]]
  %s62 = scalar_lea.smem %s0, 31
  %s63 = sld [smem:[%s62]]
  %s64 = scalar_lea.smem %s0, 32
  %s65 = sld [smem:[%s64]]
  %66 = xla_tuple %s61, %s63, %s65
  %s67 = sld [smem:[#allocation0]]
  $region169: #{causal_encoder_forward.1} parent=0
    _
  %s69 = ssub.s32 1, %s67
  %s70 = scalar_select 0, %s69, %s67
  $region1: #{causal_encoder_forward.1} parent=0
    #allocation4 [shape = 'u8[4096]{0}', space=vmem, size = 0x1000, scoped, tag = 'output window, operand 0']
    #allocation5 [shape = 's32[2]{0}', space=sflag, size = 0x8, scoped, tag = 'scoped memory for causal_encoder_forward.1']
    #allocation6 [shape = 'u8[4096]{0}', space=vmem, size = 0x1000, scoped, tag = 'output window, operand 1']
    #allocation7 [shape = 's32[2]{0}', space=sflag, size = 0x8, scoped, tag = 'scoped memory for causal_encoder_forward.1']
    #allocation8 [shape = 'u8[4096]{0}', space=vmem, size = 0x1000, scoped, tag = 'output window, operand 2']
    %71 = vsyncpa [#allocation5], 0
    %s72 = scalar_lea.sflag [#allocation5], 1
    %73 = vsyncpa %s72, 0
    %74 = vsyncpa [#allocation7], 0
    %s75 = scalar_lea.sflag [#allocation7], 1
    %76 = vsyncpa %s75, 0
    loop: start=0, step=1, limit=4
    $region2: #{causal_encoder_forward.1} parent=1 // loop_pre_header
      _
    $region3: #{causal_encoder_forward.1} parent=1 // loop_header
      %s78 = sphi 0, %s82
      %p79 = scmp.ge.s32.totalorder %s78, 4
      %s88 = sphi 0, %s90
      %s91 = sphi 0, %s88
      %s92 = sphi 0, %s91
      %s108 = sphi 0, %s92
      %s114 = sphi 0, %s116
      %s117 = sphi 0, %s114
      %s118 = sphi 0, %s117
      %s134 = sphi 0, %s118
      %s138 = sphi 0, %s138
      %s140 = sphi 0, %s138
      %s141 = sphi 0, %s140
      %s155 = sphi 0, %s141
      %s159 = sphi 0, %s159
      %s161 = sphi 0, %s159
      %s162 = sphi 0, %s161
      %s176 = sphi 0, %s162
      %s180 = sphi 0, %s180
      %s182 = sphi 0, %s180
      %s183 = sphi 0, %s182
      %s197 = sphi 0, %s183
      %s201 = sphi 0, %s201
      %s203 = sphi 0, %s201
      %s204 = sphi 0, %s203
      %s218 = sphi 0, %s204
      %s222 = sphi 0, %s222
      %s224 = sphi 0, %s222
      %s225 = sphi 0, %s224
      %s239 = sphi 0, %s225
      %s243 = sphi 0, %s243
      %s245 = sphi 0, %s243
      %s246 = sphi 0, %s245
      %s260 = sphi 0, %s246
      %s264 = sphi 0, %s264
      %s266 = sphi 0, %s264
      %s267 = sphi 0, %s266
      %s281 = sphi 0, %s267
      %s285 = sphi 0, %s285
      %s287 = sphi 0, %s285
      %s288 = sphi 0, %s287
      %s302 = sphi 0, %s288
      %s306 = sphi 0, %s306
      %s308 = sphi 0, %s306
      %s309 = sphi 0, %s308
      %s323 = sphi 0, %s309
      %s327 = sphi 0, %s327
      %s329 = sphi 0, %s327
      %s330 = sphi 0, %s329
      %s344 = sphi 0, %s330
      %s348 = sphi 0, %s348
      %s350 = sphi 0, %s348
      %s351 = sphi 0, %s350
      %s365 = sphi 0, %s351
      %s369 = sphi 0, %s369
      %s371 = sphi 0, %s369
      %s372 = sphi 0, %s371
      %s386 = sphi 0, %s372
      %s390 = sphi 0, %s390
      %s392 = sphi 0, %s390
      %s393 = sphi 0, %s392
      %s407 = sphi 0, %s393
      %s411 = sphi 0, %s411
      %s413 = sphi 0, %s411
      %s414 = sphi 0, %s413
      %s428 = sphi 0, %s414
      %s432 = sphi 0, %s432
      %s434 = sphi 0, %s432
      %s435 = sphi 0, %s434
      %s449 = sphi 0, %s435
      %s453 = sphi 0, %s453
      %s455 = sphi 0, %s453
      %s456 = sphi 0, %s455
      %s470 = sphi 0, %s456
      %s474 = sphi 0, %s474
      %s476 = sphi 0, %s474
      %s477 = sphi 0, %s476
      %s491 = sphi 0, %s477
      %s495 = sphi 0, %s495
      %s497 = sphi 0, %s495
      %s498 = sphi 0, %s497
      %s512 = sphi 0, %s498
      %s516 = sphi 0, %s516
      %s518 = sphi 0, %s516
      %s519 = sphi 0, %s518
      %s533 = sphi 0, %s519
      %s537 = sphi 0, %s537
      %s539 = sphi 0, %s537
      %s540 = sphi 0, %s539
      %s554 = sphi 0, %s540
      %s558 = sphi 0, %s558
      %s560 = sphi 0, %s558
      %s561 = sphi 0, %s560
      %s575 = sphi 0, %s561
      %s579 = sphi 0, %s579
      %s581 = sphi 0, %s579
      %s582 = sphi 0, %s581
      %s596 = sphi 0, %s582
      %s600 = sphi 0, %s600
      %s602 = sphi 0, %s600
      %s603 = sphi 0, %s602
      %s617 = sphi 0, %s603
      %s621 = sphi 0, %s621
      %s623 = sphi 0, %s621
      %s624 = sphi 0, %s623
      %s638 = sphi 0, %s624
      %s642 = sphi 0, %s642
      %s644 = sphi 0, %s642
      %s645 = sphi 0, %s644
      %s659 = sphi 0, %s645
      %s663 = sphi 0, %s663
      %s665 = sphi 0, %s663
      %s666 = sphi 0, %s665
      %s680 = sphi 0, %s666
      %s684 = sphi 0, %s684
      %s686 = sphi 0, %s684
      %s687 = sphi 0, %s686
      %s701 = sphi 0, %s687
      %s705 = sphi 0, %s705
      %s707 = sphi 0, %s705
      %s708 = sphi 0, %s707
      %s722 = sphi 0, %s708
      %s728 = sphi 0, %s730
      %s731 = sphi 0, %s728
      %s732 = sphi 0, %s731
      %s748 = sphi 0, %s732
      %s754 = sphi 0, %s756
      %s757 = sphi 0, %s754
      %s758 = sphi 0, %s757
      %s774 = sphi 0, %s758
      %s780 = sphi 0, %s782
      %s783 = sphi 0, %s780
      %s784 = sphi 0, %s783
      %s800 = sphi 0, %s784
    $region4: #{causal_encoder_forward.1} parent=1 // loop_header_branch
      %81 = sbr.rel (%p79) target = $region8
    $region5: #{causal_encoder_forward.1} parent=1 // loop_body
      %s83 = ssub.s32 %s78, 1
      %s84 = ssub.s32 %s78, 2
      %s85 = sadd.s32 %s78, 1
      %s86 = ssub.s32 %s78, %s85
      %p87 = scmp.eq.s32.totalorder %s86, 0
      %s89 = sadd.s32 %s88, 1
      %s90 = scalar_select %p87, %s88, %s89
      %p93 = pneg %p87
      %p94 = scmp.eq.s32.totalorder %s78, 1
      %p95 = por %p93, %p94
      %p96 = scmp.ne.s32.totalorder %s88, %s91
      %p97 = scmp.eq.s32.totalorder %s78, 0
      %p98 = por %p96, %p97
      %p99 = scmp.ne.s32.totalorder %s88, %s91
      %p100 = scmp.eq.s32.totalorder %s83, 1
      %p101 = por %p99, %p100
      %p102 = scmp.ne.s32.totalorder %s91, %s92
      %p103 = scmp.eq.s32.totalorder %s83, 0
      %p104 = por %p102, %p103
      %p105 = scmp.ne.s32.totalorder %s91, %s92
      %p106 = scmp.eq.s32.totalorder %s84, 1
      %p107 = por %p105, %p106
      %p109 = scmp.ne.s32.totalorder %s92, %s108
      %p110 = scmp.eq.s32.totalorder %s84, 0
      %p111 = por %p109, %p110
      %s112 = ssub.s32 %s78, %s85
      %p113 = scmp.eq.s32.totalorder %s112, 0
      %s115 = sadd.s32 %s114, 1
      %s116 = scalar_select %p113, %s114, %s115
      %p119 = pneg %p113
      %p120 = scmp.eq.s32.totalorder %s78, 1
      %p121 = por %p119, %p120
      %p122 = scmp.ne.s32.totalorder %s114, %s117
      %p123 = scmp.eq.s32.totalorder %s78, 0
      %p124 = por %p122, %p123
      %p125 = scmp.ne.s32.totalorder %s114, %s117
      %p126 = scmp.eq.s32.totalorder %s83, 1
      %p127 = por %p125, %p126
      %p128 = scmp.ne.s32.totalorder %s117, %s118
      %p129 = scmp.eq.s32.totalorder %s83, 0
      %p130 = por %p128, %p129
      %p131 = scmp.ne.s32.totalorder %s117, %s118
      %p132 = scmp.eq.s32.totalorder %s84, 1
      %p133 = por %p131, %p132
      %p135 = scmp.ne.s32.totalorder %s118, %s134
      %p136 = scmp.eq.s32.totalorder %s84, 0
      %p137 = por %p135, %p136
      %s139 = sadd.s32 %s138, 1
      %p142 = scmp.eq.s32.totalorder %s78, 1
      %p143 = scmp.ne.s32.totalorder %s138, %s140
      %p144 = scmp.eq.s32.totalorder %s78, 0
      %p145 = por %p143, %p144
      %p146 = scmp.ne.s32.totalorder %s138, %s140
      %p147 = scmp.eq.s32.totalorder %s83, 1
      %p148 = por %p146, %p147
      %p149 = scmp.ne.s32.totalorder %s140, %s141
      %p150 = scmp.eq.s32.totalorder %s83, 0
      %p151 = por %p149, %p150
      %p152 = scmp.ne.s32.totalorder %s140, %s141
      %p153 = scmp.eq.s32.totalorder %s84, 1
      %p154 = por %p152, %p153
      %p156 = scmp.ne.s32.totalorder %s141, %s155
      %p157 = scmp.eq.s32.totalorder %s84, 0
      %p158 = por %p156, %p157
      %s160 = sadd.s32 %s159, 1
      %p163 = scmp.eq.s32.totalorder %s78, 1
      %p164 = scmp.ne.s32.totalorder %s159, %s161
      %p165 = scmp.eq.s32.totalorder %s78, 0
      %p166 = por %p164, %p165
      %p167 = scmp.ne.s32.totalorder %s159, %s161
      %p168 = scmp.eq.s32.totalorder %s83, 1
      %p169 = por %p167, %p168
      %p170 = scmp.ne.s32.totalorder %s161, %s162
      %p171 = scmp.eq.s32.totalorder %s83, 0
      %p172 = por %p170, %p171
      %p173 = scmp.ne.s32.totalorder %s161, %s162
      %p174 = scmp.eq.s32.totalorder %s84, 1
      %p175 = por %p173, %p174
      %p177 = scmp.ne.s32.totalorder %s162, %s176
      %p178 = scmp.eq.s32.totalorder %s84, 0
      %p179 = por %p177, %p178
      %s181 = sadd.s32 %s180, 1
      %p184 = scmp.eq.s32.totalorder %s78, 1
      %p185 = scmp.ne.s32.totalorder %s180, %s182
      %p186 = scmp.eq.s32.totalorder %s78, 0
      %p187 = por %p185, %p186
      %p188 = scmp.ne.s32.totalorder %s180, %s182
      %p189 = scmp.eq.s32.totalorder %s83, 1
      %p190 = por %p188, %p189
      %p191 = scmp.ne.s32.totalorder %s182, %s183
      %p192 = scmp.eq.s32.totalorder %s83, 0
      %p193 = por %p191, %p192
      %p194 = scmp.ne.s32.totalorder %s182, %s183
      %p195 = scmp.eq.s32.totalorder %s84, 1
      %p196 = por %p194, %p195
      %p198 = scmp.ne.s32.totalorder %s183, %s197
      %p199 = scmp.eq.s32.totalorder %s84, 0
      %p200 = por %p198, %p199
      %s202 = sadd.s32 %s201, 1
      %p205 = scmp.eq.s32.totalorder %s78, 1
      %p206 = scmp.ne.s32.totalorder %s201, %s203
      %p207 = scmp.eq.s32.totalorder %s78, 0
      %p208 = por %p206, %p207
      %p209 = scmp.ne.s32.totalorder %s201, %s203
      %p210 = scmp.eq.s32.totalorder %s83, 1
      %p211 = por %p209, %p210
      %p212 = scmp.ne.s32.totalorder %s203, %s204
      %p213 = scmp.eq.s32.totalorder %s83, 0
      %p214 = por %p212, %p213
      %p215 = scmp.ne.s32.totalorder %s203, %s204
      %p216 = scmp.eq.s32.totalorder %s84, 1
      %p217 = por %p215, %p216
      %p219 = scmp.ne.s32.totalorder %s204, %s218
      %p220 = scmp.eq.s32.totalorder %s84, 0
      %p221 = por %p219, %p220
      %s223 = sadd.s32 %s222, 1
      %p226 = scmp.eq.s32.totalorder %s78, 1
      %p227 = scmp.ne.s32.totalorder %s222, %s224
      %p228 = scmp.eq.s32.totalorder %s78, 0
      %p229 = por %p227, %p228
      %p230 = scmp.ne.s32.totalorder %s222, %s224
      %p231 = scmp.eq.s32.totalorder %s83, 1
      %p232 = por %p230, %p231
      %p233 = scmp.ne.s32.totalorder %s224, %s225
      %p234 = scmp.eq.s32.totalorder %s83, 0
      %p235 = por %p233, %p234
      %p236 = scmp.ne.s32.totalorder %s224, %s225
      %p237 = scmp.eq.s32.totalorder %s84, 1
      %p238 = por %p236, %p237
      %p240 = scmp.ne.s32.totalorder %s225, %s239
      %p241 = scmp.eq.s32.totalorder %s84, 0
      %p242 = por %p240, %p241
      %s244 = sadd.s32 %s243, 1
      %p247 = scmp.eq.s32.totalorder %s78, 1
      %p248 = scmp.ne.s32.totalorder %s243, %s245
      %p249 = scmp.eq.s32.totalorder %s78, 0
      %p250 = por %p248, %p249
      %p251 = scmp.ne.s32.totalorder %s243, %s245
      %p252 = scmp.eq.s32.totalorder %s83, 1
      %p253 = por %p251, %p252
      %p254 = scmp.ne.s32.totalorder %s245, %s246
      %p255 = scmp.eq.s32.totalorder %s83, 0
      %p256 = por %p254, %p255
      %p257 = scmp.ne.s32.totalorder %s245, %s246
      %p258 = scmp.eq.s32.totalorder %s84, 1
      %p259 = por %p257, %p258
      %p261 = scmp.ne.s32.totalorder %s246, %s260
      %p262 = scmp.eq.s32.totalorder %s84, 0
      %p263 = por %p261, %p262
      %s265 = sadd.s32 %s264, 1
      %p268 = scmp.eq.s32.totalorder %s78, 1
      %p269 = scmp.ne.s32.totalorder %s264, %s266
      %p270 = scmp.eq.s32.totalorder %s78, 0
      %p271 = por %p269, %p270
      %p272 = scmp.ne.s32.totalorder %s264, %s266
      %p273 = scmp.eq.s32.totalorder %s83, 1
      %p274 = por %p272, %p273
      %p275 = scmp.ne.s32.totalorder %s266, %s267
      %p276 = scmp.eq.s32.totalorder %s83, 0
      %p277 = por %p275, %p276
      %p278 = scmp.ne.s32.totalorder %s266, %s267
      %p279 = scmp.eq.s32.totalorder %s84, 1
      %p280 = por %p278, %p279
      %p282 = scmp.ne.s32.totalorder %s267, %s281
      %p283 = scmp.eq.s32.totalorder %s84, 0
      %p284 = por %p282, %p283
      %s286 = sadd.s32 %s285, 1
      %p289 = scmp.eq.s32.totalorder %s78, 1
      %p290 = scmp.ne.s32.totalorder %s285, %s287
      %p291 = scmp.eq.s32.totalorder %s78, 0
      %p292 = por %p290, %p291
      %p293 = scmp.ne.s32.totalorder %s285, %s287
      %p294 = scmp.eq.s32.totalorder %s83, 1
      %p295 = por %p293, %p294
      %p296 = scmp.ne.s32.totalorder %s287, %s288
      %p297 = scmp.eq.s32.totalorder %s83, 0
      %p298 = por %p296, %p297
      %p299 = scmp.ne.s32.totalorder %s287, %s288
      %p300 = scmp.eq.s32.totalorder %s84, 1
      %p301 = por %p299, %p300
      %p303 = scmp.ne.s32.totalorder %s288, %s302
      %p304 = scmp.eq.s32.totalorder %s84, 0
      %p305 = por %p303, %p304
      %s307 = sadd.s32 %s306, 1
      %p310 = scmp.eq.s32.totalorder %s78, 1
      %p311 = scmp.ne.s32.totalorder %s306, %s308
      %p312 = scmp.eq.s32.totalorder %s78, 0
      %p313 = por %p311, %p312
      %p314 = scmp.ne.s32.totalorder %s306, %s308
      %p315 = scmp.eq.s32.totalorder %s83, 1
      %p316 = por %p314, %p315
      %p317 = scmp.ne.s32.totalorder %s308, %s309
      %p318 = scmp.eq.s32.totalorder %s83, 0
      %p319 = por %p317, %p318
      %p320 = scmp.ne.s32.totalorder %s308, %s309
      %p321 = scmp.eq.s32.totalorder %s84, 1
      %p322 = por %p320, %p321
      %p324 = scmp.ne.s32.totalorder %s309, %s323
      %p325 = scmp.eq.s32.totalorder %s84, 0
      %p326 = por %p324, %p325
      %s328 = sadd.s32 %s327, 1
      %p331 = scmp.eq.s32.totalorder %s78, 1
      %p332 = scmp.ne.s32.totalorder %s327, %s329
      %p333 = scmp.eq.s32.totalorder %s78, 0
      %p334 = por %p332, %p333
      %p335 = scmp.ne.s32.totalorder %s327, %s329
      %p336 = scmp.eq.s32.totalorder %s83, 1
      %p337 = por %p335, %p336
      %p338 = scmp.ne.s32.totalorder %s329, %s330
      %p339 = scmp.eq.s32.totalorder %s83, 0
      %p340 = por %p338, %p339
      %p341 = scmp.ne.s32.totalorder %s329, %s330
      %p342 = scmp.eq.s32.totalorder %s84, 1
      %p343 = por %p341, %p342
      %p345 = scmp.ne.s32.totalorder %s330, %s344
      %p346 = scmp.eq.s32.totalorder %s84, 0
      %p347 = por %p345, %p346
      %s349 = sadd.s32 %s348, 1
      %p352 = scmp.eq.s32.totalorder %s78, 1
      %p353 = scmp.ne.s32.totalorder %s348, %s350
      %p354 = scmp.eq.s32.totalorder %s78, 0
      %p355 = por %p353, %p354
      %p356 = scmp.ne.s32.totalorder %s348, %s350
      %p357 = scmp.eq.s32.totalorder %s83, 1
      %p358 = por %p356, %p357
      %p359 = scmp.ne.s32.totalorder %s350, %s351
      %p360 = scmp.eq.s32.totalorder %s83, 0
      %p361 = por %p359, %p360
      %p362 = scmp.ne.s32.totalorder %s350, %s351
      %p363 = scmp.eq.s32.totalorder %s84, 1
      %p364 = por %p362, %p363
      %p366 = scmp.ne.s32.totalorder %s351, %s365
      %p367 = scmp.eq.s32.totalorder %s84, 0
      %p368 = por %p366, %p367
      %s370 = sadd.s32 %s369, 1
      %p373 = scmp.eq.s32.totalorder %s78, 1
      %p374 = scmp.ne.s32.totalorder %s369, %s371
      %p375 = scmp.eq.s32.totalorder %s78, 0
      %p376 = por %p374, %p375
      %p377 = scmp.ne.s32.totalorder %s369, %s371
      %p378 = scmp.eq.s32.totalorder %s83, 1
      %p379 = por %p377, %p378
      %p380 = scmp.ne.s32.totalorder %s371, %s372
      %p381 = scmp.eq.s32.totalorder %s83, 0
      %p382 = por %p380, %p381
      %p383 = scmp.ne.s32.totalorder %s371, %s372
      %p384 = scmp.eq.s32.totalorder %s84, 1
      %p385 = por %p383, %p384
      %p387 = scmp.ne.s32.totalorder %s372, %s386
      %p388 = scmp.eq.s32.totalorder %s84, 0
      %p389 = por %p387, %p388
      %s391 = sadd.s32 %s390, 1
      %p394 = scmp.eq.s32.totalorder %s78, 1
      %p395 = scmp.ne.s32.totalorder %s390, %s392
      %p396 = scmp.eq.s32.totalorder %s78, 0
      %p397 = por %p395, %p396
      %p398 = scmp.ne.s32.totalorder %s390, %s392
      %p399 = scmp.eq.s32.totalorder %s83, 1
      %p400 = por %p398, %p399
      %p401 = scmp.ne.s32.totalorder %s392, %s393
      %p402 = scmp.eq.s32.totalorder %s83, 0
      %p403 = por %p401, %p402
      %p404 = scmp.ne.s32.totalorder %s392, %s393
      %p405 = scmp.eq.s32.totalorder %s84, 1
      %p406 = por %p404, %p405
      %p408 = scmp.ne.s32.totalorder %s393, %s407
      %p409 = scmp.eq.s32.totalorder %s84, 0
      %p410 = por %p408, %p409
      %s412 = sadd.s32 %s411, 1
      %p415 = scmp.eq.s32.totalorder %s78, 1
      %p416 = scmp.ne.s32.totalorder %s411, %s413
      %p417 = scmp.eq.s32.totalorder %s78, 0
      %p418 = por %p416, %p417
      %p419 = scmp.ne.s32.totalorder %s411, %s413
      %p420 = scmp.eq.s32.totalorder %s83, 1
      %p421 = por %p419, %p420
      %p422 = scmp.ne.s32.totalorder %s413, %s414
      %p423 = scmp.eq.s32.totalorder %s83, 0
      %p424 = por %p422, %p423
      %p425 = scmp.ne.s32.totalorder %s413, %s414
      %p426 = scmp.eq.s32.totalorder %s84, 1
      %p427 = por %p425, %p426
      %p429 = scmp.ne.s32.totalorder %s414, %s428
      %p430 = scmp.eq.s32.totalorder %s84, 0
      %p431 = por %p429, %p430
      %s433 = sadd.s32 %s432, 1
      %p436 = scmp.eq.s32.totalorder %s78, 1
      %p437 = scmp.ne.s32.totalorder %s432, %s434
      %p438 = scmp.eq.s32.totalorder %s78, 0
      %p439 = por %p437, %p438
      %p440 = scmp.ne.s32.totalorder %s432, %s434
      %p441 = scmp.eq.s32.totalorder %s83, 1
      %p442 = por %p440, %p441
      %p443 = scmp.ne.s32.totalorder %s434, %s435
      %p444 = scmp.eq.s32.totalorder %s83, 0
      %p445 = por %p443, %p444
      %p446 = scmp.ne.s32.totalorder %s434, %s435
      %p447 = scmp.eq.s32.totalorder %s84, 1
      %p448 = por %p446, %p447
      %p450 = scmp.ne.s32.totalorder %s435, %s449
      %p451 = scmp.eq.s32.totalorder %s84, 0
      %p452 = por %p450, %p451
      %s454 = sadd.s32 %s453, 1
      %p457 = scmp.eq.s32.totalorder %s78, 1
      %p458 = scmp.ne.s32.totalorder %s453, %s455
      %p459 = scmp.eq.s32.totalorder %s78, 0
      %p460 = por %p458, %p459
      %p461 = scmp.ne.s32.totalorder %s453, %s455
      %p462 = scmp.eq.s32.totalorder %s83, 1
      %p463 = por %p461, %p462
      %p464 = scmp.ne.s32.totalorder %s455, %s456
      %p465 = scmp.eq.s32.totalorder %s83, 0
      %p466 = por %p464, %p465
      %p467 = scmp.ne.s32.totalorder %s455, %s456
      %p468 = scmp.eq.s32.totalorder %s84, 1
      %p469 = por %p467, %p468
      %p471 = scmp.ne.s32.totalorder %s456, %s470
      %p472 = scmp.eq.s32.totalorder %s84, 0
      %p473 = por %p471, %p472
      %s475 = sadd.s32 %s474, 1
      %p478 = scmp.eq.s32.totalorder %s78, 1
      %p479 = scmp.ne.s32.totalorder %s474, %s476
      %p480 = scmp.eq.s32.totalorder %s78, 0
      %p481 = por %p479, %p480
      %p482 = scmp.ne.s32.totalorder %s474, %s476
      %p483 = scmp.eq.s32.totalorder %s83, 1
      %p484 = por %p482, %p483
      %p485 = scmp.ne.s32.totalorder %s476, %s477
      %p486 = scmp.eq.s32.totalorder %s83, 0
      %p487 = por %p485, %p486
      %p488 = scmp.ne.s32.totalorder %s476, %s477
      %p489 = scmp.eq.s32.totalorder %s84, 1
      %p490 = por %p488, %p489
      %p492 = scmp.ne.s32.totalorder %s477, %s491
      %p493 = scmp.eq.s32.totalorder %s84, 0
      %p494 = por %p492, %p493
      %s496 = sadd.s32 %s495, 1
      %p499 = scmp.eq.s32.totalorder %s78, 1
      %p500 = scmp.ne.s32.totalorder %s495, %s497
      %p501 = scmp.eq.s32.totalorder %s78, 0
      %p502 = por %p500, %p501
      %p503 = scmp.ne.s32.totalorder %s495, %s497
      %p504 = scmp.eq.s32.totalorder %s83, 1
      %p505 = por %p503, %p504
      %p506 = scmp.ne.s32.totalorder %s497, %s498
      %p507 = scmp.eq.s32.totalorder %s83, 0
      %p508 = por %p506, %p507
      %p509 = scmp.ne.s32.totalorder %s497, %s498
      %p510 = scmp.eq.s32.totalorder %s84, 1
      %p511 = por %p509, %p510
      %p513 = scmp.ne.s32.totalorder %s498, %s512
      %p514 = scmp.eq.s32.totalorder %s84, 0
      %p515 = por %p513, %p514
      %s517 = sadd.s32 %s516, 1
      %p520 = scmp.eq.s32.totalorder %s78, 1
      %p521 = scmp.ne.s32.totalorder %s516, %s518
      %p522 = scmp.eq.s32.totalorder %s78, 0
      %p523 = por %p521, %p522
      %p524 = scmp.ne.s32.totalorder %s516, %s518
      %p525 = scmp.eq.s32.totalorder %s83, 1
      %p526 = por %p524, %p525
      %p527 = scmp.ne.s32.totalorder %s518, %s519
      %p528 = scmp.eq.s32.totalorder %s83, 0
      %p529 = por %p527, %p528
      %p530 = scmp.ne.s32.totalorder %s518, %s519
      %p531 = scmp.eq.s32.totalorder %s84, 1
      %p532 = por %p530, %p531
      %p534 = scmp.ne.s32.totalorder %s519, %s533
      %p535 = scmp.eq.s32.totalorder %s84, 0
      %p536 = por %p534, %p535
      %s538 = sadd.s32 %s537, 1
      %p541 = scmp.eq.s32.totalorder %s78, 1
      %p542 = scmp.ne.s32.totalorder %s537, %s539
      %p543 = scmp.eq.s32.totalorder %s78, 0
      %p544 = por %p542, %p543
      %p545 = scmp.ne.s32.totalorder %s537, %s539
      %p546 = scmp.eq.s32.totalorder %s83, 1
      %p547 = por %p545, %p546
      %p548 = scmp.ne.s32.totalorder %s539, %s540
      %p549 = scmp.eq.s32.totalorder %s83, 0
      %p550 = por %p548, %p549
      %p551 = scmp.ne.s32.totalorder %s539, %s540
      %p552 = scmp.eq.s32.totalorder %s84, 1
      %p553 = por %p551, %p552
      %p555 = scmp.ne.s32.totalorder %s540, %s554
      %p556 = scmp.eq.s32.totalorder %s84, 0
      %p557 = por %p555, %p556
      %s559 = sadd.s32 %s558, 1
      %p562 = scmp.eq.s32.totalorder %s78, 1
      %p563 = scmp.ne.s32.totalorder %s558, %s560
      %p564 = scmp.eq.s32.totalorder %s78, 0
      %p565 = por %p563, %p564
      %p566 = scmp.ne.s32.totalorder %s558, %s560
      %p567 = scmp.eq.s32.totalorder %s83, 1
      %p568 = por %p566, %p567
      %p569 = scmp.ne.s32.totalorder %s560, %s561
      %p570 = scmp.eq.s32.totalorder %s83, 0
      %p571 = por %p569, %p570
      %p572 = scmp.ne.s32.totalorder %s560, %s561
      %p573 = scmp.eq.s32.totalorder %s84, 1
      %p574 = por %p572, %p573
      %p576 = scmp.ne.s32.totalorder %s561, %s575
      %p577 = scmp.eq.s32.totalorder %s84, 0
      %p578 = por %p576, %p577
      %s580 = sadd.s32 %s579, 1
      %p583 = scmp.eq.s32.totalorder %s78, 1
      %p584 = scmp.ne.s32.totalorder %s579, %s581
      %p585 = scmp.eq.s32.totalorder %s78, 0
      %p586 = por %p584, %p585
      %p587 = scmp.ne.s32.totalorder %s579, %s581
      %p588 = scmp.eq.s32.totalorder %s83, 1
      %p589 = por %p587, %p588
      %p590 = scmp.ne.s32.totalorder %s581, %s582
      %p591 = scmp.eq.s32.totalorder %s83, 0
      %p592 = por %p590, %p591
      %p593 = scmp.ne.s32.totalorder %s581, %s582
      %p594 = scmp.eq.s32.totalorder %s84, 1
      %p595 = por %p593, %p594
      %p597 = scmp.ne.s32.totalorder %s582, %s596
      %p598 = scmp.eq.s32.totalorder %s84, 0
      %p599 = por %p597, %p598
      %s601 = sadd.s32 %s600, 1
      %p604 = scmp.eq.s32.totalorder %s78, 1
      %p605 = scmp.ne.s32.totalorder %s600, %s602
      %p606 = scmp.eq.s32.totalorder %s78, 0
      %p607 = por %p605, %p606
      %p608 = scmp.ne.s32.totalorder %s600, %s602
      %p609 = scmp.eq.s32.totalorder %s83, 1
      %p610 = por %p608, %p609
      %p611 = scmp.ne.s32.totalorder %s602, %s603
      %p612 = scmp.eq.s32.totalorder %s83, 0
      %p613 = por %p611, %p612
      %p614 = scmp.ne.s32.totalorder %s602, %s603
      %p615 = scmp.eq.s32.totalorder %s84, 1
      %p616 = por %p614, %p615
      %p618 = scmp.ne.s32.totalorder %s603, %s617
      %p619 = scmp.eq.s32.totalorder %s84, 0
      %p620 = por %p618, %p619
      %s622 = sadd.s32 %s621, 1
      %p625 = scmp.eq.s32.totalorder %s78, 1
      %p626 = scmp.ne.s32.totalorder %s621, %s623
      %p627 = scmp.eq.s32.totalorder %s78, 0
      %p628 = por %p626, %p627
      %p629 = scmp.ne.s32.totalorder %s621, %s623
      %p630 = scmp.eq.s32.totalorder %s83, 1
      %p631 = por %p629, %p630
      %p632 = scmp.ne.s32.totalorder %s623, %s624
      %p633 = scmp.eq.s32.totalorder %s83, 0
      %p634 = por %p632, %p633
      %p635 = scmp.ne.s32.totalorder %s623, %s624
      %p636 = scmp.eq.s32.totalorder %s84, 1
      %p637 = por %p635, %p636
      %p639 = scmp.ne.s32.totalorder %s624, %s638
      %p640 = scmp.eq.s32.totalorder %s84, 0
      %p641 = por %p639, %p640
      %s643 = sadd.s32 %s642, 1
      %p646 = scmp.eq.s32.totalorder %s78, 1
      %p647 = scmp.ne.s32.totalorder %s642, %s644
      %p648 = scmp.eq.s32.totalorder %s78, 0
      %p649 = por %p647, %p648
      %p650 = scmp.ne.s32.totalorder %s642, %s644
      %p651 = scmp.eq.s32.totalorder %s83, 1
      %p652 = por %p650, %p651
      %p653 = scmp.ne.s32.totalorder %s644, %s645
      %p654 = scmp.eq.s32.totalorder %s83, 0
      %p655 = por %p653, %p654
      %p656 = scmp.ne.s32.totalorder %s644, %s645
      %p657 = scmp.eq.s32.totalorder %s84, 1
      %p658 = por %p656, %p657
      %p660 = scmp.ne.s32.totalorder %s645, %s659
      %p661 = scmp.eq.s32.totalorder %s84, 0
      %p662 = por %p660, %p661
      %s664 = sadd.s32 %s663, 1
      %p667 = scmp.eq.s32.totalorder %s78, 1
      %p668 = scmp.ne.s32.totalorder %s663, %s665
      %p669 = scmp.eq.s32.totalorder %s78, 0
      %p670 = por %p668, %p669
      %p671 = scmp.ne.s32.totalorder %s663, %s665
      %p672 = scmp.eq.s32.totalorder %s83, 1
      %p673 = por %p671, %p672
      %p674 = scmp.ne.s32.totalorder %s665, %s666
      %p675 = scmp.eq.s32.totalorder %s83, 0
      %p676 = por %p674, %p675
      %p677 = scmp.ne.s32.totalorder %s665, %s666
      %p678 = scmp.eq.s32.totalorder %s84, 1
      %p679 = por %p677, %p678
      %p681 = scmp.ne.s32.totalorder %s666, %s680
      %p682 = scmp.eq.s32.totalorder %s84, 0
      %p683 = por %p681, %p682
      %s685 = sadd.s32 %s684, 1
      %p688 = scmp.eq.s32.totalorder %s78, 1
      %p689 = scmp.ne.s32.totalorder %s684, %s686
      %p690 = scmp.eq.s32.totalorder %s78, 0
      %p691 = por %p689, %p690
      %p692 = scmp.ne.s32.totalorder %s684, %s686
      %p693 = scmp.eq.s32.totalorder %s83, 1
      %p694 = por %p692, %p693
      %p695 = scmp.ne.s32.totalorder %s686, %s687
      %p696 = scmp.eq.s32.totalorder %s83, 0
      %p697 = por %p695, %p696
      %p698 = scmp.ne.s32.totalorder %s686, %s687
      %p699 = scmp.eq.s32.totalorder %s84, 1
      %p700 = por %p698, %p699
      %p702 = scmp.ne.s32.totalorder %s687, %s701
      %p703 = scmp.eq.s32.totalorder %s84, 0
      %p704 = por %p702, %p703
      %s706 = sadd.s32 %s705, 1
      %p709 = scmp.eq.s32.totalorder %s78, 1
      %p710 = scmp.ne.s32.totalorder %s705, %s707
      %p711 = scmp.eq.s32.totalorder %s78, 0
      %p712 = por %p710, %p711
      %p713 = scmp.ne.s32.totalorder %s705, %s707
      %p714 = scmp.eq.s32.totalorder %s83, 1
      %p715 = por %p713, %p714
      %p716 = scmp.ne.s32.totalorder %s707, %s708
      %p717 = scmp.eq.s32.totalorder %s83, 0
      %p718 = por %p716, %p717
      %p719 = scmp.ne.s32.totalorder %s707, %s708
      %p720 = scmp.eq.s32.totalorder %s84, 1
      %p721 = por %p719, %p720
      %p723 = scmp.ne.s32.totalorder %s708, %s722
      %p724 = scmp.eq.s32.totalorder %s84, 0
      %p725 = por %p723, %p724
      %s726 = ssub.s32 %s78, %s85
      %p727 = scmp.eq.s32.totalorder %s726, 0
      %s729 = sadd.s32 %s728, 1
      %s730 = scalar_select %p727, %s728, %s729
      %p733 = pneg %p727
      %p734 = scmp.eq.s32.totalorder %s78, 1
      %p735 = por %p733, %p734
      %p736 = scmp.ne.s32.totalorder %s728, %s731
      %p737 = scmp.eq.s32.totalorder %s78, 0
      %p738 = por %p736, %p737
      %p739 = scmp.ne.s32.totalorder %s728, %s731
      %p740 = scmp.eq.s32.totalorder %s83, 1
      %p741 = por %p739, %p740
      %p742 = scmp.ne.s32.totalorder %s731, %s732
      %p743 = scmp.eq.s32.totalorder %s83, 0
      %p744 = por %p742, %p743
      %p745 = scmp.ne.s32.totalorder %s731, %s732
      %p746 = scmp.eq.s32.totalorder %s84, 1
      %p747 = por %p745, %p746
      %p749 = scmp.ne.s32.totalorder %s732, %s748
      %p750 = scmp.eq.s32.totalorder %s84, 0
      %p751 = por %p749, %p750
      %s752 = ssub.s32 %s78, %s85
      %p753 = scmp.eq.s32.totalorder %s752, 0
      %s755 = sadd.s32 %s754, 1
      %s756 = scalar_select %p753, %s754, %s755
      %p759 = pneg %p753
      %p760 = scmp.eq.s32.totalorder %s78, 1
      %p761 = por %p759, %p760
      %p762 = scmp.ne.s32.totalorder %s754, %s757
      %p763 = scmp.eq.s32.totalorder %s78, 0
      %p764 = por %p762, %p763
      %p765 = scmp.ne.s32.totalorder %s754, %s757
      %p766 = scmp.eq.s32.totalorder %s83, 1
      %p767 = por %p765, %p766
      %p768 = scmp.ne.s32.totalorder %s757, %s758
      %p769 = scmp.eq.s32.totalorder %s83, 0
      %p770 = por %p768, %p769
      %p771 = scmp.ne.s32.totalorder %s757, %s758
      %p772 = scmp.eq.s32.totalorder %s84, 1
      %p773 = por %p771, %p772
      %p775 = scmp.ne.s32.totalorder %s758, %s774
      %p776 = scmp.eq.s32.totalorder %s84, 0
      %p777 = por %p775, %p776
      %s778 = ssub.s32 %s78, %s85
      %p779 = scmp.eq.s32.totalorder %s778, 0
      %s781 = sadd.s32 %s780, 1
      %s782 = scalar_select %p779, %s780, %s781
      %p785 = pneg %p779
      %p786 = scmp.eq.s32.totalorder %s78, 1
      %p787 = por %p785, %p786
      %p788 = scmp.ne.s32.totalorder %s780, %s783
      %p789 = scmp.eq.s32.totalorder %s78, 0
      %p790 = por %p788, %p789
      %p791 = scmp.ne.s32.totalorder %s780, %s783
      %p792 = scmp.eq.s32.totalorder %s83, 1
      %p793 = por %p791, %p792
      %p794 = scmp.ne.s32.totalorder %s783, %s784
      %p795 = scmp.eq.s32.totalorder %s83, 0
      %p796 = por %p794, %p795
      %p797 = scmp.ne.s32.totalorder %s783, %s784
      %p798 = scmp.eq.s32.totalorder %s84, 1
      %p799 = por %p797, %p798
      %p801 = scmp.ne.s32.totalorder %s784, %s800
      %p802 = scmp.eq.s32.totalorder %s84, 0
      %p803 = por %p801, %p802
      %p804 = scmp.le.s32.totalorder 1, %s78
      %p805 = scmp.lt.s32.totalorder %s78, 3
      %p806 = pnand %p804, %p805
      %p807 = pneg %p806
      // Predicated region
      $region9: #{causal_encoder_forward.1} parent=5 // pred_check
        _
      $region10: #{causal_encoder_forward.1} parent=5 // pred_check_branch
        %809 = sbr.rel (%p806) target = $region12
      $region11: #{causal_encoder_forward.1} parent=5 // pred_region
        %s810 = ssub.s32 %s78, 1
        // Predicated region
        $region13: #{causal_encoder_forward.1} parent=11 // pred_check
          %p811 = pneg %p151
        $region14: #{causal_encoder_forward.1} parent=11 // pred_check_branch
          %813 = sbr.rel (%p811) target = $region16
        $region15: #{causal_encoder_forward.1} parent=11 // pred_region
          _
        $region16: #{causal_encoder_forward.1} parent=11 // pred_fallthru
          _
        // Predicated region
        $region17: #{causal_encoder_forward.1} parent=11 // pred_check
          %p814 = pneg %p172
        $region18: #{causal_encoder_forward.1} parent=11 // pred_check_branch
          %816 = sbr.rel (%p814) target = $region20
        $region19: #{causal_encoder_forward.1} parent=11 // pred_region
          _
        $region20: #{causal_encoder_forward.1} parent=11 // pred_fallthru
          _
        // Predicated region
        $region21: #{causal_encoder_forward.1} parent=11 // pred_check
          %p817 = pneg %p193
        $region22: #{causal_encoder_forward.1} parent=11 // pred_check_branch
          %819 = sbr.rel (%p817) target = $region24
        $region23: #{causal_encoder_forward.1} parent=11 // pred_region
          _
        $region24: #{causal_encoder_forward.1} parent=11 // pred_fallthru
          _
        // Predicated region
        $region25: #{causal_encoder_forward.1} parent=11 // pred_check
          %p820 = pneg %p214
        $region26: #{causal_encoder_forward.1} parent=11 // pred_check_branch
          %822 = sbr.rel (%p820) target = $region28
        $region27: #{causal_encoder_forward.1} parent=11 // pred_region
          _
        $region28: #{causal_encoder_forward.1} parent=11 // pred_fallthru
          _
        // Predicated region
        $region29: #{causal_encoder_forward.1} parent=11 // pred_check
          %p823 = pneg %p235
        $region30: #{causal_encoder_forward.1} parent=11 // pred_check_branch
          %825 = sbr.rel (%p823) target = $region32
        $region31: #{causal_encoder_forward.1} parent=11 // pred_region
          _
        $region32: #{causal_encoder_forward.1} parent=11 // pred_fallthru
          _
        // Predicated region
        $region33: #{causal_encoder_forward.1} parent=11 // pred_check
          %p826 = pneg %p256
        $region34: #{causal_encoder_forward.1} parent=11 // pred_check_branch
          %828 = sbr.rel (%p826) target = $region36
        $region35: #{causal_encoder_forward.1} parent=11 // pred_region
          _
        $region36: #{causal_encoder_forward.1} parent=11 // pred_fallthru
          _
        // Predicated region
        $region37: #{causal_encoder_forward.1} parent=11 // pred_check
          %p829 = pneg %p277
        $region38: #{causal_encoder_forward.1} parent=11 // pred_check_branch
          %831 = sbr.rel (%p829) target = $region40
        $region39: #{causal_encoder_forward.1} parent=11 // pred_region
          _
        $region40: #{causal_encoder_forward.1} parent=11 // pred_fallthru
          _
        // Predicated region
        $region41: #{causal_encoder_forward.1} parent=11 // pred_check
          %p832 = pneg %p298
        $region42: #{causal_encoder_forward.1} parent=11 // pred_check_branch
          %834 = sbr.rel (%p832) target = $region44
        $region43: #{causal_encoder_forward.1} parent=11 // pred_region
          _
        $region44: #{causal_encoder_forward.1} parent=11 // pred_fallthru
          _
        // Predicated region
        $region45: #{causal_encoder_forward.1} parent=11 // pred_check
          %p835 = pneg %p319
        $region46: #{causal_encoder_forward.1} parent=11 // pred_check_branch
          %837 = sbr.rel (%p835) target = $region48
        $region47: #{causal_encoder_forward.1} parent=11 // pred_region
          _
        $region48: #{causal_encoder_forward.1} parent=11 // pred_fallthru
          _
        // Predicated region
        $region49: #{causal_encoder_forward.1} parent=11 // pred_check
          %p838 = pneg %p340
        $region50: #{causal_encoder_forward.1} parent=11 // pred_check_branch
          %840 = sbr.rel (%p838) target = $region52
        $region51: #{causal_encoder_forward.1} parent=11 // pred_region
          _
        $region52: #{causal_encoder_forward.1} parent=11 // pred_fallthru
          _
        // Predicated region
        $region53: #{causal_encoder_forward.1} parent=11 // pred_check
          %p841 = pneg %p361
        $region54: #{causal_encoder_forward.1} parent=11 // pred_check_branch
          %843 = sbr.rel (%p841) target = $region56
        $region55: #{causal_encoder_forward.1} parent=11 // pred_region
          _
        $region56: #{causal_encoder_forward.1} parent=11 // pred_fallthru
          _
        // Predicated region
        $region57: #{causal_encoder_forward.1} parent=11 // pred_check
          %p844 = pneg %p382
        $region58: #{causal_encoder_forward.1} parent=11 // pred_check_branch
          %846 = sbr.rel (%p844) target = $region60
        $region59: #{causal_encoder_forward.1} parent=11 // pred_region
          _
        $region60: #{causal_encoder_forward.1} parent=11 // pred_fallthru
          _
        // Predicated region
        $region61: #{causal_encoder_forward.1} parent=11 // pred_check
          %p847 = pneg %p403
        $region62: #{causal_encoder_forward.1} parent=11 // pred_check_branch
          %849 = sbr.rel (%p847) target = $region64
        $region63: #{causal_encoder_forward.1} parent=11 // pred_region
          _
        $region64: #{causal_encoder_forward.1} parent=11 // pred_fallthru
          _
        // Predicated region
        $region65: #{causal_encoder_forward.1} parent=11 // pred_check
          %p850 = pneg %p424
        $region66: #{causal_encoder_forward.1} parent=11 // pred_check_branch
          %852 = sbr.rel (%p850) target = $region68
        $region67: #{causal_encoder_forward.1} parent=11 // pred_region
          _
        $region68: #{causal_encoder_forward.1} parent=11 // pred_fallthru
          _
        // Predicated region
        $region69: #{causal_encoder_forward.1} parent=11 // pred_check
          %p853 = pneg %p445
        $region70: #{causal_encoder_forward.1} parent=11 // pred_check_branch
          %855 = sbr.rel (%p853) target = $region72
        $region71: #{causal_encoder_forward.1} parent=11 // pred_region
          _
        $region72: #{causal_encoder_forward.1} parent=11 // pred_fallthru
          _
        // Predicated region
        $region73: #{causal_encoder_forward.1} parent=11 // pred_check
          %p856 = pneg %p466
        $region74: #{causal_encoder_forward.1} parent=11 // pred_check_branch
          %858 = sbr.rel (%p856) target = $region76
        $region75: #{causal_encoder_forward.1} parent=11 // pred_region
          _
        $region76: #{causal_encoder_forward.1} parent=11 // pred_fallthru
          _
        // Predicated region
        $region77: #{causal_encoder_forward.1} parent=11 // pred_check
          %p859 = pneg %p487
        $region78: #{causal_encoder_forward.1} parent=11 // pred_check_branch
          %861 = sbr.rel (%p859) target = $region80
        $region79: #{causal_encoder_forward.1} parent=11 // pred_region
          _
        $region80: #{causal_encoder_forward.1} parent=11 // pred_fallthru
          _
        // Predicated region
        $region81: #{causal_encoder_forward.1} parent=11 // pred_check
          %p862 = pneg %p508
        $region82: #{causal_encoder_forward.1} parent=11 // pred_check_branch
          %864 = sbr.rel (%p862) target = $region84
        $region83: #{causal_encoder_forward.1} parent=11 // pred_region
          _
        $region84: #{causal_encoder_forward.1} parent=11 // pred_fallthru
          _
        // Predicated region
        $region85: #{causal_encoder_forward.1} parent=11 // pred_check
          %p865 = pneg %p529
        $region86: #{causal_encoder_forward.1} parent=11 // pred_check_branch
          %867 = sbr.rel (%p865) target = $region88
        $region87: #{causal_encoder_forward.1} parent=11 // pred_region
          _
        $region88: #{causal_encoder_forward.1} parent=11 // pred_fallthru
          _
        // Predicated region
        $region89: #{causal_encoder_forward.1} parent=11 // pred_check
          %p868 = pneg %p550
        $region90: #{causal_encoder_forward.1} parent=11 // pred_check_branch
          %870 = sbr.rel (%p868) target = $region92
        $region91: #{causal_encoder_forward.1} parent=11 // pred_region
          _
        $region92: #{causal_encoder_forward.1} parent=11 // pred_fallthru
          _
        // Predicated region
        $region93: #{causal_encoder_forward.1} parent=11 // pred_check
          %p871 = pneg %p571
        $region94: #{causal_encoder_forward.1} parent=11 // pred_check_branch
          %873 = sbr.rel (%p871) target = $region96
        $region95: #{causal_encoder_forward.1} parent=11 // pred_region
          _
        $region96: #{causal_encoder_forward.1} parent=11 // pred_fallthru
          _
        // Predicated region
        $region97: #{causal_encoder_forward.1} parent=11 // pred_check
          %p874 = pneg %p592
        $region98: #{causal_encoder_forward.1} parent=11 // pred_check_branch
          %876 = sbr.rel (%p874) target = $region100
        $region99: #{causal_encoder_forward.1} parent=11 // pred_region
          _
        $region100: #{causal_encoder_forward.1} parent=11 // pred_fallthru
          _
        // Predicated region
        $region101: #{causal_encoder_forward.1} parent=11 // pred_check
          %p877 = pneg %p613
        $region102: #{causal_encoder_forward.1} parent=11 // pred_check_branch
          %879 = sbr.rel (%p877) target = $region104
        $region103: #{causal_encoder_forward.1} parent=11 // pred_region
          _
        $region104: #{causal_encoder_forward.1} parent=11 // pred_fallthru
          _
        // Predicated region
        $region105: #{causal_encoder_forward.1} parent=11 // pred_check
          %p880 = pneg %p634
        $region106: #{causal_encoder_forward.1} parent=11 // pred_check_branch
          %882 = sbr.rel (%p880) target = $region108
        $region107: #{causal_encoder_forward.1} parent=11 // pred_region
          _
        $region108: #{causal_encoder_forward.1} parent=11 // pred_fallthru
          _
        // Predicated region
        $region109: #{causal_encoder_forward.1} parent=11 // pred_check
          %p883 = pneg %p655
        $region110: #{causal_encoder_forward.1} parent=11 // pred_check_branch
          %885 = sbr.rel (%p883) target = $region112
        $region111: #{causal_encoder_forward.1} parent=11 // pred_region
          _
        $region112: #{causal_encoder_forward.1} parent=11 // pred_fallthru
          _
        // Predicated region
        $region113: #{causal_encoder_forward.1} parent=11 // pred_check
          %p886 = pneg %p676
        $region114: #{causal_encoder_forward.1} parent=11 // pred_check_branch
          %888 = sbr.rel (%p886) target = $region116
        $region115: #{causal_encoder_forward.1} parent=11 // pred_region
          _
        $region116: #{causal_encoder_forward.1} parent=11 // pred_fallthru
          _
        // Predicated region
        $region117: #{causal_encoder_forward.1} parent=11 // pred_check
          %p889 = pneg %p697
        $region118: #{causal_encoder_forward.1} parent=11 // pred_check_branch
          %891 = sbr.rel (%p889) target = $region120
        $region119: #{causal_encoder_forward.1} parent=11 // pred_region
          _
        $region120: #{causal_encoder_forward.1} parent=11 // pred_fallthru
          _
        // Predicated region
        $region121: #{causal_encoder_forward.1} parent=11 // pred_check
          %p892 = pneg %p718
        $region122: #{causal_encoder_forward.1} parent=11 // pred_check_branch
          %894 = sbr.rel (%p892) target = $region124
        $region123: #{causal_encoder_forward.1} parent=11 // pred_region
          _
        $region124: #{causal_encoder_forward.1} parent=11 // pred_fallthru
          _
      $region12: #{causal_encoder_forward.1} parent=5 // pred_fallthru
        _
      %p895 = scmp.lt.s32.totalorder %s78, 2
      // Predicated region
      $region125: #{causal_encoder_forward.1} parent=5 // pred_check
        %p896 = pneg %p895
      $region126: #{causal_encoder_forward.1} parent=5 // pred_check_branch
        %898 = sbr.rel (%p896) target = $region128
      $region127: #{causal_encoder_forward.1} parent=5 // pred_region
        // Predicated region
        $region129: #{causal_encoder_forward.1} parent=127 // pred_check
          %p899 = pneg %p98
        $region130: #{causal_encoder_forward.1} parent=127 // pred_check_branch
          %901 = sbr.rel (%p899) target = $region132
        $region131: #{causal_encoder_forward.1} parent=127 // pred_region
          %p902 = scmp.lt.s32.totalorder %s78, 1
          %s903 = scalar_select %p902, %s78, 1
          %s904 = smul.addr %s903, 2
          %s905 = smul.addr %s904, 8
          %s906 = scalar_lea.vmem %s1, %s905
        $region132: #{causal_encoder_forward.1} parent=127 // pred_fallthru
          _
        // Predicated region
        $region133: #{causal_encoder_forward.1} parent=127 // pred_check
          %p907 = pneg %p124
        $region134: #{causal_encoder_forward.1} parent=127 // pred_check_branch
          %909 = sbr.rel (%p907) target = $region136
        $region135: #{causal_encoder_forward.1} parent=127 // pred_region
          %p910 = scmp.lt.s32.totalorder %s78, 1
          %s911 = scalar_select %p910, %s78, 1
          %s912 = smul.addr %s911, 4
          %s913 = scalar_lea.vmem %s3, %s912
        $region136: #{causal_encoder_forward.1} parent=127 // pred_fallthru
          _
      $region128: #{causal_encoder_forward.1} parent=5 // pred_fallthru
        _
      %p914 = scmp.le.s32.totalorder 1, %s78
      %p915 = scmp.lt.s32.totalorder %s78, 3
      %p916 = pnand %p914, %p915
      %p917 = pneg %p916
      // Predicated region
      $region137: #{causal_encoder_forward.1} parent=5 // pred_check
        _
      $region138: #{causal_encoder_forward.1} parent=5 // pred_check_branch
        %919 = sbr.rel (%p916) target = $region140
      $region139: #{causal_encoder_forward.1} parent=5 // pred_region
        %s920 = ssub.s32 %s78, 1
        %p921 = scmp.lt.s32.totalorder %s83, 1
        %s922 = scalar_select %p921, %s83, 1
        %s923 = smul.addr %s922, 2
        %s924 = smul.addr %s923, 8
        %s925 = scalar_lea.vmem %s1, %s924
        %p926 = pneg %p104
        %p927 = pneg %p101
        %p928 = scmp.lt.s32.totalorder %s83, 1
        %s929 = scalar_select %p928, %s83, 1
        %s930 = smul.addr %s929, 4
        %s931 = scalar_lea.vmem %s3, %s930
        %p932 = pneg %p130
        %p933 = pneg %p127
        %p934 = pneg %p151
        %p935 = pneg %p148
        %p936 = pneg %p172
        %p937 = pneg %p169
        %p938 = pneg %p193
        %p939 = pneg %p190
        %p940 = pneg %p214
        %p941 = pneg %p211
        %p942 = pneg %p235
        %p943 = pneg %p232
        %p944 = pneg %p256
        %p945 = pneg %p253
        %p946 = pneg %p277
        %p947 = pneg %p274
        %p948 = pneg %p298
        %p949 = pneg %p295
        %p950 = pneg %p319
        %p951 = pneg %p316
        %p952 = pneg %p340
        %p953 = pneg %p337
        %p954 = pneg %p361
        %p955 = pneg %p358
        %p956 = pneg %p382
        %p957 = pneg %p379
        %p958 = pneg %p403
        %p959 = pneg %p400
        %p960 = pneg %p424
        %p961 = pneg %p421
        %p962 = pneg %p445
        %p963 = pneg %p442
        %p964 = pneg %p466
        %p965 = pneg %p463
        %p966 = pneg %p487
        %p967 = pneg %p484
        %p968 = pneg %p508
        %p969 = pneg %p505
        %p970 = pneg %p529
        %p971 = pneg %p526
        %p972 = pneg %p550
        %p973 = pneg %p547
        %p974 = pneg %p571
        %p975 = pneg %p568
        %p976 = pneg %p592
        %p977 = pneg %p589
        %p978 = pneg %p613
        %p979 = pneg %p610
        %p980 = pneg %p634
        %p981 = pneg %p631
        %p982 = pneg %p655
        %p983 = pneg %p652
        %p984 = pneg %p676
        %p985 = pneg %p673
        %p986 = pneg %p697
        %p987 = pneg %p694
        %p988 = pneg %p718
        %p989 = pneg %p715
        %p990 = pneg %p744
        %p991 = pneg %p741
        %s992 = sand.u32 %s731, 1
        %s993 = scalar_lea.sflag [#allocation5], %s992
        %s994 = sand.u32 %s731, 1
        %s995 = smul.addr %s994, 4
        %s996 = scalar_lea.vmem [#allocation4], %s995
        %p997 = pneg %p770
        %p998 = pneg %p767
        %s999 = sand.u32 %s83, 1
        %s1000 = scalar_lea.sflag [#allocation7], %s999
        %s1001 = sand.u32 %s757, 1
        %s1002 = smul.addr %s1001, 4
        %s1003 = scalar_lea.vmem [#allocation6], %s1002
        %p1004 = pneg %p796
        %p1005 = pneg %p793
        %s1006 = sand.u32 %s83, 1
        %s1007 = scalar_lea.sflag [#allocation7], %s1006
        %s1008 = sand.u32 %s783, 1
        %s1009 = smul.addr %s1008, 4
        %s1010 = scalar_lea.vmem [#allocation8], %s1009
        %p1011 = scmp.lt.s32.totalorder %s83, 1
        %s1012 = scalar_select %p1011, %s83, 1
        %s1013 = smul.addr %s1012, 2
        %s1014 = smul.addr %s1013, 8
        %s1015 = scalar_lea.vmem %s1, %s1014
        %p1016 = scmp.lt.s32.totalorder %s83, 1
        %s1017 = scalar_select %p1016, %s83, 1
        %s1018 = smul.addr %s1017, 4
        %s1019 = scalar_lea.vmem %s3, %s1018
        %v1021 = vld [vmem:[%s1015] sm:$0xff]
        %v1022 = vld [vmem:[%s1015 + $0x8] sm:$0xff]
        %vm1023 = vcmask 123904
        %1024 = vst.msk [vmem:[#allocation2] sm:$0x3] %vm1023, 0.0
        %vm1025 = vcmask 130048
        %1026 = vst.msk [vmem:[#allocation2 + $0x2] sm:$0xff] %vm1025, %v1021
        %1027 = vst.msk [vmem:[#allocation2 + $0xa] sm:$0xff] %vm1025, %v1022
        %v1028 = vld [vmem:[#allocation2] sm:$0xff]
        %v1029 = vld [vmem:[#allocation2 + $0x8] sm:$0xff]
        %v1030 = vpack.c.bf16 %v1029, %v1028
        %v1031 = vld [vmem:[%s5] sm:$0xf]
        %v1032 = vld [vmem:[%s5 + $0x4] sm:$0xf]
        %v1033 = vld [vmem:[#allocation2 + $0x1] sm:$0xff]
        %v1034 = vld [vmem:[#allocation2 + $0x9] sm:$0xff]
        %v1035 = vpack.c.bf16 %v1034, %v1033
        %s1036 = scalar_lea.vmem %s5, 8
        %v1037 = vld [vmem:[%s1036] sm:$0xf]
        %v1038 = vld [vmem:[%s1036 + $0x4] sm:$0xf]
        %v1041 = vunpack.c.l.b16 %v1037
        %v1042 = vunpack.c.l.b16 %v1038
        %v1043 = vpack.c.b16 %v1042, %v1041
        %v1046 = vsel %vm1025, %v1035, 0
        %1048 = vmatprep.subr.bf16.mxu0 0
        %1049 = vmatpush1.bf16.msra.mxu0 %v1043
        %1050 = vmatprep.subr.bf16.mxu0 0
        %1051 = vmatpush1.bf16.msra.mxu0 0
        %1052 = vmatprep.subr.bf16.mxu0 0
        %1053 = vmatpush1.bf16.msra.mxu0 0
        %1054 = vmatprep.subr.bf16.mxu0 0
        %1055 = vmatpush1.bf16.msra.mxu0 0
        %1056 = vmatprep.subr.bf16.mxu0 0
        %1057 = vmatpush1.bf16.msra.mxu0 0
        %1058 = vmatprep.subr.bf16.mxu0 0
        %1059 = vmatpush1.bf16.msra.mxu0 0
        %1060 = vmatprep.subr.bf16.mxu0 0
        %1061 = vmatpush1.bf16.msra.mxu0 0
        %1062 = vmatprep.subr.bf16.mxu0 0
        %1063 = vmatpush1.bf16.msra.mxu0 0
        %1064 = vmatprep.subr.bf16.mxu0 0
        %1065 = vmatpush1.bf16.msra.mxu0 0
        %1066 = vmatprep.subr.bf16.mxu0 0
        %1067 = vmatpush1.bf16.msra.mxu0 0
        %1068 = vmatprep.subr.bf16.mxu0 0
        %1069 = vmatpush1.bf16.msra.mxu0 0
        %1070 = vmatprep.subr.bf16.mxu0 0
        %1071 = vmatpush1.bf16.msra.mxu0 0
        %1072 = vmatprep.subr.bf16.mxu0 0
        %1073 = vmatpush1.bf16.msra.mxu0 0
        %1074 = vmatprep.subr.bf16.mxu0 0
        %1075 = vmatpush1.bf16.msra.mxu0 0
        %1076 = vmatprep.subr.bf16.mxu0 0
        %1077 = vmatpush1.bf16.msra.mxu0 0
        %1078 = vmatprep.subr.bf16.mxu0 0
        %1079 = vmatpush1.bf16.msra.mxu0 0
        %1080 = vmatprep.mubr.bf16.mxu0 0
        %1081 = vmatmul.mubr.bf16.gmra.mrb[0].mxu0 %v1046
        %v1082 = vpop.f32.mrb[0].mxu0
        %v1083 = vadd.f32 0.0, %v1082
        %v1084 = vpop.f32.mrb[0].mxu0
        %v1085 = vpop.f32.mrb[0].mxu0
        %v1086 = vadd.f32 0.0, %v1085
        %v1087 = vpop.f32.mrb[0].mxu0
        %1088 = vdwg.mxu0
        %v1091 = vunpack.c.l.b16 %v1031
        %v1092 = vunpack.c.l.b16 %v1032
        %v1093 = vpack.c.b16 %v1092, %v1091
        %v1096 = vsel %vm1025, %v1030, 0
        %1098 = vmatprep.subr.bf16.mxu0 0
        %1099 = vmatpush1.bf16.msra.mxu0 %v1093
        %1100 = vmatprep.subr.bf16.mxu0 0
        %1101 = vmatpush1.bf16.msra.mxu0 0
        %1102 = vmatprep.subr.bf16.mxu0 0
        %1103 = vmatpush1.bf16.msra.mxu0 0
        %1104 = vmatprep.subr.bf16.mxu0 0
        %1105 = vmatpush1.bf16.msra.mxu0 0
        %1106 = vmatprep.subr.bf16.mxu0 0
        %1107 = vmatpush1.bf16.msra.mxu0 0
        %1108 = vmatprep.subr.bf16.mxu0 0
        %1109 = vmatpush1.bf16.msra.mxu0 0
        %1110 = vmatprep.subr.bf16.mxu0 0
        %1111 = vmatpush1.bf16.msra.mxu0 0
        %1112 = vmatprep.subr.bf16.mxu0 0
        %1113 = vmatpush1.bf16.msra.mxu0 0
        %1114 = vmatprep.subr.bf16.mxu0 0
        %1115 = vmatpush1.bf16.msra.mxu0 0
        %1116 = vmatprep.subr.bf16.mxu0 0
        %1117 = vmatpush1.bf16.msra.mxu0 0
        %1118 = vmatprep.subr.bf16.mxu0 0
        %1119 = vmatpush1.bf16.msra.mxu0 0
        %1120 = vmatprep.subr.bf16.mxu0 0
        %1121 = vmatpush1.bf16.msra.mxu0 0
        %1122 = vmatprep.subr.bf16.mxu0 0
        %1123 = vmatpush1.bf16.msra.mxu0 0
        %1124 = vmatprep.subr.bf16.mxu0 0
        %1125 = vmatpush1.bf16.msra.mxu0 0
        %1126 = vmatprep.subr.bf16.mxu0 0
        %1127 = vmatpush1.bf16.msra.mxu0 0
        %1128 = vmatprep.subr.bf16.mxu0 0
        %1129 = vmatpush1.bf16.msra.mxu0 0
        %1130 = vmatprep.mubr.bf16.mxu0 0
        %1131 = vmatmul.mubr.bf16.gmra.mrb[0].mxu0 %v1096
        %v1132 = vpop.f32.mrb[0].mxu0
        %v1133 = vadd.f32 %v1083, %v1132
        %v1134 = vpop.f32.mrb[0].mxu0
        %v1135 = vpop.f32.mrb[0].mxu0
        %v1136 = vadd.f32 %v1086, %v1135
        %v1137 = vpop.f32.mrb[0].mxu0
        %1138 = vdwg.mxu0
        %v1139 = vld [vmem:[#allocation2 + $0x2] sm:$0xff]
        %v1140 = vld [vmem:[#allocation2 + $0xa] sm:$0xff]
        %v1141 = vpack.c.bf16 %v1140, %v1139
        %s1142 = scalar_lea.vmem %s5, 16
        %v1143 = vld [vmem:[%s1142] sm:$0xf]
        %v1144 = vld [vmem:[%s1142 + $0x4] sm:$0xf]
        %v1147 = vunpack.c.l.b16 %v1143
        %v1148 = vunpack.c.l.b16 %v1144
        %v1149 = vpack.c.b16 %v1148, %v1147
        %v1152 = vsel %vm1025, %v1141, 0
        %1154 = vmatprep.subr.bf16.mxu0 0
        %1155 = vmatpush1.bf16.msra.mxu0 %v1149
        %1156 = vmatprep.subr.bf16.mxu0 0
        %1157 = vmatpush1.bf16.msra.mxu0 0
        %1158 = vmatprep.subr.bf16.mxu0 0
        %1159 = vmatpush1.bf16.msra.mxu0 0
        %1160 = vmatprep.subr.bf16.mxu0 0
        %1161 = vmatpush1.bf16.msra.mxu0 0
        %1162 = vmatprep.subr.bf16.mxu0 0
        %1163 = vmatpush1.bf16.msra.mxu0 0
        %1164 = vmatprep.subr.bf16.mxu0 0
        %1165 = vmatpush1.bf16.msra.mxu0 0
        %1166 = vmatprep.subr.bf16.mxu0 0
        %1167 = vmatpush1.bf16.msra.mxu0 0
        %1168 = vmatprep.subr.bf16.mxu0 0
        %1169 = vmatpush1.bf16.msra.mxu0 0
        %1170 = vmatprep.subr.bf16.mxu0 0
        %1171 = vmatpush1.bf16.msra.mxu0 0
        %1172 = vmatprep.subr.bf16.mxu0 0
        %1173 = vmatpush1.bf16.msra.mxu0 0
        %1174 = vmatprep.subr.bf16.mxu0 0
        %1175 = vmatpush1.bf16.msra.mxu0 0
        %1176 = vmatprep.subr.bf16.mxu0 0
        %1177 = vmatpush1.bf16.msra.mxu0 0
        %1178 = vmatprep.subr.bf16.mxu0 0
        %1179 = vmatpush1.bf16.msra.mxu0 0
        %1180 = vmatprep.subr.bf16.mxu0 0
        %1181 = vmatpush1.bf16.msra.mxu0 0
        %1182 = vmatprep.subr.bf16.mxu0 0
        %1183 = vmatpush1.bf16.msra.mxu0 0
        %1184 = vmatprep.subr.bf16.mxu0 0
        %1185 = vmatpush1.bf16.msra.mxu0 0
        %1186 = vmatprep.mubr.bf16.mxu0 0
        %1187 = vmatmul.mubr.bf16.gmra.mrb[0].mxu0 %v1152
        %v1188 = vpop.f32.mrb[0].mxu0
        %v1189 = vadd.f32 0.0, %v1188
        %v1190 = vpop.f32.mrb[0].mxu0
        %v1191 = vpop.f32.mrb[0].mxu0
        %v1192 = vadd.f32 0.0, %v1191
        %v1193 = vpop.f32.mrb[0].mxu0
        %1194 = vdwg.mxu0
        %v1195 = vadd.f32 %v1133, %v1189
        %v1196 = vadd.f32 %v1136, %v1192
        %v1197 = vld [vmem:[%s7] sm:$0x1]
        %v1199 = vlaneseq
        %v1200 = vshrl.u32 %v1199, 7
        %v1201 = vsub.s32 0, %v1200
        %v1202 = vrot.slane %v1197, %v1201
        %v1204 = vadd.f32 %v1195, %v1202
        %v1205 = vadd.f32 %v1196, %v1202
        %v1206 = vmax.f32 %v1204, 0.0
        %v1207 = vmax.f32 %v1205, 0.0
        %vm1208 = vcmask 254976
        %1209 = vst.msk [vmem:[#allocation3] sm:$0x3] %vm1208, 0.0
        %vm1210 = vcmask 261120
        %1211 = vst.msk [vmem:[#allocation3 + $0x2] sm:$0xff] %vm1210, %v1206
        %1212 = vst.msk [vmem:[#allocation3 + $0xa] sm:$0xff] %vm1210, %v1207
        %v1213 = vld [vmem:[#allocation3] ss:$2 sm:$0xff]
        %v1214 = vpack.c.bf16 %v1213, %v1213
        %v1215 = vld [vmem:[%s9] sm:$0xf]
        %v1216 = vld [vmem:[%s9 + $0x4] sm:$0xf]
        %v1217 = vld [vmem:[%s9 + $0x8] sm:$0xf]
        %v1218 = vld [vmem:[%s9 + $0xc] sm:$0xf]
        %s1219 = scalar_lea.vmem [#allocation3], 1
        %v1220 = vld [vmem:[%s1219] ss:$2 sm:$0xff]
        %v1221 = vpack.c.bf16 %v1220, %v1220
        %s1222 = scalar_lea.vmem %s9, 16
        %v1223 = vld [vmem:[%s1222] sm:$0xf]
        %v1224 = vld [vmem:[%s1222 + $0x4] sm:$0xf]
        %v1225 = vld [vmem:[%s1222 + $0x8] sm:$0xf]
        %v1226 = vld [vmem:[%s1222 + $0xc] sm:$0xf]
        %v1231 = vunpack.c.l.b16 %v1223
        %v1232 = vunpack.c.l.b16 %v1224
        %v1233 = vunpack.c.l.b16 %v1225
        %v1234 = vunpack.c.l.b16 %v1226
        %v1235 = vpack.c.b16 %v1232, %v1231
        %v1236 = vpack.c.b16 %v1234, %v1233
        %v1240 = vsel %vm1210, %v1221, 0
        %1242 = vmatprep.subr.bf16.mxu0 0
        %1243 = vmatpush1.bf16.msra.mxu0 %v1235
        %1244 = vmatprep.subr.bf16.mxu0 0
        %1245 = vmatpush1.bf16.msra.mxu0 %v1236
        %1246 = vmatprep.subr.bf16.mxu0 0
        %1247 = vmatpush1.bf16.msra.mxu0 0
        %1248 = vmatprep.subr.bf16.mxu0 0
        %1249 = vmatpush1.bf16.msra.mxu0 0
        %1250 = vmatprep.subr.bf16.mxu0 0
        %1251 = vmatpush1.bf16.msra.mxu0 0
        %1252 = vmatprep.subr.bf16.mxu0 0
        %1253 = vmatpush1.bf16.msra.mxu0 0
        %1254 = vmatprep.subr.bf16.mxu0 0
        %1255 = vmatpush1.bf16.msra.mxu0 0
        %1256 = vmatprep.subr.bf16.mxu0 0
        %1257 = vmatpush1.bf16.msra.mxu0 0
        %1258 = vmatprep.subr.bf16.mxu0 0
        %1259 = vmatpush1.bf16.msra.mxu0 0
        %1260 = vmatprep.subr.bf16.mxu0 0
        %1261 = vmatpush1.bf16.msra.mxu0 0
        %1262 = vmatprep.subr.bf16.mxu0 0
        %1263 = vmatpush1.bf16.msra.mxu0 0
        %1264 = vmatprep.subr.bf16.mxu0 0
        %1265 = vmatpush1.bf16.msra.mxu0 0
        %1266 = vmatprep.subr.bf16.mxu0 0
        %1267 = vmatpush1.bf16.msra.mxu0 0
        %1268 = vmatprep.subr.bf16.mxu0 0
        %1269 = vmatpush1.bf16.msra.mxu0 0
        %1270 = vmatprep.subr.bf16.mxu0 0
        %1271 = vmatpush1.bf16.msra.mxu0 0
        %1272 = vmatprep.subr.bf16.mxu0 0
        %1273 = vmatpush1.bf16.msra.mxu0 0
        %1274 = vmatprep.mubr.bf16.mxu0 0
        %1275 = vmatmul.mubr.bf16.gmra.mrb[0].mxu0 %v1240
        %v1276 = vpop.f32.mrb[0].mxu0
        %v1277 = vadd.f32 0.0, %v1276
        %v1278 = vpop.f32.mrb[0].mxu0
        %v1279 = vpop.f32.mrb[0].mxu0
        %v1280 = vpop.f32.mrb[0].mxu0
        %1281 = vdwg.mxu0
        %v1286 = vunpack.c.l.b16 %v1215
        %v1287 = vunpack.c.l.b16 %v1216
        %v1288 = vunpack.c.l.b16 %v1217
        %v1289 = vunpack.c.l.b16 %v1218
        %v1290 = vpack.c.b16 %v1287, %v1286
        %v1291 = vpack.c.b16 %v1289, %v1288
        %v1295 = vsel %vm1210, %v1214, 0
        %1297 = vmatprep.subr.bf16.mxu0 0
        %1298 = vmatpush1.bf16.msra.mxu0 %v1290
        %1299 = vmatprep.subr.bf16.mxu0 0
        %1300 = vmatpush1.bf16.msra.mxu0 %v1291
        %1301 = vmatprep.subr.bf16.mxu0 0
        %1302 = vmatpush1.bf16.msra.mxu0 0
        %1303 = vmatprep.subr.bf16.mxu0 0
        %1304 = vmatpush1.bf16.msra.mxu0 0
        %1305 = vmatprep.subr.bf16.mxu0 0
        %1306 = vmatpush1.bf16.msra.mxu0 0
        %1307 = vmatprep.subr.bf16.mxu0 0
        %1308 = vmatpush1.bf16.msra.mxu0 0
        %1309 = vmatprep.subr.bf16.mxu0 0
        %1310 = vmatpush1.bf16.msra.mxu0 0
        %1311 = vmatprep.subr.bf16.mxu0 0
        %1312 = vmatpush1.bf16.msra.mxu0 0
        %1313 = vmatprep.subr.bf16.mxu0 0
        %1314 = vmatpush1.bf16.msra.mxu0 0
        %1315 = vmatprep.subr.bf16.mxu0 0
        %1316 = vmatpush1.bf16.msra.mxu0 0
        %1317 = vmatprep.subr.bf16.mxu0 0
        %1318 = vmatpush1.bf16.msra.mxu0 0
        %1319 = vmatprep.subr.bf16.mxu0 0
        %1320 = vmatpush1.bf16.msra.mxu0 0
        %1321 = vmatprep.subr.bf16.mxu0 0
        %1322 = vmatpush1.bf16.msra.mxu0 0
        %1323 = vmatprep.subr.bf16.mxu0 0
        %1324 = vmatpush1.bf16.msra.mxu0 0
        %1325 = vmatprep.subr.bf16.mxu0 0
        %1326 = vmatpush1.bf16.msra.mxu0 0
        %1327 = vmatprep.subr.bf16.mxu0 0
        %1328 = vmatpush1.bf16.msra.mxu0 0
        %1329 = vmatprep.mubr.bf16.mxu0 0
        %1330 = vmatmul.mubr.bf16.gmra.mrb[0].mxu0 %v1295
        %v1331 = vpop.f32.mrb[0].mxu0
        %v1332 = vadd.f32 %v1277, %v1331
        %v1333 = vpop.f32.mrb[0].mxu0
        %v1334 = vpop.f32.mrb[0].mxu0
        %v1335 = vpop.f32.mrb[0].mxu0
        %1336 = vdwg.mxu0
        %s1337 = scalar_lea.vmem [#allocation3], 2
        %v1338 = vld [vmem:[%s1337] ss:$2 sm:$0xff]
        %v1339 = vpack.c.bf16 %v1338, %v1338
        %s1340 = scalar_lea.vmem %s9, 32
        %v1341 = vld [vmem:[%s1340] sm:$0xf]
        %v1342 = vld [vmem:[%s1340 + $0x4] sm:$0xf]
        %v1343 = vld [vmem:[%s1340 + $0x8] sm:$0xf]
        %v1344 = vld [vmem:[%s1340 + $0xc] sm:$0xf]
        %v1349 = vunpack.c.l.b16 %v1341
        %v1350 = vunpack.c.l.b16 %v1342
        %v1351 = vunpack.c.l.b16 %v1343
        %v1352 = vunpack.c.l.b16 %v1344
        %v1353 = vpack.c.b16 %v1350, %v1349
        %v1354 = vpack.c.b16 %v1352, %v1351
        %v1358 = vsel %vm1210, %v1339, 0
        %1360 = vmatprep.subr.bf16.mxu0 0
        %1361 = vmatpush1.bf16.msra.mxu0 %v1353
        %1362 = vmatprep.subr.bf16.mxu0 0
        %1363 = vmatpush1.bf16.msra.mxu0 %v1354
        %1364 = vmatprep.subr.bf16.mxu0 0
        %1365 = vmatpush1.bf16.msra.mxu0 0
        %1366 = vmatprep.subr.bf16.mxu0 0
        %1367 = vmatpush1.bf16.msra.mxu0 0
        %1368 = vmatprep.subr.bf16.mxu0 0
        %1369 = vmatpush1.bf16.msra.mxu0 0
        %1370 = vmatprep.subr.bf16.mxu0 0
        %1371 = vmatpush1.bf16.msra.mxu0 0
        %1372 = vmatprep.subr.bf16.mxu0 0
        %1373 = vmatpush1.bf16.msra.mxu0 0
        %1374 = vmatprep.subr.bf16.mxu0 0
        %1375 = vmatpush1.bf16.msra.mxu0 0
        %1376 = vmatprep.subr.bf16.mxu0 0
        %1377 = vmatpush1.bf16.msra.mxu0 0
        %1378 = vmatprep.subr.bf16.mxu0 0
        %1379 = vmatpush1.bf16.msra.mxu0 0
        %1380 = vmatprep.subr.bf16.mxu0 0
        %1381 = vmatpush1.bf16.msra.mxu0 0
        %1382 = vmatprep.subr.bf16.mxu0 0
        %1383 = vmatpush1.bf16.msra.mxu0 0
        %1384 = vmatprep.subr.bf16.mxu0 0
        %1385 = vmatpush1.bf16.msra.mxu0 0
        %1386 = vmatprep.subr.bf16.mxu0 0
        %1387 = vmatpush1.bf16.msra.mxu0 0
        %1388 = vmatprep.subr.bf16.mxu0 0
        %1389 = vmatpush1.bf16.msra.mxu0 0
        %1390 = vmatprep.subr.bf16.mxu0 0
        %1391 = vmatpush1.bf16.msra.mxu0 0
        %1392 = vmatprep.mubr.bf16.mxu0 0
        %1393 = vmatmul.mubr.bf16.gmra.mrb[0].mxu0 %v1358
        %v1394 = vpop.f32.mrb[0].mxu0
        %v1395 = vadd.f32 0.0, %v1394
        %v1396 = vpop.f32.mrb[0].mxu0
        %v1397 = vpop.f32.mrb[0].mxu0
        %v1398 = vpop.f32.mrb[0].mxu0
        %1399 = vdwg.mxu0
        %v1400 = vadd.f32 %v1332, %v1395
        %s1401 = scalar_lea.vmem [#allocation3], 3
        %v1402 = vld [vmem:[%s1401] ss:$2 sm:$0xff]
        %v1403 = vpack.c.bf16 %v1402, %v1402
        %s1404 = scalar_lea.vmem %s9, 48
        %v1405 = vld [vmem:[%s1404] sm:$0xf]
        %v1406 = vld [vmem:[%s1404 + $0x4] sm:$0xf]
        %v1407 = vld [vmem:[%s1404 + $0x8] sm:$0xf]
        %v1408 = vld [vmem:[%s1404 + $0xc] sm:$0xf]
        %v1413 = vunpack.c.l.b16 %v1405
        %v1414 = vunpack.c.l.b16 %v1406
        %v1415 = vunpack.c.l.b16 %v1407
        %v1416 = vunpack.c.l.b16 %v1408
        %v1417 = vpack.c.b16 %v1414, %v1413
        %v1418 = vpack.c.b16 %v1416, %v1415
        %v1422 = vsel %vm1210, %v1403, 0
        %1424 = vmatprep.subr.bf16.mxu0 0
        %1425 = vmatpush1.bf16.msra.mxu0 %v1417
        %1426 = vmatprep.subr.bf16.mxu0 0
        %1427 = vmatpush1.bf16.msra.mxu0 %v1418
        %1428 = vmatprep.subr.bf16.mxu0 0
        %1429 = vmatpush1.bf16.msra.mxu0 0
        %1430 = vmatprep.subr.bf16.mxu0 0
        %1431 = vmatpush1.bf16.msra.mxu0 0
        %1432 = vmatprep.subr.bf16.mxu0 0
        %1433 = vmatpush1.bf16.msra.mxu0 0
        %1434 = vmatprep.subr.bf16.mxu0 0
        %1435 = vmatpush1.bf16.msra.mxu0 0
        %1436 = vmatprep.subr.bf16.mxu0 0
        %1437 = vmatpush1.bf16.msra.mxu0 0
        %1438 = vmatprep.subr.bf16.mxu0 0
        %1439 = vmatpush1.bf16.msra.mxu0 0
        %1440 = vmatprep.subr.bf16.mxu0 0
        %1441 = vmatpush1.bf16.msra.mxu0 0
        %1442 = vmatprep.subr.bf16.mxu0 0
        %1443 = vmatpush1.bf16.msra.mxu0 0
        %1444 = vmatprep.subr.bf16.mxu0 0
        %1445 = vmatpush1.bf16.msra.mxu0 0
        %1446 = vmatprep.subr.bf16.mxu0 0
        %1447 = vmatpush1.bf16.msra.mxu0 0
        %1448 = vmatprep.subr.bf16.mxu0 0
        %1449 = vmatpush1.bf16.msra.mxu0 0
        %1450 = vmatprep.subr.bf16.mxu0 0
        %1451 = vmatpush1.bf16.msra.mxu0 0
        %1452 = vmatprep.subr.bf16.mxu0 0
        %1453 = vmatpush1.bf16.msra.mxu0 0
        %1454 = vmatprep.subr.bf16.mxu0 0
        %1455 = vmatpush1.bf16.msra.mxu0 0
        %1456 = vmatprep.mubr.bf16.mxu0 0
        %1457 = vmatmul.mubr.bf16.gmra.mrb[0].mxu0 %v1422
        %v1458 = vpop.f32.mrb[0].mxu0
        %v1459 = vadd.f32 0.0, %v1458
        %v1460 = vpop.f32.mrb[0].mxu0
        %v1461 = vpop.f32.mrb[0].mxu0
        %v1462 = vpop.f32.mrb[0].mxu0
        %1463 = vdwg.mxu0
        %v1464 = vadd.f32 %v1400, %v1459
        %v1465 = vld [vmem:[%s11] sm:$0x1]
        %v1467 = vlaneseq
        %v1468 = vshrl.u32 %v1467, 7
        %v1469 = vsub.s32 0, %v1468
        %v1470 = vrot.slane %v1465, %v1469
        %v1472 = vadd.f32 %v1464, %v1470
        %v1473 = vmax.f32 %v1472, 0.0
        %vm1474 = vcmask 259072
        %1475 = vst.msk [vmem:[#allocation3] sm:$0x3f] %vm1474, 0.0
        %1476 = vst.msk [vmem:[#allocation3 + $0x6] sm:$0xff] %vm1210, %v1473
        %v1477 = vld [vmem:[#allocation3] sm:$0xff]
        %v1478 = vpack.c.bf16 %v1477, %v1477
        %v1479 = vld [vmem:[%s13] sm:$0xf]
        %v1480 = vld [vmem:[%s13 + $0x4] sm:$0xf]
        %v1481 = vld [vmem:[%s13 + $0x8] sm:$0xf]
        %v1482 = vld [vmem:[%s13 + $0xc] sm:$0xf]
        %v1483 = vld [vmem:[#allocation3 + $0x3] sm:$0xff]
        %v1484 = vpack.c.bf16 %v1483, %v1483
        %s1485 = scalar_lea.vmem %s13, 16
        %v1486 = vld [vmem:[%s1485] sm:$0xf]
        %v1487 = vld [vmem:[%s1485 + $0x4] sm:$0xf]
        %v1488 = vld [vmem:[%s1485 + $0x8] sm:$0xf]
        %v1489 = vld [vmem:[%s1485 + $0xc] sm:$0xf]
        %v1494 = vunpack.c.l.b16 %v1486
        %v1495 = vunpack.c.l.b16 %v1487
        %v1496 = vunpack.c.l.b16 %v1488
        %v1497 = vunpack.c.l.b16 %v1489
        %v1498 = vpack.c.b16 %v1495, %v1494
        %v1499 = vpack.c.b16 %v1497, %v1496
        %v1503 = vsel %vm1210, %v1484, 0
        %1505 = vmatprep.subr.bf16.mxu0 0
        %1506 = vmatpush1.bf16.msra.mxu0 %v1498
        %1507 = vmatprep.subr.bf16.mxu0 0
        %1508 = vmatpush1.bf16.msra.mxu0 %v1499
        %1509 = vmatprep.subr.bf16.mxu0 0
        %1510 = vmatpush1.bf16.msra.mxu0 0
        %1511 = vmatprep.subr.bf16.mxu0 0
        %1512 = vmatpush1.bf16.msra.mxu0 0
        %1513 = vmatprep.subr.bf16.mxu0 0
        %1514 = vmatpush1.bf16.msra.mxu0 0
        %1515 = vmatprep.subr.bf16.mxu0 0
        %1516 = vmatpush1.bf16.msra.mxu0 0
        %1517 = vmatprep.subr.bf16.mxu0 0
        %1518 = vmatpush1.bf16.msra.mxu0 0
        %1519 = vmatprep.subr.bf16.mxu0 0
        %1520 = vmatpush1.bf16.msra.mxu0 0
        %1521 = vmatprep.subr.bf16.mxu0 0
        %1522 = vmatpush1.bf16.msra.mxu0 0
        %1523 = vmatprep.subr.bf16.mxu0 0
        %1524 = vmatpush1.bf16.msra.mxu0 0
        %1525 = vmatprep.subr.bf16.mxu0 0
        %1526 = vmatpush1.bf16.msra.mxu0 0
        %1527 = vmatprep.subr.bf16.mxu0 0
        %1528 = vmatpush1.bf16.msra.mxu0 0
        %1529 = vmatprep.subr.bf16.mxu0 0
        %1530 = vmatpush1.bf16.msra.mxu0 0
        %1531 = vmatprep.subr.bf16.mxu0 0
        %1532 = vmatpush1.bf16.msra.mxu0 0
        %1533 = vmatprep.subr.bf16.mxu0 0
        %1534 = vmatpush1.bf16.msra.mxu0 0
        %1535 = vmatprep.subr.bf16.mxu0 0
        %1536 = vmatpush1.bf16.msra.mxu0 0
        %1537 = vmatprep.mubr.bf16.mxu0 0
        %1538 = vmatmul.mubr.bf16.gmra.mrb[0].mxu0 %v1503
        %v1539 = vpop.f32.mrb[0].mxu0
        %v1540 = vadd.f32 0.0, %v1539
        %v1541 = vpop.f32.mrb[0].mxu0
        %v1542 = vpop.f32.mrb[0].mxu0
        %v1543 = vpop.f32.mrb[0].mxu0
        %1544 = vdwg.mxu0
        %v1549 = vunpack.c.l.b16 %v1479
        %v1550 = vunpack.c.l.b16 %v1480
        %v1551 = vunpack.c.l.b16 %v1481
        %v1552 = vunpack.c.l.b16 %v1482
        %v1553 = vpack.c.b16 %v1550, %v1549
        %v1554 = vpack.c.b16 %v1552, %v1551
        %v1558 = vsel %vm1210, %v1478, 0
        %1560 = vmatprep.subr.bf16.mxu0 0
        %1561 = vmatpush1.bf16.msra.mxu0 %v1553
        %1562 = vmatprep.subr.bf16.mxu0 0
        %1563 = vmatpush1.bf16.msra.mxu0 %v1554
        %1564 = vmatprep.subr.bf16.mxu0 0
        %1565 = vmatpush1.bf16.msra.mxu0 0
        %1566 = vmatprep.subr.bf16.mxu0 0
        %1567 = vmatpush1.bf16.msra.mxu0 0
        %1568 = vmatprep.subr.bf16.mxu0 0
        %1569 = vmatpush1.bf16.msra.mxu0 0
        %1570 = vmatprep.subr.bf16.mxu0 0
        %1571 = vmatpush1.bf16.msra.mxu0 0
        %1572 = vmatprep.subr.bf16.mxu0 0
        %1573 = vmatpush1.bf16.msra.mxu0 0
        %1574 = vmatprep.subr.bf16.mxu0 0
        %1575 = vmatpush1.bf16.msra.mxu0 0
        %1576 = vmatprep.subr.bf16.mxu0 0
        %1577 = vmatpush1.bf16.msra.mxu0 0
        %1578 = vmatprep.subr.bf16.mxu0 0
        %1579 = vmatpush1.bf16.msra.mxu0 0
        %1580 = vmatprep.subr.bf16.mxu0 0
        %1581 = vmatpush1.bf16.msra.mxu0 0
        %1582 = vmatprep.subr.bf16.mxu0 0
        %1583 = vmatpush1.bf16.msra.mxu0 0
        %1584 = vmatprep.subr.bf16.mxu0 0
        %1585 = vmatpush1.bf16.msra.mxu0 0
        %1586 = vmatprep.subr.bf16.mxu0 0
        %1587 = vmatpush1.bf16.msra.mxu0 0
        %1588 = vmatprep.subr.bf16.mxu0 0
        %1589 = vmatpush1.bf16.msra.mxu0 0
        %1590 = vmatprep.subr.bf16.mxu0 0
        %1591 = vmatpush1.bf16.msra.mxu0 0
        %1592 = vmatprep.mubr.bf16.mxu0 0
        %1593 = vmatmul.mubr.bf16.gmra.mrb[0].mxu0 %v1558
        %v1594 = vpop.f32.mrb[0].mxu0
        %v1595 = vadd.f32 %v1540, %v1594
        %v1596 = vpop.f32.mrb[0].mxu0
        %v1597 = vpop.f32.mrb[0].mxu0
        %v1598 = vpop.f32.mrb[0].mxu0
        %1599 = vdwg.mxu0
        %v1600 = vld [vmem:[#allocation3 + $0x6] sm:$0xff]
        %v1601 = vpack.c.bf16 %v1600, %v1600
        %s1602 = scalar_lea.vmem %s13, 32
        %v1603 = vld [vmem:[%s1602] sm:$0xf]
        %v1604 = vld [vmem:[%s1602 + $0x4] sm:$0xf]
        %v1605 = vld [vmem:[%s1602 + $0x8] sm:$0xf]
        %v1606 = vld [vmem:[%s1602 + $0xc] sm:$0xf]
        %v1611 = vunpack.c.l.b16 %v1603
        %v1612 = vunpack.c.l.b16 %v1604
        %v1613 = vunpack.c.l.b16 %v1605
        %v1614 = vunpack.c.l.b16 %v1606
        %v1615 = vpack.c.b16 %v1612, %v1611
        %v1616 = vpack.c.b16 %v1614, %v1613
        %v1620 = vsel %vm1210, %v1601, 0
        %1622 = vmatprep.subr.bf16.mxu0 0
        %1623 = vmatpush1.bf16.msra.mxu0 %v1615
        %1624 = vmatprep.subr.bf16.mxu0 0
        %1625 = vmatpush1.bf16.msra.mxu0 %v1616
        %1626 = vmatprep.subr.bf16.mxu0 0
        %1627 = vmatpush1.bf16.msra.mxu0 0
        %1628 = vmatprep.subr.bf16.mxu0 0
        %1629 = vmatpush1.bf16.msra.mxu0 0
        %1630 = vmatprep.subr.bf16.mxu0 0
        %1631 = vmatpush1.bf16.msra.mxu0 0
        %1632 = vmatprep.subr.bf16.mxu0 0
        %1633 = vmatpush1.bf16.msra.mxu0 0
        %1634 = vmatprep.subr.bf16.mxu0 0
        %1635 = vmatpush1.bf16.msra.mxu0 0
        %1636 = vmatprep.subr.bf16.mxu0 0
        %1637 = vmatpush1.bf16.msra.mxu0 0
        %1638 = vmatprep.subr.bf16.mxu0 0
        %1639 = vmatpush1.bf16.msra.mxu0 0
        %1640 = vmatprep.subr.bf16.mxu0 0
        %1641 = vmatpush1.bf16.msra.mxu0 0
        %1642 = vmatprep.subr.bf16.mxu0 0
        %1643 = vmatpush1.bf16.msra.mxu0 0
        %1644 = vmatprep.subr.bf16.mxu0 0
        %1645 = vmatpush1.bf16.msra.mxu0 0
        %1646 = vmatprep.subr.bf16.mxu0 0
        %1647 = vmatpush1.bf16.msra.mxu0 0
        %1648 = vmatprep.subr.bf16.mxu0 0
        %1649 = vmatpush1.bf16.msra.mxu0 0
        %1650 = vmatprep.subr.bf16.mxu0 0
        %1651 = vmatpush1.bf16.msra.mxu0 0
        %1652 = vmatprep.subr.bf16.mxu0 0
        %1653 = vmatpush1.bf16.msra.mxu0 0
        %1654 = vmatprep.mubr.bf16.mxu0 0
        %1655 = vmatmul.mubr.bf16.gmra.mrb[0].mxu0 %v1620
        %v1656 = vpop.f32.mrb[0].mxu0
        %v1657 = vadd.f32 0.0, %v1656
        %v1658 = vpop.f32.mrb[0].mxu0
        %v1659 = vpop.f32.mrb[0].mxu0
        %v1660 = vpop.f32.mrb[0].mxu0
        %1661 = vdwg.mxu0
        %v1662 = vadd.f32 %v1595, %v1657
        %v1663 = vld [vmem:[%s15] sm:$0x1]
        %v1665 = vlaneseq
        %v1666 = vshrl.u32 %v1665, 7
        %v1667 = vsub.s32 0, %v1666
        %v1668 = vrot.slane %v1663, %v1667
        %v1670 = vadd.f32 %v1662, %v1668
        %v1671 = vmax.f32 %v1670, 0.0
        %v1672 = vpack.c.bf16 %v1671, %v1671
        %v1673 = vld [vmem:[%s17] sm:$0xf]
        %v1674 = vld [vmem:[%s17 + $0x4] sm:$0xf]
        %v1675 = vld [vmem:[%s17 + $0x8] sm:$0xf]
        %v1676 = vld [vmem:[%s17 + $0xc] sm:$0xf]
        %v1677 = vld [vmem:[%s19] sm:$0x1]
        %v1679 = vlaneseq
        %v1680 = vshrl.u32 %v1679, 7
        %v1681 = vsub.s32 0, %v1680
        %v1682 = vrot.slane %v1677, %v1681
        %v1688 = vunpack.c.l.b16 %v1673
        %v1689 = vunpack.c.l.b16 %v1674
        %v1690 = vunpack.c.l.b16 %v1675
        %v1691 = vunpack.c.l.b16 %v1676
        %v1692 = vpack.c.b16 %v1689, %v1688
        %v1693 = vpack.c.b16 %v1691, %v1690
        %v1697 = vsel %vm1210, %v1672, 0
        %1699 = vmatprep.subr.bf16.mxu0 0
        %1700 = vmatpush1.bf16.msra.mxu0 %v1692
        %1701 = vmatprep.subr.bf16.mxu0 0
        %1702 = vmatpush1.bf16.msra.mxu0 %v1693
        %1703 = vmatprep.subr.bf16.mxu0 0
        %1704 = vmatpush1.bf16.msra.mxu0 0
        %1705 = vmatprep.subr.bf16.mxu0 0
        %1706 = vmatpush1.bf16.msra.mxu0 0
        %1707 = vmatprep.subr.bf16.mxu0 0
        %1708 = vmatpush1.bf16.msra.mxu0 0
        %1709 = vmatprep.subr.bf16.mxu0 0
        %1710 = vmatpush1.bf16.msra.mxu0 0
        %1711 = vmatprep.subr.bf16.mxu0 0
        %1712 = vmatpush1.bf16.msra.mxu0 0
        %1713 = vmatprep.subr.bf16.mxu0 0
        %1714 = vmatpush1.bf16.msra.mxu0 0
        %1715 = vmatprep.subr.bf16.mxu0 0
        %1716 = vmatpush1.bf16.msra.mxu0 0
        %1717 = vmatprep.subr.bf16.mxu0 0
        %1718 = vmatpush1.bf16.msra.mxu0 0
        %1719 = vmatprep.subr.bf16.mxu0 0
        %1720 = vmatpush1.bf16.msra.mxu0 0
        %1721 = vmatprep.subr.bf16.mxu0 0
        %1722 = vmatpush1.bf16.msra.mxu0 0
        %1723 = vmatprep.subr.bf16.mxu0 0
        %1724 = vmatpush1.bf16.msra.mxu0 0
        %1725 = vmatprep.subr.bf16.mxu0 0
        %1726 = vmatpush1.bf16.msra.mxu0 0
        %1727 = vmatprep.subr.bf16.mxu0 0
        %1728 = vmatpush1.bf16.msra.mxu0 0
        %1729 = vmatprep.subr.bf16.mxu0 0
        %1730 = vmatpush1.bf16.msra.mxu0 0
        %1731 = vmatprep.mubr.bf16.mxu0 0
        %1732 = vmatmul.mubr.bf16.gmra.mrb[0].mxu0 %v1697
        %v1733 = vpop.f32.mrb[0].mxu0
        %v1734 = vadd.f32 %v1682, %v1733
        %v1735 = vpop.f32.mrb[0].mxu0
        %v1736 = vpop.f32.mrb[0].mxu0
        %v1737 = vpop.f32.mrb[0].mxu0
        %1738 = vdwg.mxu0
        %v1739 = vadd.f32 %v1734, %v1472
        %v1740 = vmax.f32 %v1739, 0.0
        %1741 = vst.msk [vmem:[#allocation3] sm:$0x3] %vm1208, 0.0
        %1742 = vst.msk [vmem:[#allocation3 + $0x2] sm:$0xff] %vm1210, %v1740
        %v1743 = vld [vmem:[#allocation3] sm:$0xff]
        %v1744 = vpack.c.bf16 %v1743, %v1743
        %v1745 = vld [vmem:[%s21] sm:$0xf]
        %v1746 = vld [vmem:[%s21 + $0x4] sm:$0xf]
        %v1747 = vld [vmem:[%s21 + $0x8] sm:$0xf]
        %v1748 = vld [vmem:[%s21 + $0xc] sm:$0xf]
        %v1749 = vld [vmem:[#allocation3 + $0x1] sm:$0xff]
        %v1750 = vpack.c.bf16 %v1749, %v1749
        %s1751 = scalar_lea.vmem %s21, 16
        %v1752 = vld [vmem:[%s1751] sm:$0xf]
        %v1753 = vld [vmem:[%s1751 + $0x4] sm:$0xf]
        %v1754 = vld [vmem:[%s1751 + $0x8] sm:$0xf]
        %v1755 = vld [vmem:[%s1751 + $0xc] sm:$0xf]
        %v1760 = vunpack.c.l.b16 %v1752
        %v1761 = vunpack.c.l.b16 %v1753
        %v1762 = vunpack.c.l.b16 %v1754
        %v1763 = vunpack.c.l.b16 %v1755
        %v1764 = vpack.c.b16 %v1761, %v1760
        %v1765 = vpack.c.b16 %v1763, %v1762
        %v1769 = vsel %vm1210, %v1750, 0
        %1771 = vmatprep.subr.bf16.mxu0 0
        %1772 = vmatpush1.bf16.msra.mxu0 %v1764
        %1773 = vmatprep.subr.bf16.mxu0 0
        %1774 = vmatpush1.bf16.msra.mxu0 %v1765
        %1775 = vmatprep.subr.bf16.mxu0 0
        %1776 = vmatpush1.bf16.msra.mxu0 0
        %1777 = vmatprep.subr.bf16.mxu0 0
        %1778 = vmatpush1.bf16.msra.mxu0 0
        %1779 = vmatprep.subr.bf16.mxu0 0
        %1780 = vmatpush1.bf16.msra.mxu0 0
        %1781 = vmatprep.subr.bf16.mxu0 0
        %1782 = vmatpush1.bf16.msra.mxu0 0
        %1783 = vmatprep.subr.bf16.mxu0 0
        %1784 = vmatpush1.bf16.msra.mxu0 0
        %1785 = vmatprep.subr.bf16.mxu0 0
        %1786 = vmatpush1.bf16.msra.mxu0 0
        %1787 = vmatprep.subr.bf16.mxu0 0
        %1788 = vmatpush1.bf16.msra.mxu0 0
        %1789 = vmatprep.subr.bf16.mxu0 0
        %1790 = vmatpush1.bf16.msra.mxu0 0
        %1791 = vmatprep.subr.bf16.mxu0 0
        %1792 = vmatpush1.bf16.msra.mxu0 0
        %1793 = vmatprep.subr.bf16.mxu0 0
        %1794 = vmatpush1.bf16.msra.mxu0 0
        %1795 = vmatprep.subr.bf16.mxu0 0
        %1796 = vmatpush1.bf16.msra.mxu0 0
        %1797 = vmatprep.subr.bf16.mxu0 0
        %1798 = vmatpush1.bf16.msra.mxu0 0
        %1799 = vmatprep.subr.bf16.mxu0 0
        %1800 = vmatpush1.bf16.msra.mxu0 0
        %1801 = vmatprep.subr.bf16.mxu0 0
        %1802 = vmatpush1.bf16.msra.mxu0 0
        %1803 = vmatprep.mubr.bf16.mxu0 0
        %1804 = vmatmul.mubr.bf16.gmra.mrb[0].mxu0 %v1769
        %v1805 = vpop.f32.mrb[0].mxu0
        %v1806 = vadd.f32 0.0, %v1805
        %v1807 = vpop.f32.mrb[0].mxu0
        %v1808 = vpop.f32.mrb[0].mxu0
        %v1809 = vpop.f32.mrb[0].mxu0
        %1810 = vdwg.mxu0
        %v1815 = vunpack.c.l.b16 %v1745
        %v1816 = vunpack.c.l.b16 %v1746
        %v1817 = vunpack.c.l.b16 %v1747
        %v1818 = vunpack.c.l.b16 %v1748
        %v1819 = vpack.c.b16 %v1816, %v1815
        %v1820 = vpack.c.b16 %v1818, %v1817
        %v1824 = vsel %vm1210, %v1744, 0
        %1826 = vmatprep.subr.bf16.mxu0 0
        %1827 = vmatpush1.bf16.msra.mxu0 %v1819
        %1828 = vmatprep.subr.bf16.mxu0 0
        %1829 = vmatpush1.bf16.msra.mxu0 %v1820
        %1830 = vmatprep.subr.bf16.mxu0 0
        %1831 = vmatpush1.bf16.msra.mxu0 0
        %1832 = vmatprep.subr.bf16.mxu0 0
        %1833 = vmatpush1.bf16.msra.mxu0 0
        %1834 = vmatprep.subr.bf16.mxu0 0
        %1835 = vmatpush1.bf16.msra.mxu0 0
        %1836 = vmatprep.subr.bf16.mxu0 0
        %1837 = vmatpush1.bf16.msra.mxu0 0
        %1838 = vmatprep.subr.bf16.mxu0 0
        %1839 = vmatpush1.bf16.msra.mxu0 0
        %1840 = vmatprep.subr.bf16.mxu0 0
        %1841 = vmatpush1.bf16.msra.mxu0 0
        %1842 = vmatprep.subr.bf16.mxu0 0
        %1843 = vmatpush1.bf16.msra.mxu0 0
        %1844 = vmatprep.subr.bf16.mxu0 0
        %1845 = vmatpush1.bf16.msra.mxu0 0
        %1846 = vmatprep.subr.bf16.mxu0 0
        %1847 = vmatpush1.bf16.msra.mxu0 0
        %1848 = vmatprep.subr.bf16.mxu0 0
        %1849 = vmatpush1.bf16.msra.mxu0 0
        %1850 = vmatprep.subr.bf16.mxu0 0
        %1851 = vmatpush1.bf16.msra.mxu0 0
        %1852 = vmatprep.subr.bf16.mxu0 0
        %1853 = vmatpush1.bf16.msra.mxu0 0
        %1854 = vmatprep.subr.bf16.mxu0 0
        %1855 = vmatpush1.bf16.msra.mxu0 0
        %1856 = vmatprep.subr.bf16.mxu0 0
        %1857 = vmatpush1.bf16.msra.mxu0 0
        %1858 = vmatprep.mubr.bf16.mxu0 0
        %1859 = vmatmul.mubr.bf16.gmra.mrb[0].mxu0 %v1824
        %v1860 = vpop.f32.mrb[0].mxu0
        %v1861 = vadd.f32 %v1806, %v1860
        %v1862 = vpop.f32.mrb[0].mxu0
        %v1863 = vpop.f32.mrb[0].mxu0
        %v1864 = vpop.f32.mrb[0].mxu0
        %1865 = vdwg.mxu0
        %v1866 = vld [vmem:[#allocation3 + $0x2] sm:$0xff]
        %v1867 = vpack.c.bf16 %v1866, %v1866
        %s1868 = scalar_lea.vmem %s21, 32
        %v1869 = vld [vmem:[%s1868] sm:$0xf]
        %v1870 = vld [vmem:[%s1868 + $0x4] sm:$0xf]
        %v1871 = vld [vmem:[%s1868 + $0x8] sm:$0xf]
        %v1872 = vld [vmem:[%s1868 + $0xc] sm:$0xf]
        %v1877 = vunpack.c.l.b16 %v1869
        %v1878 = vunpack.c.l.b16 %v1870
        %v1879 = vunpack.c.l.b16 %v1871
        %v1880 = vunpack.c.l.b16 %v1872
        %v1881 = vpack.c.b16 %v1878, %v1877
        %v1882 = vpack.c.b16 %v1880, %v1879
        %v1886 = vsel %vm1210, %v1867, 0
        %1888 = vmatprep.subr.bf16.mxu0 0
        %1889 = vmatpush1.bf16.msra.mxu0 %v1881
        %1890 = vmatprep.subr.bf16.mxu0 0
        %1891 = vmatpush1.bf16.msra.mxu0 %v1882
        %1892 = vmatprep.subr.bf16.mxu0 0
        %1893 = vmatpush1.bf16.msra.mxu0 0
        %1894 = vmatprep.subr.bf16.mxu0 0
        %1895 = vmatpush1.bf16.msra.mxu0 0
        %1896 = vmatprep.subr.bf16.mxu0 0
        %1897 = vmatpush1.bf16.msra.mxu0 0
        %1898 = vmatprep.subr.bf16.mxu0 0
        %1899 = vmatpush1.bf16.msra.mxu0 0
        %1900 = vmatprep.subr.bf16.mxu0 0
        %1901 = vmatpush1.bf16.msra.mxu0 0
        %1902 = vmatprep.subr.bf16.mxu0 0
        %1903 = vmatpush1.bf16.msra.mxu0 0
        %1904 = vmatprep.subr.bf16.mxu0 0
        %1905 = vmatpush1.bf16.msra.mxu0 0
        %1906 = vmatprep.subr.bf16.mxu0 0
        %1907 = vmatpush1.bf16.msra.mxu0 0
        %1908 = vmatprep.subr.bf16.mxu0 0
        %1909 = vmatpush1.bf16.msra.mxu0 0
        %1910 = vmatprep.subr.bf16.mxu0 0
        %1911 = vmatpush1.bf16.msra.mxu0 0
        %1912 = vmatprep.subr.bf16.mxu0 0
        %1913 = vmatpush1.bf16.msra.mxu0 0
        %1914 = vmatprep.subr.bf16.mxu0 0
        %1915 = vmatpush1.bf16.msra.mxu0 0
        %1916 = vmatprep.subr.bf16.mxu0 0
        %1917 = vmatpush1.bf16.msra.mxu0 0
        %1918 = vmatprep.subr.bf16.mxu0 0
        %1919 = vmatpush1.bf16.msra.mxu0 0
        %1920 = vmatprep.mubr.bf16.mxu0 0
        %1921 = vmatmul.mubr.bf16.gmra.mrb[0].mxu0 %v1886
        %v1922 = vpop.f32.mrb[0].mxu0
        %v1923 = vadd.f32 0.0, %v1922
        %v1924 = vpop.f32.mrb[0].mxu0
        %v1925 = vpop.f32.mrb[0].mxu0
        %v1926 = vpop.f32.mrb[0].mxu0
        %1927 = vdwg.mxu0
        %v1928 = vadd.f32 %v1861, %v1923
        %v1929 = vld [vmem:[%s23] sm:$0x1]
        %v1931 = vlaneseq
        %v1932 = vshrl.u32 %v1931, 7
        %v1933 = vsub.s32 0, %v1932
        %v1934 = vrot.slane %v1929, %v1933
        %v1936 = vadd.f32 %v1928, %v1934
        %v1937 = vmax.f32 %v1936, 0.0
        %v1938 = vpack.c.bf16 %v1937, %v1937
        %v1939 = vld [vmem:[%s25] sm:$0xf]
        %v1940 = vld [vmem:[%s25 + $0x4] sm:$0xf]
        %v1941 = vld [vmem:[%s25 + $0x8] sm:$0xf]
        %v1942 = vld [vmem:[%s25 + $0xc] sm:$0xf]
        %v1943 = vld [vmem:[%s27] sm:$0x1]
        %v1945 = vlaneseq
        %v1946 = vshrl.u32 %v1945, 7
        %v1947 = vsub.s32 0, %v1946
        %v1948 = vrot.slane %v1943, %v1947
        %v1954 = vunpack.c.l.b16 %v1939
        %v1955 = vunpack.c.l.b16 %v1940
        %v1956 = vunpack.c.l.b16 %v1941
        %v1957 = vunpack.c.l.b16 %v1942
        %v1958 = vpack.c.b16 %v1955, %v1954
        %v1959 = vpack.c.b16 %v1957, %v1956
        %v1963 = vsel %vm1210, %v1938, 0
        %1965 = vmatprep.subr.bf16.mxu0 0
        %1966 = vmatpush1.bf16.msra.mxu0 %v1958
        %1967 = vmatprep.subr.bf16.mxu0 0
        %1968 = vmatpush1.bf16.msra.mxu0 %v1959
        %1969 = vmatprep.subr.bf16.mxu0 0
        %1970 = vmatpush1.bf16.msra.mxu0 0
        %1971 = vmatprep.subr.bf16.mxu0 0
        %1972 = vmatpush1.bf16.msra.mxu0 0
        %1973 = vmatprep.subr.bf16.mxu0 0
        %1974 = vmatpush1.bf16.msra.mxu0 0
        %1975 = vmatprep.subr.bf16.mxu0 0
        %1976 = vmatpush1.bf16.msra.mxu0 0
        %1977 = vmatprep.subr.bf16.mxu0 0
        %1978 = vmatpush1.bf16.msra.mxu0 0
        %1979 = vmatprep.subr.bf16.mxu0 0
        %1980 = vmatpush1.bf16.msra.mxu0 0
        %1981 = vmatprep.subr.bf16.mxu0 0
        %1982 = vmatpush1.bf16.msra.mxu0 0
        %1983 = vmatprep.subr.bf16.mxu0 0
        %1984 = vmatpush1.bf16.msra.mxu0 0
        %1985 = vmatprep.subr.bf16.mxu0 0
        %1986 = vmatpush1.bf16.msra.mxu0 0
        %1987 = vmatprep.subr.bf16.mxu0 0
        %1988 = vmatpush1.bf16.msra.mxu0 0
        %1989 = vmatprep.subr.bf16.mxu0 0
        %1990 = vmatpush1.bf16.msra.mxu0 0
        %1991 = vmatprep.subr.bf16.mxu0 0
        %1992 = vmatpush1.bf16.msra.mxu0 0
        %1993 = vmatprep.subr.bf16.mxu0 0
        %1994 = vmatpush1.bf16.msra.mxu0 0
        %1995 = vmatprep.subr.bf16.mxu0 0
        %1996 = vmatpush1.bf16.msra.mxu0 0
        %1997 = vmatprep.mubr.bf16.mxu0 0
        %1998 = vmatmul.mubr.bf16.gmra.mrb[0].mxu0 %v1963
        %v1999 = vpop.f32.mrb[0].mxu0
        %v2000 = vadd.f32 %v1948, %v1999
        %v2001 = vpop.f32.mrb[0].mxu0
        %v2002 = vpop.f32.mrb[0].mxu0
        %v2003 = vpop.f32.mrb[0].mxu0
        %2004 = vdwg.mxu0
        %v2005 = vadd.f32 %v2000, %v1739
        %2006 = vst.msk [vmem:[#allocation3] sm:$0x3] %vm1208, 0.0
        %2007 = vst.msk [vmem:[#allocation3 + $0x2] sm:$0xff] %vm1210, %v2005
        %v2008 = vld [vmem:[#allocation3] ss:$2 sm:$0xf]
        %v2009 = vpack.c.bf16 %v2008, %v2008
        %v2010 = vld [vmem:[%s29] sm:$0xf]
        %v2011 = vld [vmem:[%s29 + $0x4] sm:$0xf]
        %v2012 = vld [vmem:[%s29 + $0x8] sm:$0xf]
        %v2013 = vld [vmem:[%s29 + $0xc] sm:$0xf]
        %v2014 = vld [vmem:[%s1219] ss:$2 sm:$0xf]
        %v2015 = vpack.c.bf16 %v2014, %v2014
        %s2016 = scalar_lea.vmem %s29, 16
        %v2017 = vld [vmem:[%s2016] sm:$0xf]
        %v2018 = vld [vmem:[%s2016 + $0x4] sm:$0xf]
        %v2019 = vld [vmem:[%s2016 + $0x8] sm:$0xf]
        %v2020 = vld [vmem:[%s2016 + $0xc] sm:$0xf]
        %v2025 = vunpack.c.l.b16 %v2017
        %v2026 = vunpack.c.l.b16 %v2018
        %v2027 = vunpack.c.l.b16 %v2019
        %v2028 = vunpack.c.l.b16 %v2020
        %v2029 = vpack.c.b16 %v2026, %v2025
        %v2030 = vpack.c.b16 %v2028, %v2027
        %v2034 = vsel %vm1210, %v2015, 0
        %2036 = vmatprep.subr.bf16.mxu0 0
        %2037 = vmatpush1.bf16.msra.mxu0 %v2029
        %2038 = vmatprep.subr.bf16.mxu0 0
        %2039 = vmatpush1.bf16.msra.mxu0 %v2030
        %2040 = vmatprep.subr.bf16.mxu0 0
        %2041 = vmatpush1.bf16.msra.mxu0 0
        %2042 = vmatprep.subr.bf16.mxu0 0
        %2043 = vmatpush1.bf16.msra.mxu0 0
        %2044 = vmatprep.subr.bf16.mxu0 0
        %2045 = vmatpush1.bf16.msra.mxu0 0
        %2046 = vmatprep.subr.bf16.mxu0 0
        %2047 = vmatpush1.bf16.msra.mxu0 0
        %2048 = vmatprep.subr.bf16.mxu0 0
        %2049 = vmatpush1.bf16.msra.mxu0 0
        %2050 = vmatprep.subr.bf16.mxu0 0
        %2051 = vmatpush1.bf16.msra.mxu0 0
        %2052 = vmatprep.subr.bf16.mxu0 0
        %2053 = vmatpush1.bf16.msra.mxu0 0
        %2054 = vmatprep.subr.bf16.mxu0 0
        %2055 = vmatpush1.bf16.msra.mxu0 0
        %2056 = vmatprep.subr.bf16.mxu0 0
        %2057 = vmatpush1.bf16.msra.mxu0 0
        %2058 = vmatprep.subr.bf16.mxu0 0
        %2059 = vmatpush1.bf16.msra.mxu0 0
        %2060 = vmatprep.subr.bf16.mxu0 0
        %2061 = vmatpush1.bf16.msra.mxu0 0
        %2062 = vmatprep.subr.bf16.mxu0 0
        %2063 = vmatpush1.bf16.msra.mxu0 0
        %2064 = vmatprep.subr.bf16.mxu0 0
        %2065 = vmatpush1.bf16.msra.mxu0 0
        %2066 = vmatprep.subr.bf16.mxu0 0
        %2067 = vmatpush1.bf16.msra.mxu0 0
        %2068 = vmatprep.mubr.bf16.mxu0 0
        %2069 = vmatmul.mubr.bf16.gmra.mrb[0].mxu0 %v2034
        %v2070 = vpop.f32.mrb[0].mxu0
        %v2071 = vadd.f32 0.0, %v2070
        %v2072 = vpop.f32.mrb[0].mxu0
        %v2073 = vpop.f32.mrb[0].mxu0
        %v2074 = vpop.f32.mrb[0].mxu0
        %2075 = vdwg.mxu0
        %v2080 = vunpack.c.l.b16 %v2010
        %v2081 = vunpack.c.l.b16 %v2011
        %v2082 = vunpack.c.l.b16 %v2012
        %v2083 = vunpack.c.l.b16 %v2013
        %v2084 = vpack.c.b16 %v2081, %v2080
        %v2085 = vpack.c.b16 %v2083, %v2082
        %v2089 = vsel %vm1210, %v2009, 0
        %2091 = vmatprep.subr.bf16.mxu0 0
        %2092 = vmatpush1.bf16.msra.mxu0 %v2084
        %2093 = vmatprep.subr.bf16.mxu0 0
        %2094 = vmatpush1.bf16.msra.mxu0 %v2085
        %2095 = vmatprep.subr.bf16.mxu0 0
        %2096 = vmatpush1.bf16.msra.mxu0 0
        %2097 = vmatprep.subr.bf16.mxu0 0
        %2098 = vmatpush1.bf16.msra.mxu0 0
        %2099 = vmatprep.subr.bf16.mxu0 0
        %2100 = vmatpush1.bf16.msra.mxu0 0
        %2101 = vmatprep.subr.bf16.mxu0 0
        %2102 = vmatpush1.bf16.msra.mxu0 0
        %2103 = vmatprep.subr.bf16.mxu0 0
        %2104 = vmatpush1.bf16.msra.mxu0 0
        %2105 = vmatprep.subr.bf16.mxu0 0
        %2106 = vmatpush1.bf16.msra.mxu0 0
        %2107 = vmatprep.subr.bf16.mxu0 0
        %2108 = vmatpush1.bf16.msra.mxu0 0
        %2109 = vmatprep.subr.bf16.mxu0 0
        %2110 = vmatpush1.bf16.msra.mxu0 0
        %2111 = vmatprep.subr.bf16.mxu0 0
        %2112 = vmatpush1.bf16.msra.mxu0 0
        %2113 = vmatprep.subr.bf16.mxu0 0
        %2114 = vmatpush1.bf16.msra.mxu0 0
        %2115 = vmatprep.subr.bf16.mxu0 0
        %2116 = vmatpush1.bf16.msra.mxu0 0
        %2117 = vmatprep.subr.bf16.mxu0 0
        %2118 = vmatpush1.bf16.msra.mxu0 0
        %2119 = vmatprep.subr.bf16.mxu0 0
        %2120 = vmatpush1.bf16.msra.mxu0 0
        %2121 = vmatprep.subr.bf16.mxu0 0
        %2122 = vmatpush1.bf16.msra.mxu0 0
        %2123 = vmatprep.mubr.bf16.mxu0 0
        %2124 = vmatmul.mubr.bf16.gmra.mrb[0].mxu0 %v2089
        %v2125 = vpop.f32.mrb[0].mxu0
        %v2126 = vadd.f32 %v2071, %v2125
        %v2127 = vpop.f32.mrb[0].mxu0
        %v2128 = vpop.f32.mrb[0].mxu0
        %v2129 = vpop.f32.mrb[0].mxu0
        %2130 = vdwg.mxu0
        %v2131 = vld [vmem:[%s1337] ss:$2 sm:$0xf]
        %v2132 = vpack.c.bf16 %v2131, %v2131
        %s2133 = scalar_lea.vmem %s29, 32
        %v2134 = vld [vmem:[%s2133] sm:$0xf]
        %v2135 = vld [vmem:[%s2133 + $0x4] sm:$0xf]
        %v2136 = vld [vmem:[%s2133 + $0x8] sm:$0xf]
        %v2137 = vld [vmem:[%s2133 + $0xc] sm:$0xf]
        %v2142 = vunpack.c.l.b16 %v2134
        %v2143 = vunpack.c.l.b16 %v2135
        %v2144 = vunpack.c.l.b16 %v2136
        %v2145 = vunpack.c.l.b16 %v2137
        %v2146 = vpack.c.b16 %v2143, %v2142
        %v2147 = vpack.c.b16 %v2145, %v2144
        %v2151 = vsel %vm1210, %v2132, 0
        %2153 = vmatprep.subr.bf16.mxu0 0
        %2154 = vmatpush1.bf16.msra.mxu0 %v2146
        %2155 = vmatprep.subr.bf16.mxu0 0
        %2156 = vmatpush1.bf16.msra.mxu0 %v2147
        %2157 = vmatprep.subr.bf16.mxu0 0
        %2158 = vmatpush1.bf16.msra.mxu0 0
        %2159 = vmatprep.subr.bf16.mxu0 0
        %2160 = vmatpush1.bf16.msra.mxu0 0
        %2161 = vmatprep.subr.bf16.mxu0 0
        %2162 = vmatpush1.bf16.msra.mxu0 0
        %2163 = vmatprep.subr.bf16.mxu0 0
        %2164 = vmatpush1.bf16.msra.mxu0 0
        %2165 = vmatprep.subr.bf16.mxu0 0
        %2166 = vmatpush1.bf16.msra.mxu0 0
        %2167 = vmatprep.subr.bf16.mxu0 0
        %2168 = vmatpush1.bf16.msra.mxu0 0
        %2169 = vmatprep.subr.bf16.mxu0 0
        %2170 = vmatpush1.bf16.msra.mxu0 0
        %2171 = vmatprep.subr.bf16.mxu0 0
        %2172 = vmatpush1.bf16.msra.mxu0 0
        %2173 = vmatprep.subr.bf16.mxu0 0
        %2174 = vmatpush1.bf16.msra.mxu0 0
        %2175 = vmatprep.subr.bf16.mxu0 0
        %2176 = vmatpush1.bf16.msra.mxu0 0
        %2177 = vmatprep.subr.bf16.mxu0 0
        %2178 = vmatpush1.bf16.msra.mxu0 0
        %2179 = vmatprep.subr.bf16.mxu0 0
        %2180 = vmatpush1.bf16.msra.mxu0 0
        %2181 = vmatprep.subr.bf16.mxu0 0
        %2182 = vmatpush1.bf16.msra.mxu0 0
        %2183 = vmatprep.subr.bf16.mxu0 0
        %2184 = vmatpush1.bf16.msra.mxu0 0
        %2185 = vmatprep.mubr.bf16.mxu0 0
        %2186 = vmatmul.mubr.bf16.gmra.mrb[0].mxu0 %v2151
        %v2187 = vpop.f32.mrb[0].mxu0
        %v2188 = vadd.f32 0.0, %v2187
        %v2189 = vpop.f32.mrb[0].mxu0
        %v2190 = vpop.f32.mrb[0].mxu0
        %v2191 = vpop.f32.mrb[0].mxu0
        %2192 = vdwg.mxu0
        %v2193 = vadd.f32 %v2126, %v2188
        %v2194 = vld [vmem:[%s1401] ss:$2 sm:$0xf]
        %v2195 = vpack.c.bf16 %v2194, %v2194
        %s2196 = scalar_lea.vmem %s29, 48
        %v2197 = vld [vmem:[%s2196] sm:$0xf]
        %v2198 = vld [vmem:[%s2196 + $0x4] sm:$0xf]
        %v2199 = vld [vmem:[%s2196 + $0x8] sm:$0xf]
        %v2200 = vld [vmem:[%s2196 + $0xc] sm:$0xf]
        %v2205 = vunpack.c.l.b16 %v2197
        %v2206 = vunpack.c.l.b16 %v2198
        %v2207 = vunpack.c.l.b16 %v2199
        %v2208 = vunpack.c.l.b16 %v2200
        %v2209 = vpack.c.b16 %v2206, %v2205
        %v2210 = vpack.c.b16 %v2208, %v2207
        %v2214 = vsel %vm1210, %v2195, 0
        %2216 = vmatprep.subr.bf16.mxu0 0
        %2217 = vmatpush1.bf16.msra.mxu0 %v2209
        %2218 = vmatprep.subr.bf16.mxu0 0
        %2219 = vmatpush1.bf16.msra.mxu0 %v2210
        %2220 = vmatprep.subr.bf16.mxu0 0
        %2221 = vmatpush1.bf16.msra.mxu0 0
        %2222 = vmatprep.subr.bf16.mxu0 0
        %2223 = vmatpush1.bf16.msra.mxu0 0
        %2224 = vmatprep.subr.bf16.mxu0 0
        %2225 = vmatpush1.bf16.msra.mxu0 0
        %2226 = vmatprep.subr.bf16.mxu0 0
        %2227 = vmatpush1.bf16.msra.mxu0 0
        %2228 = vmatprep.subr.bf16.mxu0 0
        %2229 = vmatpush1.bf16.msra.mxu0 0
        %2230 = vmatprep.subr.bf16.mxu0 0
        %2231 = vmatpush1.bf16.msra.mxu0 0
        %2232 = vmatprep.subr.bf16.mxu0 0
        %2233 = vmatpush1.bf16.msra.mxu0 0
        %2234 = vmatprep.subr.bf16.mxu0 0
        %2235 = vmatpush1.bf16.msra.mxu0 0
        %2236 = vmatprep.subr.bf16.mxu0 0
        %2237 = vmatpush1.bf16.msra.mxu0 0
        %2238 = vmatprep.subr.bf16.mxu0 0
        %2239 = vmatpush1.bf16.msra.mxu0 0
        %2240 = vmatprep.subr.bf16.mxu0 0
        %2241 = vmatpush1.bf16.msra.mxu0 0
        %2242 = vmatprep.subr.bf16.mxu0 0
        %2243 = vmatpush1.bf16.msra.mxu0 0
        %2244 = vmatprep.subr.bf16.mxu0 0
        %2245 = vmatpush1.bf16.msra.mxu0 0
        %2246 = vmatprep.subr.bf16.mxu0 0
        %2247 = vmatpush1.bf16.msra.mxu0 0
        %2248 = vmatprep.mubr.bf16.mxu0 0
        %2249 = vmatmul.mubr.bf16.gmra.mrb[0].mxu0 %v2214
        %v2250 = vpop.f32.mrb[0].mxu0
        %v2251 = vadd.f32 0.0, %v2250
        %v2252 = vpop.f32.mrb[0].mxu0
        %v2253 = vpop.f32.mrb[0].mxu0
        %v2254 = vpop.f32.mrb[0].mxu0
        %2255 = vdwg.mxu0
        %v2256 = vadd.f32 %v2193, %v2251
        %v2257 = vld [vmem:[%s31] sm:$0x1]
        %v2259 = vlaneseq
        %v2260 = vshrl.u32 %v2259, 7
        %v2261 = vsub.s32 0, %v2260
        %v2262 = vrot.slane %v2257, %v2261
        %v2264 = vadd.f32 %v2256, %v2262
        %v2265 = vmax.f32 %v2264, 0.0
        %2266 = vst.msk [vmem:[#allocation3] sm:$0x3f] %vm1474, 0.0
        %vm2267 = vcmask 257024
        %2268 = vst.msk [vmem:[#allocation3 + $0x6] sm:$0xf] %vm2267, %v2265
        %v2269 = vld [vmem:[#allocation3] sm:$0xf]
        %v2270 = vpack.c.bf16 %v2269, %v2269
        %v2271 = vld [vmem:[%s33] sm:$0xf]
        %v2272 = vld [vmem:[%s33 + $0x4] sm:$0xf]
        %v2273 = vld [vmem:[%s33 + $0x8] sm:$0xf]
        %v2274 = vld [vmem:[%s33 + $0xc] sm:$0xf]
        %v2275 = vld [vmem:[#allocation3 + $0x3] sm:$0xf]
        %v2276 = vpack.c.bf16 %v2275, %v2275
        %s2277 = scalar_lea.vmem %s33, 16
        %v2278 = vld [vmem:[%s2277] sm:$0xf]
        %v2279 = vld [vmem:[%s2277 + $0x4] sm:$0xf]
        %v2280 = vld [vmem:[%s2277 + $0x8] sm:$0xf]
        %v2281 = vld [vmem:[%s2277 + $0xc] sm:$0xf]
        %v2286 = vunpack.c.l.b16 %v2278
        %v2287 = vunpack.c.l.b16 %v2279
        %v2288 = vunpack.c.l.b16 %v2280
        %v2289 = vunpack.c.l.b16 %v2281
        %v2290 = vpack.c.b16 %v2287, %v2286
        %v2291 = vpack.c.b16 %v2289, %v2288
        %v2295 = vsel %vm1210, %v2276, 0
        %2297 = vmatprep.subr.bf16.mxu0 0
        %2298 = vmatpush1.bf16.msra.mxu0 %v2290
        %2299 = vmatprep.subr.bf16.mxu0 0
        %2300 = vmatpush1.bf16.msra.mxu0 %v2291
        %2301 = vmatprep.subr.bf16.mxu0 0
        %2302 = vmatpush1.bf16.msra.mxu0 0
        %2303 = vmatprep.subr.bf16.mxu0 0
        %2304 = vmatpush1.bf16.msra.mxu0 0
        %2305 = vmatprep.subr.bf16.mxu0 0
        %2306 = vmatpush1.bf16.msra.mxu0 0
        %2307 = vmatprep.subr.bf16.mxu0 0
        %2308 = vmatpush1.bf16.msra.mxu0 0
        %2309 = vmatprep.subr.bf16.mxu0 0
        %2310 = vmatpush1.bf16.msra.mxu0 0
        %2311 = vmatprep.subr.bf16.mxu0 0
        %2312 = vmatpush1.bf16.msra.mxu0 0
        %2313 = vmatprep.subr.bf16.mxu0 0
        %2314 = vmatpush1.bf16.msra.mxu0 0
        %2315 = vmatprep.subr.bf16.mxu0 0
        %2316 = vmatpush1.bf16.msra.mxu0 0
        %2317 = vmatprep.subr.bf16.mxu0 0
        %2318 = vmatpush1.bf16.msra.mxu0 0
        %2319 = vmatprep.subr.bf16.mxu0 0
        %2320 = vmatpush1.bf16.msra.mxu0 0
        %2321 = vmatprep.subr.bf16.mxu0 0
        %2322 = vmatpush1.bf16.msra.mxu0 0
        %2323 = vmatprep.subr.bf16.mxu0 0
        %2324 = vmatpush1.bf16.msra.mxu0 0
        %2325 = vmatprep.subr.bf16.mxu0 0
        %2326 = vmatpush1.bf16.msra.mxu0 0
        %2327 = vmatprep.subr.bf16.mxu0 0
        %2328 = vmatpush1.bf16.msra.mxu0 0
        %2329 = vmatprep.mubr.bf16.mxu0 0
        %2330 = vmatmul.mubr.bf16.gmra.mrb[0].mxu0 %v2295
        %v2331 = vpop.f32.mrb[0].mxu0
        %v2332 = vadd.f32 0.0, %v2331
        %v2333 = vpop.f32.mrb[0].mxu0
        %v2334 = vpop.f32.mrb[0].mxu0
        %v2335 = vpop.f32.mrb[0].mxu0
        %2336 = vdwg.mxu0
        %v2341 = vunpack.c.l.b16 %v2271
        %v2342 = vunpack.c.l.b16 %v2272
        %v2343 = vunpack.c.l.b16 %v2273
        %v2344 = vunpack.c.l.b16 %v2274
        %v2345 = vpack.c.b16 %v2342, %v2341
        %v2346 = vpack.c.b16 %v2344, %v2343
        %v2350 = vsel %vm1210, %v2270, 0
        %2352 = vmatprep.subr.bf16.mxu0 0
        %2353 = vmatpush1.bf16.msra.mxu0 %v2345
        %2354 = vmatprep.subr.bf16.mxu0 0
        %2355 = vmatpush1.bf16.msra.mxu0 %v2346
        %2356 = vmatprep.subr.bf16.mxu0 0
        %2357 = vmatpush1.bf16.msra.mxu0 0
        %2358 = vmatprep.subr.bf16.mxu0 0
        %2359 = vmatpush1.bf16.msra.mxu0 0
        %2360 = vmatprep.subr.bf16.mxu0 0
        %2361 = vmatpush1.bf16.msra.mxu0 0
        %2362 = vmatprep.subr.bf16.mxu0 0
        %2363 = vmatpush1.bf16.msra.mxu0 0
        %2364 = vmatprep.subr.bf16.mxu0 0
        %2365 = vmatpush1.bf16.msra.mxu0 0
        %2366 = vmatprep.subr.bf16.mxu0 0
        %2367 = vmatpush1.bf16.msra.mxu0 0
        %2368 = vmatprep.subr.bf16.mxu0 0
        %2369 = vmatpush1.bf16.msra.mxu0 0
        %2370 = vmatprep.subr.bf16.mxu0 0
        %2371 = vmatpush1.bf16.msra.mxu0 0
        %2372 = vmatprep.subr.bf16.mxu0 0
        %2373 = vmatpush1.bf16.msra.mxu0 0
        %2374 = vmatprep.subr.bf16.mxu0 0
        %2375 = vmatpush1.bf16.msra.mxu0 0
        %2376 = vmatprep.subr.bf16.mxu0 0
        %2377 = vmatpush1.bf16.msra.mxu0 0
        %2378 = vmatprep.subr.bf16.mxu0 0
        %2379 = vmatpush1.bf16.msra.mxu0 0
        %2380 = vmatprep.subr.bf16.mxu0 0
        %2381 = vmatpush1.bf16.msra.mxu0 0
        %2382 = vmatprep.subr.bf16.mxu0 0
        %2383 = vmatpush1.bf16.msra.mxu0 0
        %2384 = vmatprep.mubr.bf16.mxu0 0
        %2385 = vmatmul.mubr.bf16.gmra.mrb[0].mxu0 %v2350
        %v2386 = vpop.f32.mrb[0].mxu0
        %v2387 = vadd.f32 %v2332, %v2386
        %v2388 = vpop.f32.mrb[0].mxu0
        %v2389 = vpop.f32.mrb[0].mxu0
        %v2390 = vpop.f32.mrb[0].mxu0
        %2391 = vdwg.mxu0
        %v2392 = vld [vmem:[#allocation3 + $0x6] sm:$0xf]
        %v2393 = vpack.c.bf16 %v2392, %v2392
        %s2394 = scalar_lea.vmem %s33, 32
        %v2395 = vld [vmem:[%s2394] sm:$0xf]
        %v2396 = vld [vmem:[%s2394 + $0x4] sm:$0xf]
        %v2397 = vld [vmem:[%s2394 + $0x8] sm:$0xf]
        %v2398 = vld [vmem:[%s2394 + $0xc] sm:$0xf]
        %v2403 = vunpack.c.l.b16 %v2395
        %v2404 = vunpack.c.l.b16 %v2396
        %v2405 = vunpack.c.l.b16 %v2397
        %v2406 = vunpack.c.l.b16 %v2398
        %v2407 = vpack.c.b16 %v2404, %v2403
        %v2408 = vpack.c.b16 %v2406, %v2405
        %v2412 = vsel %vm1210, %v2393, 0
        %2414 = vmatprep.subr.bf16.mxu0 0
        %2415 = vmatpush1.bf16.msra.mxu0 %v2407
        %2416 = vmatprep.subr.bf16.mxu0 0
        %2417 = vmatpush1.bf16.msra.mxu0 %v2408
        %2418 = vmatprep.subr.bf16.mxu0 0
        %2419 = vmatpush1.bf16.msra.mxu0 0
        %2420 = vmatprep.subr.bf16.mxu0 0
        %2421 = vmatpush1.bf16.msra.mxu0 0
        %2422 = vmatprep.subr.bf16.mxu0 0
        %2423 = vmatpush1.bf16.msra.mxu0 0
        %2424 = vmatprep.subr.bf16.mxu0 0
        %2425 = vmatpush1.bf16.msra.mxu0 0
        %2426 = vmatprep.subr.bf16.mxu0 0
        %2427 = vmatpush1.bf16.msra.mxu0 0
        %2428 = vmatprep.subr.bf16.mxu0 0
        %2429 = vmatpush1.bf16.msra.mxu0 0
        %2430 = vmatprep.subr.bf16.mxu0 0
        %2431 = vmatpush1.bf16.msra.mxu0 0
        %2432 = vmatprep.subr.bf16.mxu0 0
        %2433 = vmatpush1.bf16.msra.mxu0 0
        %2434 = vmatprep.subr.bf16.mxu0 0
        %2435 = vmatpush1.bf16.msra.mxu0 0
        %2436 = vmatprep.subr.bf16.mxu0 0
        %2437 = vmatpush1.bf16.msra.mxu0 0
        %2438 = vmatprep.subr.bf16.mxu0 0
        %2439 = vmatpush1.bf16.msra.mxu0 0
        %2440 = vmatprep.subr.bf16.mxu0 0
        %2441 = vmatpush1.bf16.msra.mxu0 0
        %2442 = vmatprep.subr.bf16.mxu0 0
        %2443 = vmatpush1.bf16.msra.mxu0 0
        %2444 = vmatprep.subr.bf16.mxu0 0
        %2445 = vmatpush1.bf16.msra.mxu0 0
        %2446 = vmatprep.mubr.bf16.mxu0 0
        %2447 = vmatmul.mubr.bf16.gmra.mrb[0].mxu0 %v2412
        %v2448 = vpop.f32.mrb[0].mxu0
        %v2449 = vadd.f32 0.0, %v2448
        %v2450 = vpop.f32.mrb[0].mxu0
        %v2451 = vpop.f32.mrb[0].mxu0
        %v2452 = vpop.f32.mrb[0].mxu0
        %2453 = vdwg.mxu0
        %v2454 = vadd.f32 %v2387, %v2449
        %v2455 = vld [vmem:[%s35] sm:$0x1]
        %v2457 = vlaneseq
        %v2458 = vshrl.u32 %v2457, 7
        %v2459 = vsub.s32 0, %v2458
        %v2460 = vrot.slane %v2455, %v2459
        %v2462 = vadd.f32 %v2454, %v2460
        %v2463 = vmax.f32 %v2462, 0.0
        %v2464 = vpack.c.bf16 %v2463, %v2463
        %v2465 = vld [vmem:[%s37] sm:$0xf]
        %v2466 = vld [vmem:[%s37 + $0x4] sm:$0xf]
        %v2467 = vld [vmem:[%s37 + $0x8] sm:$0xf]
        %v2468 = vld [vmem:[%s37 + $0xc] sm:$0xf]
        %v2469 = vld [vmem:[%s39] sm:$0x1]
        %v2471 = vlaneseq
        %v2472 = vshrl.u32 %v2471, 7
        %v2473 = vsub.s32 0, %v2472
        %v2474 = vrot.slane %v2469, %v2473
        %v2480 = vunpack.c.l.b16 %v2465
        %v2481 = vunpack.c.l.b16 %v2466
        %v2482 = vunpack.c.l.b16 %v2467
        %v2483 = vunpack.c.l.b16 %v2468
        %v2484 = vpack.c.b16 %v2481, %v2480
        %v2485 = vpack.c.b16 %v2483, %v2482
        %v2489 = vsel %vm1210, %v2464, 0
        %2491 = vmatprep.subr.bf16.mxu0 0
        %2492 = vmatpush1.bf16.msra.mxu0 %v2484
        %2493 = vmatprep.subr.bf16.mxu0 0
        %2494 = vmatpush1.bf16.msra.mxu0 %v2485
        %2495 = vmatprep.subr.bf16.mxu0 0
        %2496 = vmatpush1.bf16.msra.mxu0 0
        %2497 = vmatprep.subr.bf16.mxu0 0
        %2498 = vmatpush1.bf16.msra.mxu0 0
        %2499 = vmatprep.subr.bf16.mxu0 0
        %2500 = vmatpush1.bf16.msra.mxu0 0
        %2501 = vmatprep.subr.bf16.mxu0 0
        %2502 = vmatpush1.bf16.msra.mxu0 0
        %2503 = vmatprep.subr.bf16.mxu0 0
        %2504 = vmatpush1.bf16.msra.mxu0 0
        %2505 = vmatprep.subr.bf16.mxu0 0
        %2506 = vmatpush1.bf16.msra.mxu0 0
        %2507 = vmatprep.subr.bf16.mxu0 0
        %2508 = vmatpush1.bf16.msra.mxu0 0
        %2509 = vmatprep.subr.bf16.mxu0 0
        %2510 = vmatpush1.bf16.msra.mxu0 0
        %2511 = vmatprep.subr.bf16.mxu0 0
        %2512 = vmatpush1.bf16.msra.mxu0 0
        %2513 = vmatprep.subr.bf16.mxu0 0
        %2514 = vmatpush1.bf16.msra.mxu0 0
        %2515 = vmatprep.subr.bf16.mxu0 0
        %2516 = vmatpush1.bf16.msra.mxu0 0
        %2517 = vmatprep.subr.bf16.mxu0 0
        %2518 = vmatpush1.bf16.msra.mxu0 0
        %2519 = vmatprep.subr.bf16.mxu0 0
        %2520 = vmatpush1.bf16.msra.mxu0 0
        %2521 = vmatprep.subr.bf16.mxu0 0
        %2522 = vmatpush1.bf16.msra.mxu0 0
        %2523 = vmatprep.mubr.bf16.mxu0 0
        %2524 = vmatmul.mubr.bf16.gmra.mrb[0].mxu0 %v2489
        %v2525 = vpop.f32.mrb[0].mxu0
        %v2526 = vadd.f32 %v2474, %v2525
        %v2527 = vpop.f32.mrb[0].mxu0
        %v2528 = vpop.f32.mrb[0].mxu0
        %v2529 = vpop.f32.mrb[0].mxu0
        %2530 = vdwg.mxu0
        %v2531 = vadd.f32 %v2526, %v2264
        %v2532 = vmax.f32 %v2531, 0.0
        %2533 = vst.msk [vmem:[#allocation3] sm:$0x3] %vm1208, 0.0
        %2534 = vst.msk [vmem:[#allocation3 + $0x2] sm:$0xf] %vm2267, %v2532
        %v2535 = vld [vmem:[#allocation3] sm:$0xf]
        %v2536 = vpack.c.bf16 %v2535, %v2535
        %v2537 = vld [vmem:[%s41] sm:$0xf]
        %v2538 = vld [vmem:[%s41 + $0x4] sm:$0xf]
        %v2539 = vld [vmem:[%s41 + $0x8] sm:$0xf]
        %v2540 = vld [vmem:[%s41 + $0xc] sm:$0xf]
        %v2541 = vld [vmem:[#allocation3 + $0x1] sm:$0xf]
        %v2542 = vpack.c.bf16 %v2541, %v2541
        %s2543 = scalar_lea.vmem %s41, 16
        %v2544 = vld [vmem:[%s2543] sm:$0xf]
        %v2545 = vld [vmem:[%s2543 + $0x4] sm:$0xf]
        %v2546 = vld [vmem:[%s2543 + $0x8] sm:$0xf]
        %v2547 = vld [vmem:[%s2543 + $0xc] sm:$0xf]
        %v2552 = vunpack.c.l.b16 %v2544
        %v2553 = vunpack.c.l.b16 %v2545
        %v2554 = vunpack.c.l.b16 %v2546
        %v2555 = vunpack.c.l.b16 %v2547
        %v2556 = vpack.c.b16 %v2553, %v2552
        %v2557 = vpack.c.b16 %v2555, %v2554
        %v2561 = vsel %vm1210, %v2542, 0
        %2563 = vmatprep.subr.bf16.mxu0 0
        %2564 = vmatpush1.bf16.msra.mxu0 %v2556
        %2565 = vmatprep.subr.bf16.mxu0 0
        %2566 = vmatpush1.bf16.msra.mxu0 %v2557
        %2567 = vmatprep.subr.bf16.mxu0 0
        %2568 = vmatpush1.bf16.msra.mxu0 0
        %2569 = vmatprep.subr.bf16.mxu0 0
        %2570 = vmatpush1.bf16.msra.mxu0 0
        %2571 = vmatprep.subr.bf16.mxu0 0
        %2572 = vmatpush1.bf16.msra.mxu0 0
        %2573 = vmatprep.subr.bf16.mxu0 0
        %2574 = vmatpush1.bf16.msra.mxu0 0
        %2575 = vmatprep.subr.bf16.mxu0 0
        %2576 = vmatpush1.bf16.msra.mxu0 0
        %2577 = vmatprep.subr.bf16.mxu0 0
        %2578 = vmatpush1.bf16.msra.mxu0 0
        %2579 = vmatprep.subr.bf16.mxu0 0
        %2580 = vmatpush1.bf16.msra.mxu0 0
        %2581 = vmatprep.subr.bf16.mxu0 0
        %2582 = vmatpush1.bf16.msra.mxu0 0
        %2583 = vmatprep.subr.bf16.mxu0 0
        %2584 = vmatpush1.bf16.msra.mxu0 0
        %2585 = vmatprep.subr.bf16.mxu0 0
        %2586 = vmatpush1.bf16.msra.mxu0 0
        %2587 = vmatprep.subr.bf16.mxu0 0
        %2588 = vmatpush1.bf16.msra.mxu0 0
        %2589 = vmatprep.subr.bf16.mxu0 0
        %2590 = vmatpush1.bf16.msra.mxu0 0
        %2591 = vmatprep.subr.bf16.mxu0 0
        %2592 = vmatpush1.bf16.msra.mxu0 0
        %2593 = vmatprep.subr.bf16.mxu0 0
        %2594 = vmatpush1.bf16.msra.mxu0 0
        %2595 = vmatprep.mubr.bf16.mxu0 0
        %2596 = vmatmul.mubr.bf16.gmra.mrb[0].mxu0 %v2561
        %v2597 = vpop.f32.mrb[0].mxu0
        %v2598 = vadd.f32 0.0, %v2597
        %v2599 = vpop.f32.mrb[0].mxu0
        %v2600 = vpop.f32.mrb[0].mxu0
        %v2601 = vpop.f32.mrb[0].mxu0
        %2602 = vdwg.mxu0
        %v2607 = vunpack.c.l.b16 %v2537
        %v2608 = vunpack.c.l.b16 %v2538
        %v2609 = vunpack.c.l.b16 %v2539
        %v2610 = vunpack.c.l.b16 %v2540
        %v2611 = vpack.c.b16 %v2608, %v2607
        %v2612 = vpack.c.b16 %v2610, %v2609
        %v2616 = vsel %vm1210, %v2536, 0
        %2618 = vmatprep.subr.bf16.mxu0 0
        %2619 = vmatpush1.bf16.msra.mxu0 %v2611
        %2620 = vmatprep.subr.bf16.mxu0 0
        %2621 = vmatpush1.bf16.msra.mxu0 %v2612
        %2622 = vmatprep.subr.bf16.mxu0 0
        %2623 = vmatpush1.bf16.msra.mxu0 0
        %2624 = vmatprep.subr.bf16.mxu0 0
        %2625 = vmatpush1.bf16.msra.mxu0 0
        %2626 = vmatprep.subr.bf16.mxu0 0
        %2627 = vmatpush1.bf16.msra.mxu0 0
        %2628 = vmatprep.subr.bf16.mxu0 0
        %2629 = vmatpush1.bf16.msra.mxu0 0
        %2630 = vmatprep.subr.bf16.mxu0 0
        %2631 = vmatpush1.bf16.msra.mxu0 0
        %2632 = vmatprep.subr.bf16.mxu0 0
        %2633 = vmatpush1.bf16.msra.mxu0 0
        %2634 = vmatprep.subr.bf16.mxu0 0
        %2635 = vmatpush1.bf16.msra.mxu0 0
        %2636 = vmatprep.subr.bf16.mxu0 0
        %2637 = vmatpush1.bf16.msra.mxu0 0
        %2638 = vmatprep.subr.bf16.mxu0 0
        %2639 = vmatpush1.bf16.msra.mxu0 0
        %2640 = vmatprep.subr.bf16.mxu0 0
        %2641 = vmatpush1.bf16.msra.mxu0 0
        %2642 = vmatprep.subr.bf16.mxu0 0
        %2643 = vmatpush1.bf16.msra.mxu0 0
        %2644 = vmatprep.subr.bf16.mxu0 0
        %2645 = vmatpush1.bf16.msra.mxu0 0
        %2646 = vmatprep.subr.bf16.mxu0 0
        %2647 = vmatpush1.bf16.msra.mxu0 0
        %2648 = vmatprep.subr.bf16.mxu0 0
        %2649 = vmatpush1.bf16.msra.mxu0 0
        %2650 = vmatprep.mubr.bf16.mxu0 0
        %2651 = vmatmul.mubr.bf16.gmra.mrb[0].mxu0 %v2616
        %v2652 = vpop.f32.mrb[0].mxu0
        %v2653 = vadd.f32 %v2598, %v2652
        %v2654 = vpop.f32.mrb[0].mxu0
        %v2655 = vpop.f32.mrb[0].mxu0
        %v2656 = vpop.f32.mrb[0].mxu0
        %2657 = vdwg.mxu0
        %v2658 = vld [vmem:[#allocation3 + $0x2] sm:$0xf]
        %v2659 = vpack.c.bf16 %v2658, %v2658
        %s2660 = scalar_lea.vmem %s41, 32
        %v2661 = vld [vmem:[%s2660] sm:$0xf]
        %v2662 = vld [vmem:[%s2660 + $0x4] sm:$0xf]
        %v2663 = vld [vmem:[%s2660 + $0x8] sm:$0xf]
        %v2664 = vld [vmem:[%s2660 + $0xc] sm:$0xf]
        %v2669 = vunpack.c.l.b16 %v2661
        %v2670 = vunpack.c.l.b16 %v2662
        %v2671 = vunpack.c.l.b16 %v2663
        %v2672 = vunpack.c.l.b16 %v2664
        %v2673 = vpack.c.b16 %v2670, %v2669
        %v2674 = vpack.c.b16 %v2672, %v2671
        %v2678 = vsel %vm1210, %v2659, 0
        %2680 = vmatprep.subr.bf16.mxu0 0
        %2681 = vmatpush1.bf16.msra.mxu0 %v2673
        %2682 = vmatprep.subr.bf16.mxu0 0
        %2683 = vmatpush1.bf16.msra.mxu0 %v2674
        %2684 = vmatprep.subr.bf16.mxu0 0
        %2685 = vmatpush1.bf16.msra.mxu0 0
        %2686 = vmatprep.subr.bf16.mxu0 0
        %2687 = vmatpush1.bf16.msra.mxu0 0
        %2688 = vmatprep.subr.bf16.mxu0 0
        %2689 = vmatpush1.bf16.msra.mxu0 0
        %2690 = vmatprep.subr.bf16.mxu0 0
        %2691 = vmatpush1.bf16.msra.mxu0 0
        %2692 = vmatprep.subr.bf16.mxu0 0
        %2693 = vmatpush1.bf16.msra.mxu0 0
        %2694 = vmatprep.subr.bf16.mxu0 0
        %2695 = vmatpush1.bf16.msra.mxu0 0
        %2696 = vmatprep.subr.bf16.mxu0 0
        %2697 = vmatpush1.bf16.msra.mxu0 0
        %2698 = vmatprep.subr.bf16.mxu0 0
        %2699 = vmatpush1.bf16.msra.mxu0 0
        %2700 = vmatprep.subr.bf16.mxu0 0
        %2701 = vmatpush1.bf16.msra.mxu0 0
        %2702 = vmatprep.subr.bf16.mxu0 0
        %2703 = vmatpush1.bf16.msra.mxu0 0
        %2704 = vmatprep.subr.bf16.mxu0 0
        %2705 = vmatpush1.bf16.msra.mxu0 0
        %2706 = vmatprep.subr.bf16.mxu0 0
        %2707 = vmatpush1.bf16.msra.mxu0 0
        %2708 = vmatprep.subr.bf16.mxu0 0
        %2709 = vmatpush1.bf16.msra.mxu0 0
        %2710 = vmatprep.subr.bf16.mxu0 0
        %2711 = vmatpush1.bf16.msra.mxu0 0
        %2712 = vmatprep.mubr.bf16.mxu0 0
        %2713 = vmatmul.mubr.bf16.gmra.mrb[0].mxu0 %v2678
        %v2714 = vpop.f32.mrb[0].mxu0
        %v2715 = vadd.f32 0.0, %v2714
        %v2716 = vpop.f32.mrb[0].mxu0
        %v2717 = vpop.f32.mrb[0].mxu0
        %v2718 = vpop.f32.mrb[0].mxu0
        %2719 = vdwg.mxu0
        %v2720 = vadd.f32 %v2653, %v2715
        %v2721 = vld [vmem:[%s43] sm:$0x1]
        %v2723 = vlaneseq
        %v2724 = vshrl.u32 %v2723, 7
        %v2725 = vsub.s32 0, %v2724
        %v2726 = vrot.slane %v2721, %v2725
        %v2728 = vadd.f32 %v2720, %v2726
        %v2729 = vmax.f32 %v2728, 0.0
        %v2730 = vpack.c.bf16 %v2729, %v2729
        %v2731 = vld [vmem:[%s45] sm:$0xf]
        %v2732 = vld [vmem:[%s45 + $0x4] sm:$0xf]
        %v2733 = vld [vmem:[%s45 + $0x8] sm:$0xf]
        %v2734 = vld [vmem:[%s45 + $0xc] sm:$0xf]
        %v2735 = vld [vmem:[%s47] sm:$0x1]
        %v2737 = vlaneseq
        %v2738 = vshrl.u32 %v2737, 7
        %v2739 = vsub.s32 0, %v2738
        %v2740 = vrot.slane %v2735, %v2739
        %v2746 = vunpack.c.l.b16 %v2731
        %v2747 = vunpack.c.l.b16 %v2732
        %v2748 = vunpack.c.l.b16 %v2733
        %v2749 = vunpack.c.l.b16 %v2734
        %v2750 = vpack.c.b16 %v2747, %v2746
        %v2751 = vpack.c.b16 %v2749, %v2748
        %v2755 = vsel %vm1210, %v2730, 0
        %2757 = vmatprep.subr.bf16.mxu0 0
        %2758 = vmatpush1.bf16.msra.mxu0 %v2750
        %2759 = vmatprep.subr.bf16.mxu0 0
        %2760 = vmatpush1.bf16.msra.mxu0 %v2751
        %2761 = vmatprep.subr.bf16.mxu0 0
        %2762 = vmatpush1.bf16.msra.mxu0 0
        %2763 = vmatprep.subr.bf16.mxu0 0
        %2764 = vmatpush1.bf16.msra.mxu0 0
        %2765 = vmatprep.subr.bf16.mxu0 0
        %2766 = vmatpush1.bf16.msra.mxu0 0
        %2767 = vmatprep.subr.bf16.mxu0 0
        %2768 = vmatpush1.bf16.msra.mxu0 0
        %2769 = vmatprep.subr.bf16.mxu0 0
        %2770 = vmatpush1.bf16.msra.mxu0 0
        %2771 = vmatprep.subr.bf16.mxu0 0
        %2772 = vmatpush1.bf16.msra.mxu0 0
        %2773 = vmatprep.subr.bf16.mxu0 0
        %2774 = vmatpush1.bf16.msra.mxu0 0
        %2775 = vmatprep.subr.bf16.mxu0 0
        %2776 = vmatpush1.bf16.msra.mxu0 0
        %2777 = vmatprep.subr.bf16.mxu0 0
        %2778 = vmatpush1.bf16.msra.mxu0 0
        %2779 = vmatprep.subr.bf16.mxu0 0
        %2780 = vmatpush1.bf16.msra.mxu0 0
        %2781 = vmatprep.subr.bf16.mxu0 0
        %2782 = vmatpush1.bf16.msra.mxu0 0
        %2783 = vmatprep.subr.bf16.mxu0 0
        %2784 = vmatpush1.bf16.msra.mxu0 0
        %2785 = vmatprep.subr.bf16.mxu0 0
        %2786 = vmatpush1.bf16.msra.mxu0 0
        %2787 = vmatprep.subr.bf16.mxu0 0
        %2788 = vmatpush1.bf16.msra.mxu0 0
        %2789 = vmatprep.mubr.bf16.mxu0 0
        %2790 = vmatmul.mubr.bf16.gmra.mrb[0].mxu0 %v2755
        %v2791 = vpop.f32.mrb[0].mxu0
        %v2792 = vadd.f32 %v2740, %v2791
        %v2793 = vpop.f32.mrb[0].mxu0
        %v2794 = vpop.f32.mrb[0].mxu0
        %v2795 = vpop.f32.mrb[0].mxu0
        %2796 = vdwg.mxu0
        %v2797 = vadd.f32 %v2792, %v2531
        %2798 = vst.msk [vmem:[#allocation3] sm:$0x3] %vm1208, 0.0
        %2799 = vst.msk [vmem:[#allocation3 + $0x2] sm:$0xf] %vm2267, %v2797
        %v2800 = vld [vmem:[#allocation3] sm:$0xf]
        %v2801 = vpack.c.bf16 %v2800, %v2800
        %v2802 = vld [vmem:[%s49] sm:$0xf]
        %v2803 = vld [vmem:[%s49 + $0x4] sm:$0xf]
        %v2804 = vld [vmem:[%s49 + $0x8] sm:$0xf]
        %v2805 = vld [vmem:[%s49 + $0xc] sm:$0xf]
        %v2806 = vld [vmem:[#allocation3 + $0x1] sm:$0xf]
        %v2807 = vpack.c.bf16 %v2806, %v2806
        %s2808 = scalar_lea.vmem %s49, 16
        %v2809 = vld [vmem:[%s2808] sm:$0xf]
        %v2810 = vld [vmem:[%s2808 + $0x4] sm:$0xf]
        %v2811 = vld [vmem:[%s2808 + $0x8] sm:$0xf]
        %v2812 = vld [vmem:[%s2808 + $0xc] sm:$0xf]
        %v2817 = vunpack.c.l.b16 %v2809
        %v2818 = vunpack.c.l.b16 %v2810
        %v2819 = vunpack.c.l.b16 %v2811
        %v2820 = vunpack.c.l.b16 %v2812
        %v2821 = vpack.c.b16 %v2818, %v2817
        %v2822 = vpack.c.b16 %v2820, %v2819
        %v2826 = vsel %vm1210, %v2807, 0
        %2828 = vmatprep.subr.bf16.mxu0 0
        %2829 = vmatpush1.bf16.msra.mxu0 %v2821
        %2830 = vmatprep.subr.bf16.mxu0 0
        %2831 = vmatpush1.bf16.msra.mxu0 %v2822
        %2832 = vmatprep.subr.bf16.mxu0 0
        %2833 = vmatpush1.bf16.msra.mxu0 0
        %2834 = vmatprep.subr.bf16.mxu0 0
        %2835 = vmatpush1.bf16.msra.mxu0 0
        %2836 = vmatprep.subr.bf16.mxu0 0
        %2837 = vmatpush1.bf16.msra.mxu0 0
        %2838 = vmatprep.subr.bf16.mxu0 0
        %2839 = vmatpush1.bf16.msra.mxu0 0
        %2840 = vmatprep.subr.bf16.mxu0 0
        %2841 = vmatpush1.bf16.msra.mxu0 0
        %2842 = vmatprep.subr.bf16.mxu0 0
        %2843 = vmatpush1.bf16.msra.mxu0 0
        %2844 = vmatprep.subr.bf16.mxu0 0
        %2845 = vmatpush1.bf16.msra.mxu0 0
        %2846 = vmatprep.subr.bf16.mxu0 0
        %2847 = vmatpush1.bf16.msra.mxu0 0
        %2848 = vmatprep.subr.bf16.mxu0 0
        %2849 = vmatpush1.bf16.msra.mxu0 0
        %2850 = vmatprep.subr.bf16.mxu0 0
        %2851 = vmatpush1.bf16.msra.mxu0 0
        %2852 = vmatprep.subr.bf16.mxu0 0
        %2853 = vmatpush1.bf16.msra.mxu0 0
        %2854 = vmatprep.subr.bf16.mxu0 0
        %2855 = vmatpush1.bf16.msra.mxu0 0
        %2856 = vmatprep.subr.bf16.mxu0 0
        %2857 = vmatpush1.bf16.msra.mxu0 0
        %2858 = vmatprep.subr.bf16.mxu0 0
        %2859 = vmatpush1.bf16.msra.mxu0 0
        %2860 = vmatprep.mubr.bf16.mxu0 0
        %2861 = vmatmul.mubr.bf16.gmra.mrb[0].mxu0 %v2826
        %v2862 = vpop.f32.mrb[0].mxu0
        %v2863 = vadd.f32 0.0, %v2862
        %v2864 = vpop.f32.mrb[0].mxu0
        %v2865 = vpop.f32.mrb[0].mxu0
        %v2866 = vpop.f32.mrb[0].mxu0
        %2867 = vdwg.mxu0
        %v2872 = vunpack.c.l.b16 %v2802
        %v2873 = vunpack.c.l.b16 %v2803
        %v2874 = vunpack.c.l.b16 %v2804
        %v2875 = vunpack.c.l.b16 %v2805
        %v2876 = vpack.c.b16 %v2873, %v2872
        %v2877 = vpack.c.b16 %v2875, %v2874
        %v2881 = vsel %vm1210, %v2801, 0
        %2883 = vmatprep.subr.bf16.mxu0 0
        %2884 = vmatpush1.bf16.msra.mxu0 %v2876
        %2885 = vmatprep.subr.bf16.mxu0 0
        %2886 = vmatpush1.bf16.msra.mxu0 %v2877
        %2887 = vmatprep.subr.bf16.mxu0 0
        %2888 = vmatpush1.bf16.msra.mxu0 0
        %2889 = vmatprep.subr.bf16.mxu0 0
        %2890 = vmatpush1.bf16.msra.mxu0 0
        %2891 = vmatprep.subr.bf16.mxu0 0
        %2892 = vmatpush1.bf16.msra.mxu0 0
        %2893 = vmatprep.subr.bf16.mxu0 0
        %2894 = vmatpush1.bf16.msra.mxu0 0
        %2895 = vmatprep.subr.bf16.mxu0 0
        %2896 = vmatpush1.bf16.msra.mxu0 0
        %2897 = vmatprep.subr.bf16.mxu0 0
        %2898 = vmatpush1.bf16.msra.mxu0 0
        %2899 = vmatprep.subr.bf16.mxu0 0
        %2900 = vmatpush1.bf16.msra.mxu0 0
        %2901 = vmatprep.subr.bf16.mxu0 0
        %2902 = vmatpush1.bf16.msra.mxu0 0
        %2903 = vmatprep.subr.bf16.mxu0 0
        %2904 = vmatpush1.bf16.msra.mxu0 0
        %2905 = vmatprep.subr.bf16.mxu0 0
        %2906 = vmatpush1.bf16.msra.mxu0 0
        %2907 = vmatprep.subr.bf16.mxu0 0
        %2908 = vmatpush1.bf16.msra.mxu0 0
        %2909 = vmatprep.subr.bf16.mxu0 0
        %2910 = vmatpush1.bf16.msra.mxu0 0
        %2911 = vmatprep.subr.bf16.mxu0 0
        %2912 = vmatpush1.bf16.msra.mxu0 0
        %2913 = vmatprep.subr.bf16.mxu0 0
        %2914 = vmatpush1.bf16.msra.mxu0 0
        %2915 = vmatprep.mubr.bf16.mxu0 0
        %2916 = vmatmul.mubr.bf16.gmra.mrb[0].mxu0 %v2881
        %v2917 = vpop.f32.mrb[0].mxu0
        %v2918 = vadd.f32 %v2863, %v2917
        %v2919 = vpop.f32.mrb[0].mxu0
        %v2920 = vpop.f32.mrb[0].mxu0
        %v2921 = vpop.f32.mrb[0].mxu0
        %2922 = vdwg.mxu0
        %v2923 = vld [vmem:[#allocation3 + $0x2] sm:$0xf]
        %v2924 = vpack.c.bf16 %v2923, %v2923
        %s2925 = scalar_lea.vmem %s49, 32
        %v2926 = vld [vmem:[%s2925] sm:$0xf]
        %v2927 = vld [vmem:[%s2925 + $0x4] sm:$0xf]
        %v2928 = vld [vmem:[%s2925 + $0x8] sm:$0xf]
        %v2929 = vld [vmem:[%s2925 + $0xc] sm:$0xf]
        %v2934 = vunpack.c.l.b16 %v2926
        %v2935 = vunpack.c.l.b16 %v2927
        %v2936 = vunpack.c.l.b16 %v2928
        %v2937 = vunpack.c.l.b16 %v2929
        %v2938 = vpack.c.b16 %v2935, %v2934
        %v2939 = vpack.c.b16 %v2937, %v2936
        %v2943 = vsel %vm1210, %v2924, 0
        %2945 = vmatprep.subr.bf16.mxu0 0
        %2946 = vmatpush1.bf16.msra.mxu0 %v2938
        %2947 = vmatprep.subr.bf16.mxu0 0
        %2948 = vmatpush1.bf16.msra.mxu0 %v2939
        %2949 = vmatprep.subr.bf16.mxu0 0
        %2950 = vmatpush1.bf16.msra.mxu0 0
        %2951 = vmatprep.subr.bf16.mxu0 0
        %2952 = vmatpush1.bf16.msra.mxu0 0
        %2953 = vmatprep.subr.bf16.mxu0 0
        %2954 = vmatpush1.bf16.msra.mxu0 0
        %2955 = vmatprep.subr.bf16.mxu0 0
        %2956 = vmatpush1.bf16.msra.mxu0 0
        %2957 = vmatprep.subr.bf16.mxu0 0
        %2958 = vmatpush1.bf16.msra.mxu0 0
        %2959 = vmatprep.subr.bf16.mxu0 0
        %2960 = vmatpush1.bf16.msra.mxu0 0
        %2961 = vmatprep.subr.bf16.mxu0 0
        %2962 = vmatpush1.bf16.msra.mxu0 0
        %2963 = vmatprep.subr.bf16.mxu0 0
        %2964 = vmatpush1.bf16.msra.mxu0 0
        %2965 = vmatprep.subr.bf16.mxu0 0
        %2966 = vmatpush1.bf16.msra.mxu0 0
        %2967 = vmatprep.subr.bf16.mxu0 0
        %2968 = vmatpush1.bf16.msra.mxu0 0
        %2969 = vmatprep.subr.bf16.mxu0 0
        %2970 = vmatpush1.bf16.msra.mxu0 0
        %2971 = vmatprep.subr.bf16.mxu0 0
        %2972 = vmatpush1.bf16.msra.mxu0 0
        %2973 = vmatprep.subr.bf16.mxu0 0
        %2974 = vmatpush1.bf16.msra.mxu0 0
        %2975 = vmatprep.subr.bf16.mxu0 0
        %2976 = vmatpush1.bf16.msra.mxu0 0
        %2977 = vmatprep.mubr.bf16.mxu0 0
        %2978 = vmatmul.mubr.bf16.gmra.mrb[0].mxu0 %v2943
        %v2979 = vpop.f32.mrb[0].mxu0
        %v2980 = vadd.f32 0.0, %v2979
        %v2981 = vpop.f32.mrb[0].mxu0
        %v2982 = vpop.f32.mrb[0].mxu0
        %v2983 = vpop.f32.mrb[0].mxu0
        %2984 = vdwg.mxu0
        %v2985 = vadd.f32 %v2918, %v2980
        %v2986 = vld [vmem:[%s51] sm:$0x1]
        %v2988 = vlaneseq
        %v2989 = vshrl.u32 %v2988, 7
        %v2990 = vsub.s32 0, %v2989
        %v2991 = vrot.slane %v2986, %v2990
        %v2993 = vadd.f32 %v2985, %v2991
        %v2994 = vpack.c.bf16 %v2993, %v2993
        %v2995 = vld [vmem:[%s53] sm:$0xf]
        %v2996 = vld [vmem:[%s53 + $0x4] sm:$0xf]
        %v2997 = vld [vmem:[%s53 + $0x8] sm:$0xf]
        %v2998 = vld [vmem:[%s53 + $0xc] sm:$0xf]
        %v2999 = vld [vmem:[%s55] sm:$0x1]
        %v3001 = vlaneseq
        %v3002 = vshrl.u32 %v3001, 7
        %v3003 = vsub.s32 0, %v3002
        %v3004 = vrot.slane %v2999, %v3003
        %v3010 = vunpack.c.l.b16 %v2995
        %v3011 = vunpack.c.l.b16 %v2996
        %v3012 = vunpack.c.l.b16 %v2997
        %v3013 = vunpack.c.l.b16 %v2998
        %v3014 = vpack.c.b16 %v3011, %v3010
        %v3015 = vpack.c.b16 %v3013, %v3012
        %v3019 = vsel %vm1210, %v2994, 0
        %3021 = vmatprep.subr.bf16.mxu0 0
        %3022 = vmatpush1.bf16.msra.mxu0 %v3014
        %3023 = vmatprep.subr.bf16.mxu0 0
        %3024 = vmatpush1.bf16.msra.mxu0 %v3015
        %3025 = vmatprep.subr.bf16.mxu0 0
        %3026 = vmatpush1.bf16.msra.mxu0 0
        %3027 = vmatprep.subr.bf16.mxu0 0
        %3028 = vmatpush1.bf16.msra.mxu0 0
        %3029 = vmatprep.subr.bf16.mxu0 0
        %3030 = vmatpush1.bf16.msra.mxu0 0
        %3031 = vmatprep.subr.bf16.mxu0 0
        %3032 = vmatpush1.bf16.msra.mxu0 0
        %3033 = vmatprep.subr.bf16.mxu0 0
        %3034 = vmatpush1.bf16.msra.mxu0 0
        %3035 = vmatprep.subr.bf16.mxu0 0
        %3036 = vmatpush1.bf16.msra.mxu0 0
        %3037 = vmatprep.subr.bf16.mxu0 0
        %3038 = vmatpush1.bf16.msra.mxu0 0
        %3039 = vmatprep.subr.bf16.mxu0 0
        %3040 = vmatpush1.bf16.msra.mxu0 0
        %3041 = vmatprep.subr.bf16.mxu0 0
        %3042 = vmatpush1.bf16.msra.mxu0 0
        %3043 = vmatprep.subr.bf16.mxu0 0
        %3044 = vmatpush1.bf16.msra.mxu0 0
        %3045 = vmatprep.subr.bf16.mxu0 0
        %3046 = vmatpush1.bf16.msra.mxu0 0
        %3047 = vmatprep.subr.bf16.mxu0 0
        %3048 = vmatpush1.bf16.msra.mxu0 0
        %3049 = vmatprep.subr.bf16.mxu0 0
        %3050 = vmatpush1.bf16.msra.mxu0 0
        %3051 = vmatprep.subr.bf16.mxu0 0
        %3052 = vmatpush1.bf16.msra.mxu0 0
        %3053 = vmatprep.mubr.bf16.mxu0 0
        %3054 = vmatmul.mubr.bf16.gmra.mrb[0].mxu0 %v3019
        %v3055 = vpop.f32.mrb[0].mxu0
        %v3056 = vadd.f32 %v3004, %v3055
        %v3057 = vpop.f32.mrb[0].mxu0
        %v3058 = vpop.f32.mrb[0].mxu0
        %v3059 = vpop.f32.mrb[0].mxu0
        %3060 = vdwg.mxu0
        %v3061 = vld [vmem:[%s57] sm:$0xf]
        %v3062 = vld [vmem:[%s57 + $0x4] sm:$0xf]
        %v3063 = vld [vmem:[%s57 + $0x8] sm:$0xf]
        %v3064 = vld [vmem:[%s57 + $0xc] sm:$0xf]
        %v3065 = vld [vmem:[%s59] sm:$0x1]
        %v3067 = vlaneseq
        %v3068 = vshrl.u32 %v3067, 7
        %v3069 = vsub.s32 0, %v3068
        %v3070 = vrot.slane %v3065, %v3069
        %v3076 = vunpack.c.l.b16 %v3061
        %v3077 = vunpack.c.l.b16 %v3062
        %v3078 = vunpack.c.l.b16 %v3063
        %v3079 = vunpack.c.l.b16 %v3064
        %v3080 = vpack.c.b16 %v3077, %v3076
        %v3081 = vpack.c.b16 %v3079, %v3078
        %3084 = vmatprep.subr.bf16.mxu0 0
        %3085 = vmatpush1.bf16.msra.mxu0 %v3080
        %3086 = vmatprep.subr.bf16.mxu0 0
        %3087 = vmatpush1.bf16.msra.mxu0 %v3081
        %3088 = vmatprep.subr.bf16.mxu0 0
        %3089 = vmatpush1.bf16.msra.mxu0 0
        %3090 = vmatprep.subr.bf16.mxu0 0
        %3091 = vmatpush1.bf16.msra.mxu0 0
        %3092 = vmatprep.subr.bf16.mxu0 0
        %3093 = vmatpush1.bf16.msra.mxu0 0
        %3094 = vmatprep.subr.bf16.mxu0 0
        %3095 = vmatpush1.bf16.msra.mxu0 0
        %3096 = vmatprep.subr.bf16.mxu0 0
        %3097 = vmatpush1.bf16.msra.mxu0 0
        %3098 = vmatprep.subr.bf16.mxu0 0
        %3099 = vmatpush1.bf16.msra.mxu0 0
        %3100 = vmatprep.subr.bf16.mxu0 0
        %3101 = vmatpush1.bf16.msra.mxu0 0
        %3102 = vmatprep.subr.bf16.mxu0 0
        %3103 = vmatpush1.bf16.msra.mxu0 0
        %3104 = vmatprep.subr.bf16.mxu0 0
        %3105 = vmatpush1.bf16.msra.mxu0 0
        %3106 = vmatprep.subr.bf16.mxu0 0
        %3107 = vmatpush1.bf16.msra.mxu0 0
        %3108 = vmatprep.subr.bf16.mxu0 0
        %3109 = vmatpush1.bf16.msra.mxu0 0
        %3110 = vmatprep.subr.bf16.mxu0 0
        %3111 = vmatpush1.bf16.msra.mxu0 0
        %3112 = vmatprep.subr.bf16.mxu0 0
        %3113 = vmatpush1.bf16.msra.mxu0 0
        %3114 = vmatprep.subr.bf16.mxu0 0
        %3115 = vmatpush1.bf16.msra.mxu0 0
        %3116 = vmatprep.mubr.bf16.mxu0 0
        %3117 = vmatmul.mubr.bf16.gmra.mrb[0].mxu0 %v3019
        %v3118 = vpop.f32.mrb[0].mxu0
        %v3119 = vadd.f32 %v3070, %v3118
        %v3120 = vpop.f32.mrb[0].mxu0
        %v3121 = vpop.f32.mrb[0].mxu0
        %v3122 = vpop.f32.mrb[0].mxu0
        %3123 = vdwg.mxu0
        %v3124 = vmax.f32 %v3119, -6.0
        %v3125 = vmin.f32 %v3124, 6.0
        %v3126 = vld [vmem:[%s1019] sm:$0xf]
        %v3127 = vmul.f32 %v3125, 0.5
        %v3128 = vmul.f32 %v3127, 1.442695
        %v3129 = vpow.pop %v3128
        %v3130 = vmul.f32 %v3126, %v3129
        %v3131 = vadd.f32 %v3056, %v3130
        %vm3132 = vcmask 60416
        %3133 = vst.msk [vmem:[%s996] sm:$0xf] %vm3132, %v3131
        %3134 = vst.msk [vmem:[%s1003] sm:$0xf] %vm3132, %v3056
        %3135 = vst.msk [vmem:[%s1010] sm:$0xf] %vm3132, %v3125
        %s3136 = sand.u32 %s731, 1
        %s3137 = scalar_lea.sflag [#allocation5], %s3136
        %s3138 = sand.u32 %s731, 1
        %s3139 = smul.addr %s3138, 4
        %s3140 = scalar_lea.vmem [#allocation4], %s3139
        %s3141 = sand.u32 %s83, 1
        %s3142 = scalar_lea.sflag [#allocation7], %s3141
        %s3143 = sand.u32 %s757, 1
        %s3144 = smul.addr %s3143, 4
        %s3145 = scalar_lea.vmem [#allocation6], %s3144
        %s3146 = sand.u32 %s83, 1
        %s3147 = scalar_lea.sflag [#allocation7], %s3146
        %s3148 = sand.u32 %s783, 1
        %s3149 = smul.addr %s3148, 4
        %s3150 = scalar_lea.vmem [#allocation8], %s3149
        // Predicated region
        $region141: #{causal_encoder_forward.1} parent=139 // pred_check
          %p3151 = pneg %p741
        $region142: #{causal_encoder_forward.1} parent=139 // pred_check_branch
          %3153 = sbr.rel (%p3151) target = $region144
        $region143: #{causal_encoder_forward.1} parent=139 // pred_region
          %s3155 = ssub.s32 64, 64
          %3156 = vsyncadd %s3137, %s3155
          %s3157 = smul.addr %s83, 64
          %s3158 = scalar_lea.hbm %s61, %s3157
          %s3160 = sshll.u32 %s3140, 4
          %s3161 = int_to_ptr.vmem [resolvable:$true] %s3160
          %3163 = dma.vmem_to_hbm [thread:$0]  %s3161, 64, %s3158, %s3137
        $region144: #{causal_encoder_forward.1} parent=139 // pred_fallthru
          _
        // Predicated region
        $region145: #{causal_encoder_forward.1} parent=139 // pred_check
          %p3164 = pneg %p767
        $region146: #{causal_encoder_forward.1} parent=139 // pred_check_branch
          %3166 = sbr.rel (%p3164) target = $region148
        $region147: #{causal_encoder_forward.1} parent=139 // pred_region
          %s3168 = ssub.s32 64, 64
          %3169 = vsyncadd %s3142, %s3168
          %s3170 = smul.addr %s83, 64
          %s3171 = scalar_lea.hbm %s63, %s3170
          %s3173 = sshll.u32 %s3145, 4
          %s3174 = int_to_ptr.vmem [resolvable:$true] %s3173
          %3176 = dma.vmem_to_hbm [thread:$0]  %s3174, 64, %s3171, %s3142
        $region148: #{causal_encoder_forward.1} parent=139 // pred_fallthru
          _
        // Predicated region
        $region149: #{causal_encoder_forward.1} parent=139 // pred_check
          %p3177 = pneg %p793
        $region150: #{causal_encoder_forward.1} parent=139 // pred_check_branch
          %3179 = sbr.rel (%p3177) target = $region152
        $region151: #{causal_encoder_forward.1} parent=139 // pred_region
          %s3181 = ssub.s32 64, 64
          %3182 = vsyncadd %s3147, %s3181
          %s3183 = smul.addr %s83, 64
          %s3184 = scalar_lea.hbm %s65, %s3183
          %s3186 = sshll.u32 %s3150, 4
          %s3187 = int_to_ptr.vmem [resolvable:$true] %s3186
          %3189 = dma.vmem_to_hbm [thread:$0]  %s3187, 64, %s3184, %s3147
        $region152: #{causal_encoder_forward.1} parent=139 // pred_fallthru
          _
      $region140: #{causal_encoder_forward.1} parent=5 // pred_fallthru
        _
      %p3190 = scmp.le.s32.totalorder 2, %s78
      // Predicated region
      $region153: #{causal_encoder_forward.1} parent=5 // pred_check
        %p3191 = pneg %p3190
      $region154: #{causal_encoder_forward.1} parent=5 // pred_check_branch
        %3193 = sbr.rel (%p3191) target = $region156
      $region155: #{causal_encoder_forward.1} parent=5 // pred_region
        %s3194 = ssub.s32 %s78, 2
        // Predicated region
        $region157: #{causal_encoder_forward.1} parent=155 // pred_check
          %p3195 = pneg %p747
        $region158: #{causal_encoder_forward.1} parent=155 // pred_check_branch
          %3197 = sbr.rel (%p3195) target = $region160
        $region159: #{causal_encoder_forward.1} parent=155 // pred_region
          %s3198 = sand.u32 %s732, 1
          %s3199 = scalar_lea.sflag [#allocation5], %s3198
          %s3200 = sand.u32 %s732, 1
          %s3201 = smul.addr %s3200, 4
          %s3202 = scalar_lea.vmem [#allocation4], %s3201
          %3203 = dma.done %s3199, 64
        $region160: #{causal_encoder_forward.1} parent=155 // pred_fallthru
          _
        // Predicated region
        $region161: #{causal_encoder_forward.1} parent=155 // pred_check
          %p3204 = pneg %p773
        $region162: #{causal_encoder_forward.1} parent=155 // pred_check_branch
          %3206 = sbr.rel (%p3204) target = $region164
        $region163: #{causal_encoder_forward.1} parent=155 // pred_region
          %s3207 = sand.u32 %s84, 1
          %s3208 = scalar_lea.sflag [#allocation7], %s3207
          %s3209 = sand.u32 %s758, 1
          %s3210 = smul.addr %s3209, 4
          %s3211 = scalar_lea.vmem [#allocation6], %s3210
          %3212 = dma.done %s3208, 64
        $region164: #{causal_encoder_forward.1} parent=155 // pred_fallthru
          _
        // Predicated region
        $region165: #{causal_encoder_forward.1} parent=155 // pred_check
          %p3213 = pneg %p799
        $region166: #{causal_encoder_forward.1} parent=155 // pred_check_branch
          %3215 = sbr.rel (%p3213) target = $region168
        $region167: #{causal_encoder_forward.1} parent=155 // pred_region
          %s3216 = sand.u32 %s84, 1
          %s3217 = scalar_lea.sflag [#allocation7], %s3216
          %s3218 = sand.u32 %s784, 1
          %s3219 = smul.addr %s3218, 4
          %s3220 = scalar_lea.vmem [#allocation8], %s3219
          %3221 = dma.done %s3217, 64
        $region168: #{causal_encoder_forward.1} parent=155 // pred_fallthru
          _
      $region156: #{causal_encoder_forward.1} parent=5 // pred_fallthru
        _
    $region6: #{causal_encoder_forward.1} parent=1 // loop_footer
      %s82 = sadd.s32 1, %s78
    $region7: #{causal_encoder_forward.1} parent=1 // loop_footer_branch
      %77 = sbr.rel target = $region3
    $region8: #{causal_encoder_forward.1} parent=1 // loop_exit
      _
    %3222 = vsyncpa [#allocation5], 1
    %s3223 = scalar_lea.sflag [#allocation5], 1
    %3224 = vsyncpa %s3223, 1
    %3225 = vsyncpa [#allocation7], 1
    %s3226 = scalar_lea.sflag [#allocation7], 1
    %3227 = vsyncpa %s3226, 1

</llo_original>
